<compile_context>
chip_gen: v7x
topology: tpu7x:2x2x1
jax: 0.10.0
libtpu: 0.0.40
codegen_flags: <defaults>
</compile_context>

<pallas_src>
import jax
import jax.numpy as jnp
from jax.experimental import pallas as pl
from jax.experimental.pallas import tpu as pltpu

# ----- synthetic config (small, TPU-tile friendly) ---------------------------
BATCH = 2
SEQ = 8
HIDDEN = 256
NUM_HEADS = 2
HEAD_DIM = HIDDEN // NUM_HEADS          # 128 -> lane aligned
INTERMEDIATE = 512
VOCAB = 512
NUM_LAYERS = 2                          # synthetic stand-in for model.model.layers[23:]
RMS_EPS = 1e-6
ROPE_BASE = 10000.0
ACT_DTYPE = jnp.float32                 # residual stream kept f32 (matches fp32 reference)
MXU_DTYPE = jnp.bfloat16                # matmul operands fed to the MXU
NEG_INF = -1e30


# ----------------------------- in-kernel helpers -----------------------------
def _rmsnorm_f32(x, w):
    var = jnp.mean(x * x, axis=-1, keepdims=True)
    return x * jax.lax.rsqrt(var + RMS_EPS) * w


def _rope_slab(x, cos_t, sin_t):
    """RoPE over a [M, H*Dh] slab.  rotate_half = per-128-lane-group roll with the
    rotate_half sign folded into sin_t; one mul/add pass over the whole slab."""
    groups = x.shape[-1] // HEAD_DIM
    parts = [pltpu.roll(x[:, g * HEAD_DIM:(g + 1) * HEAD_DIM], HEAD_DIM // 2, 1)
             for g in range(groups)]
    rolled = parts[0] if groups == 1 else jnp.concatenate(parts, axis=-1)
    return x * cos_t + rolled * sin_t


def _fused_kernel(hid_ref, mask_ref, cos_ref, sin_ref,
                  ln1_ref, wqkv_ref, wo_ref, ln2_ref, wgu_ref, wd_ref,
                  normw_ref, lmhead_ref, out_ref,
                  res_ref, attn_ref):
    """Grid = (num_layers,), semantics ("arbitrary",).  Residual stream stays in
    VMEM scratch across layer steps; logits are written only on the last step."""
    l = pl.program_id(0)
    nlayers = pl.num_programs(0)
    M, D = res_ref.shape                     # B*S, hidden
    B, S, _ = mask_ref.shape
    I = wd_ref.shape[0]
    n_heads = D // HEAD_DIM
    scale = 1.0 / (float(HEAD_DIM) ** 0.5)

    @pl.when(l == 0)
    def _():
        res_ref[...] = hid_ref[...].astype(jnp.float32)

    x = res_ref[...]                                            # f32 residual slab

    # ---- RMSNorm1 + fused QKV projection on the [B*S, D] slab (one MXU push)
    xn = _rmsnorm_f32(x, ln1_ref[...].astype(jnp.float32))
    qkv = jnp.dot(xn.astype(MXU_DTYPE), wqkv_ref[...],
                  preferred_element_type=jnp.float32)           # [M, 3D] f32

    # ---- RoPE hoisted out of the head loop (cos/sin pre-tiled to [M, D])
    cos_t = cos_ref[...]
    sin_t = sin_ref[...]
    q = _rope_slab(qkv[:, :D], cos_t, sin_t)
    k = _rope_slab(qkv[:, D:2 * D], cos_t, sin_t)
    v = qkv[:, 2 * D:]

    # ---- per (batch, head) attention; contexts assembled into a VMEM slab
    # TODO(synk): for production S, replace the full [S,S] score materialization
    # with a flash-style KV-tiled online-softmax loop.
    for b in range(B):
        mb = mask_ref[b]                                        # [S, S] additive f32
        r0 = b * S
        for h in range(n_heads):
            c0 = h * HEAD_DIM
            qh = q[r0:r0 + S, c0:c0 + HEAD_DIM].astype(MXU_DTYPE)
            kh = k[r0:r0 + S, c0:c0 + HEAD_DIM].astype(MXU_DTYPE)
            vh = v[r0:r0 + S, c0:c0 + HEAD_DIM].astype(MXU_DTYPE)
            s = jax.lax.dot_general(qh, kh, (((1,), (1,)), ((), ())),
                                    preferred_element_type=jnp.float32)
            s = s * scale + mb                                   # single vadd mask
            m = jnp.max(s, axis=-1, keepdims=True)
            p = jnp.exp(s - m)
            p = p * pl.reciprocal(jnp.sum(p, axis=-1, keepdims=True), approx=True)
            ctx = jnp.dot(p.astype(MXU_DTYPE), vh,
                          preferred_element_type=jnp.float32)    # [S, Dh] f32
            # sublane(8)/lane(128)-aligned partial store; replaces concatenate
            attn_ref[r0:r0 + S, c0:c0 + HEAD_DIM] = ctx

    # ---- o-proj + residual (single full-occupancy matmul over the slab)
    x = x + jnp.dot(attn_ref[...].astype(MXU_DTYPE), wo_ref[...],
                    preferred_element_type=jnp.float32)

    # ---- RMSNorm2 + fused gate/up matmul + SwiGLU + down-proj + residual
    xn2 = _rmsnorm_f32(x, ln2_ref[...].astype(jnp.float32))
    gu = jnp.dot(xn2.astype(MXU_DTYPE), wgu_ref[...],
                 preferred_element_type=jnp.float32)             # [M, 2I]
    g = gu[:, :I]
    u = gu[:, I:]
    hmlp = (g * jax.nn.sigmoid(g)) * u                           # all f32 (v5e-safe)
    x = x + jnp.dot(hmlp.astype(MXU_DTYPE), wd_ref[...],
                    preferred_element_type=jnp.float32)
    res_ref[...] = x

    # ---- final RMSNorm + lm_head fused into the last layer step
    @pl.when(l == nlayers - 1)
    def _():
        xf = _rmsnorm_f32(res_ref[...], normw_ref[...].astype(jnp.float32))
        out_ref[...] = jnp.dot(xf.astype(MXU_DTYPE), lmhead_ref[...],
                               preferred_element_type=jnp.float32).astype(out_ref.dtype)


# ----------------------------- host-side helpers -----------------------------
def build_additive_mask(attn_mask, batch, seqlen):
    if attn_mask.ndim == 2:
        # Reference behavior: 2-D masks are replaced by a pure causal triu(-inf,1)
        # mask (padding info dropped, exactly as the torch reference does).
        causal = jnp.triu(jnp.full((seqlen, seqlen), NEG_INF, dtype=jnp.float32), k=1)
        return jnp.tile(causal[None], (batch, 1, 1))
    # 4-D additive mask [B, 1, S, S] -> [B, S, S]; clamp -inf to finite negative.
    return jnp.maximum(attn_mask[:, 0].astype(jnp.float32), NEG_INF)


def rotary_tables(batch, seqlen, num_heads, head_dim):
    inv_freq = 1.0 / (ROPE_BASE ** (jnp.arange(0, head_dim, 2, dtype=jnp.float32)
                                    / head_dim))
    pos = jnp.arange(seqlen, dtype=jnp.float32)                  # position_ids
    freqs = jnp.outer(pos, inv_freq)                             # [S, Dh/2]
    emb = jnp.concatenate([freqs, freqs], axis=-1)               # [S, Dh]
    cos = jnp.cos(emb)
    sign = jnp.concatenate([-jnp.ones((head_dim // 2,), jnp.float32),
                            jnp.ones((head_dim // 2,), jnp.float32)])
    sin_signed = jnp.sin(emb) * sign                             # rotate_half sign folded
    # pre-tile over heads (lanes) and batch (rows): [B*S, H*Dh]
    cos_full = jnp.tile(cos, (batch, num_heads)).astype(jnp.float32)
    sin_full = jnp.tile(sin_signed, (batch, num_heads)).astype(jnp.float32)
    return cos_full, sin_full


def _cost_estimate(B, S, D, I, V, H, Dh, L):
    M = B * S
    mm = lambda m, k, n: 2 * m * k * n
    per_layer = (mm(M, D, 3 * D) + mm(M, D, D) + mm(M, D, 2 * I) + mm(M, I, D)
                 + B * H * (mm(S, Dh, S) + mm(S, S, Dh)))
    flops = L * per_layer + mm(M, D, V)
    transcendentals = L * (B * H * S * S + M * I + 2 * M) + M
    weight_bytes = 2 * L * (D * 3 * D + D * D + D * 2 * I + I * D) + 2 * D * V
    act_bytes = 4 * (M * D + M * V + B * S * S + 2 * M * D)
    return pl.CostEstimate(flops=flops, transcendentals=transcendentals,
                           bytes_accessed=weight_bytes + act_bytes)


# ----------------------------- kernel wrapper ---------------------------------
def part4_forward(hidden, attn_mask, params):
    B, S, D = hidden.shape
    M = B * S
    V = params["lm_head"].shape[1]
    L = params["wqkv"].shape[0]

    hid2d = hidden.reshape(M, D).astype(jnp.float32)
    add_mask = build_additive_mask(attn_mask, B, S)

    def const(shape):
        return pl.BlockSpec(shape, lambda *_: (0,) * len(shape))

    def per_layer(shape):
        return pl.BlockSpec((None,) + shape, lambda l: (l,) + (0,) * len(shape))

    in_specs = [
        const((M, D)),                        # hidden slab (fetched once)
        const((B, S, S)),                     # additive mask
        const((M, D)),                        # rope cos (batch/head tiled)
        const((M, D)),                        # rope sin (signed, tiled)
        per_layer((1, D)),                    # ln1      [L,1,D]
        per_layer((D, 3 * D)),                # wqkv     [L,D,3D]  bf16
        per_layer((D, D)),                    # wo       [L,D,D]   bf16
        per_layer((1, D)),                    # ln2      [L,1,D]
        per_layer((D, 2 * INTERMEDIATE)),     # wgu      [L,D,2I]  bf16
        per_layer((INTERMEDIATE, D)),         # wd       [L,I,D]   bf16
        const((1, D)),                        # final norm weight
        const((D, V)),                        # lm_head  bf16
    ]

    logits2d = pl.pallas_call(
        _fused_kernel,
        out_shape=jax.ShapeDtypeStruct((M, V), jnp.float32),
        grid=(L,),
        in_specs=in_specs,
        out_specs=pl.BlockSpec((M, V), lambda l: (0, 0)),
        scratch_shapes=[pltpu.VMEM((M, D), jnp.float32),    # residual stream
                        pltpu.VMEM((M, D), jnp.float32)],   # attention context slab
        compiler_params=pltpu.CompilerParams(
            dimension_semantics=("arbitrary",)),            # layer axis is a carry
        cost_estimate=_cost_estimate(B, S, D, INTERMEDIATE, V, NUM_HEADS, HEAD_DIM, L),
    )(hid2d, add_mask, params["rope_cos"], params["rope_sin_signed"],
      params["ln1"], params["wqkv"], params["wo"], params["ln2"],
      params["wgu"], params["wd"], params["norm_w"], params["lm_head"])

    return logits2d.reshape(B, S, V)


# ----------------------------- params -----------------------------------------
def init_params(key):
    def dense(k, shape, scale=0.02):
        return (scale * jax.random.normal(k, shape, dtype=jnp.float32)).astype(MXU_DTYPE)

    keys = jax.random.split(key, NUM_LAYERS * 7 + 1)
    wqkv, wo, wgu, wd, ln1, ln2 = [], [], [], [], [], []
    ki = 0
    for _ in range(NUM_LAYERS):
        wq = dense(keys[ki + 0], (HIDDEN, HIDDEN))
        wk = dense(keys[ki + 1], (HIDDEN, HIDDEN))
        wv = dense(keys[ki + 2], (HIDDEN, HIDDEN))
        wg = dense(keys[ki + 4], (HIDDEN, INTERMEDIATE))
        wu = dense(keys[ki + 5], (HIDDEN, INTERMEDIATE))
        wqkv.append(jnp.concatenate([wq, wk, wv], axis=1))       # [D, 3D]
        wo.append(dense(keys[ki + 3], (HIDDEN, HIDDEN)))
        wgu.append(jnp.concatenate([wg, wu], axis=1))            # [D, 2I]
        wd.append(dense(keys[ki + 6], (INTERMEDIATE, HIDDEN)))
        ln1.append(jnp.ones((1, HIDDEN), jnp.float32))
        ln2.append(jnp.ones((1, HIDDEN), jnp.float32))
        ki += 7

    cos, sin_signed = rotary_tables(BATCH, SEQ, NUM_HEADS, HEAD_DIM)  # computed once
    return {
        "ln1": jnp.stack(ln1),            # [L, 1, D]  f32
        "wqkv": jnp.stack(wqkv),          # [L, D, 3D] bf16
        "wo": jnp.stack(wo),              # [L, D, D]  bf16
        "ln2": jnp.stack(ln2),            # [L, 1, D]  f32
        "wgu": jnp.stack(wgu),            # [L, D, 2I] bf16
        "wd": jnp.stack(wd),              # [L, I, D]  bf16
        "norm_w": jnp.ones((1, HIDDEN), jnp.float32),
        "lm_head": dense(keys[ki], (HIDDEN, VOCAB)),
        "rope_cos": cos,                  # [B*S, D] f32
        "rope_sin_signed": sin_signed,    # [B*S, D] f32
    }


if __name__ == "__main__":
    key = jax.random.PRNGKey(0)
    pkey, hkey = jax.random.split(key)
    params = init_params(pkey)
    hidden = jax.random.normal(hkey, (BATCH, SEQ, HIDDEN), dtype=ACT_DTYPE)
    attn_mask = jnp.ones((BATCH, SEQ), dtype=ACT_DTYPE)          # 2-D mask -> causal path

    logits = jax.jit(part4_forward)(hidden, attn_mask, params)
    jax.block_until_ready(logits)
    assert logits.shape == (BATCH, SEQ, VOCAB)
    print("KERNEL_OK")
</pallas_src>

<mosaic_0001>
module attributes {stable_mosaic.version = 11 : i64} {
  func.func @_fused_kernel(%arg0: i32, %arg1: memref<16x256xf32, #tpu.memory_space<vmem>>, %arg2: memref<2x8x8xf32, #tpu.memory_space<vmem>>, %arg3: memref<16x256xf32, #tpu.memory_space<vmem>>, %arg4: memref<16x256xf32, #tpu.memory_space<vmem>>, %arg5: memref<1x1x256xf32, #tpu.memory_space<vmem>>, %arg6: memref<1x256x768xbf16, #tpu.memory_space<vmem>>, %arg7: memref<1x256x256xbf16, #tpu.memory_space<vmem>>, %arg8: memref<1x1x256xf32, #tpu.memory_space<vmem>>, %arg9: memref<1x256x1024xbf16, #tpu.memory_space<vmem>>, %arg10: memref<1x512x256xbf16, #tpu.memory_space<vmem>>, %arg11: memref<1x256xf32, #tpu.memory_space<vmem>>, %arg12: memref<256x512xbf16, #tpu.memory_space<vmem>>, %arg13: memref<16x512xf32, #tpu.memory_space<vmem>>, %arg14: memref<16x256xf32, #tpu.memory_space<vmem>>, %arg15: memref<16x256xf32, #tpu.memory_space<vmem>>) attributes {dimension_semantics = [#tpu.dimension_semantics<arbitrary>], iteration_bounds = array<i64: 2>, scalar_prefetch = 0 : i64, scratch_operands = 2 : i64, tpu.core_type = #tpu.core_type<tc>, window_params = [{pipeline_mode = #tpu.pipeline_mode<synchronous>, transform_indices = @transform_0, window_bounds = array<i64: 16, 256>}, {pipeline_mode = #tpu.pipeline_mode<synchronous>, transform_indices = @transform_1, window_bounds = array<i64: 2, 8, 8>}, {pipeline_mode = #tpu.pipeline_mode<synchronous>, transform_indices = @transform_2, window_bounds = array<i64: 16, 256>}, {pipeline_mode = #tpu.pipeline_mode<synchronous>, transform_indices = @transform_3, window_bounds = array<i64: 16, 256>}, {transform_indices = @transform_4, window_bounds = array<i64: 1, 1, 256>}, {transform_indices = @transform_5, window_bounds = array<i64: 1, 256, 768>}, {transform_indices = @transform_6, window_bounds = array<i64: 1, 256, 256>}, {transform_indices = @transform_7, window_bounds = array<i64: 1, 1, 256>}, {transform_indices = @transform_8, window_bounds = array<i64: 1, 256, 1024>}, {transform_indices = @transform_9, window_bounds = array<i64: 1, 512, 256>}, {pipeline_mode = #tpu.pipeline_mode<synchronous>, transform_indices = @transform_10, window_bounds = array<i64: 1, 256>}, {pipeline_mode = #tpu.pipeline_mode<synchronous>, transform_indices = @transform_11, window_bounds = array<i64: 256, 512>}, {pipeline_mode = #tpu.pipeline_mode<synchronous>, transform_indices = @transform_12, window_bounds = array<i64: 16, 512>}]} {
    %c0_i32 = arith.constant 0 : i32
    %0 = arith.cmpi eq, %arg0, %c0_i32 : i32
    %1 = arith.extui %0 : i1 to i32
    %c0_i32_0 = arith.constant 0 : i32
    %2 = arith.cmpi ne, %1, %c0_i32_0 : i32
    scf.if %2 {
      %c0_73 = arith.constant 0 : index
      %c0_74 = arith.constant 0 : index
      %181 = vector.load %arg1[%c0_73, %c0_74] : memref<16x256xf32, #tpu.memory_space<vmem>>, vector<16x256xf32>
      %c0_75 = arith.constant 0 : index
      %c0_76 = arith.constant 0 : index
      %182 = vector.load %arg14[%c0_75, %c0_76] : memref<16x256xf32, #tpu.memory_space<vmem>>, vector<16x256xf32>
      tpu.vector_store %arg14[%c0_75, %c0_76], %181 {strides = array<i32>} : memref<16x256xf32, #tpu.memory_space<vmem>>, vector<16x256xf32>,
    } else {
    }
    %c0 = arith.constant 0 : index
    %c0_1 = arith.constant 0 : index
    %3 = vector.load %arg14[%c0, %c0_1] : memref<16x256xf32, #tpu.memory_space<vmem>>, vector<16x256xf32>
    %c0_2 = arith.constant 0 : index
    %c0_3 = arith.constant 0 : index
    %c0_4 = arith.constant 0 : index
    %4 = vector.load %arg5[%c0_2, %c0_3, %c0_4] : memref<1x1x256xf32, #tpu.memory_space<vmem>>, vector<1x1x256xf32>
    %5 = vector.shape_cast %4 : vector<1x1x256xf32> to vector<1x256xf32>
    %6 = arith.mulf %3, %3 : vector<16x256xf32>
    %cst = arith.constant dense<0.000000e+00> : vector<16xf32>
    %7 = vector.multi_reduction <add>, %6, %cst [1] : vector<16x256xf32> to vector<16xf32>
    %8 = vector.shape_cast %7 : vector<16xf32> to vector<16x1xf32>
    %cst_5 = arith.constant 2.560000e+02 : f32
    %9 = vector.broadcast %cst_5 : f32 to vector<16x1xf32>
    %10 = arith.divf %8, %9 : vector<16x1xf32>
    %cst_6 = arith.constant 9.99999997E-7 : f32
    %11 = vector.broadcast %cst_6 : f32 to vector<16x1xf32>
    %12 = arith.addf %10, %11 : vector<16x1xf32>
    %13 = math.rsqrt %12 : vector<16x1xf32>
    %14 = vector.broadcast %13 : vector<16x1xf32> to vector<16x256xf32>
    %15 = arith.mulf %3, %14 : vector<16x256xf32>
    %16 = vector.broadcast %5 : vector<1x256xf32> to vector<16x256xf32>
    %17 = arith.mulf %15, %16 : vector<16x256xf32>
    %18 = arith.truncf %17 : vector<16x256xf32> to vector<16x256xbf16>
    %c0_7 = arith.constant 0 : index
    %c0_8 = arith.constant 0 : index
    %c0_9 = arith.constant 0 : index
    %19 = vector.load %arg6[%c0_7, %c0_8, %c0_9] : memref<1x256x768xbf16, #tpu.memory_space<vmem>>, vector<1x256x768xbf16>
    %20 = vector.shape_cast %19 : vector<1x256x768xbf16> to vector<256x768xbf16>
    %cst_10 = arith.constant dense<0.000000e+00> : vector<16x768xf32>
    %21 = tpu.matmul %18, %20, %cst_10 {dimension_numbers = #tpu.dot_dimension_numbers<[1], [0], [0], [1], [0, 0, 1, 1], [], []>} : vector<16x256xbf16>, vector<256x768xbf16>, vector<16x768xf32> -> vector<16x768xf32>
    %c0_11 = arith.constant 0 : index
    %c0_12 = arith.constant 0 : index
    %22 = vector.load %arg3[%c0_11, %c0_12] : memref<16x256xf32, #tpu.memory_space<vmem>>, vector<16x256xf32>
    %c0_13 = arith.constant 0 : index
    %c0_14 = arith.constant 0 : index
    %23 = vector.load %arg4[%c0_13, %c0_14] : memref<16x256xf32, #tpu.memory_space<vmem>>, vector<16x256xf32>
    %24 = vector.extract_strided_slice %21 {offsets = [0, 0], sizes = [16, 256], strides = [1, 1]} : vector<16x768xf32> to vector<16x256xf32>
    %25 = vector.extract_strided_slice %24 {offsets = [0, 0], sizes = [16, 128], strides = [1, 1]} : vector<16x256xf32> to vector<16x128xf32>
    %c64_i32 = arith.constant 64 : i32
    %26 = tpu.dynamic_rotate %25 by %c64_i32 dim 1 : vector<16x128xf32>, i32 -> vector<16x128xf32>
    %27 = vector.extract_strided_slice %24 {offsets = [0, 128], sizes = [16, 128], strides = [1, 1]} : vector<16x256xf32> to vector<16x128xf32>
    %c64_i32_15 = arith.constant 64 : i32
    %28 = tpu.dynamic_rotate %27 by %c64_i32_15 dim 1 : vector<16x128xf32>, i32 -> vector<16x128xf32>
    %29 = tpu.concatenate %26, %28 in 1 : vector<16x128xf32>, vector<16x128xf32> -> vector<16x256xf32>
    %30 = arith.mulf %24, %22 : vector<16x256xf32>
    %31 = arith.mulf %29, %23 : vector<16x256xf32>
    %32 = arith.addf %30, %31 : vector<16x256xf32>
    %33 = vector.extract_strided_slice %21 {offsets = [0, 256], sizes = [16, 256], strides = [1, 1]} : vector<16x768xf32> to vector<16x256xf32>
    %34 = vector.extract_strided_slice %33 {offsets = [0, 0], sizes = [16, 128], strides = [1, 1]} : vector<16x256xf32> to vector<16x128xf32>
    %c64_i32_16 = arith.constant 64 : i32
    %35 = tpu.dynamic_rotate %34 by %c64_i32_16 dim 1 : vector<16x128xf32>, i32 -> vector<16x128xf32>
    %36 = vector.extract_strided_slice %33 {offsets = [0, 128], sizes = [16, 128], strides = [1, 1]} : vector<16x256xf32> to vector<16x128xf32>
    %c64_i32_17 = arith.constant 64 : i32
    %37 = tpu.dynamic_rotate %36 by %c64_i32_17 dim 1 : vector<16x128xf32>, i32 -> vector<16x128xf32>
    %38 = tpu.concatenate %35, %37 in 1 : vector<16x128xf32>, vector<16x128xf32> -> vector<16x256xf32>
    %39 = arith.mulf %33, %22 : vector<16x256xf32>
    %40 = arith.mulf %38, %23 : vector<16x256xf32>
    %41 = arith.addf %39, %40 : vector<16x256xf32>
    %42 = vector.extract_strided_slice %21 {offsets = [0, 512], sizes = [16, 256], strides = [1, 1]} : vector<16x768xf32> to vector<16x256xf32>
    %c0_18 = arith.constant 0 : index
    %c0_19 = arith.constant 0 : index
    %c0_20 = arith.constant 0 : index
    %43 = vector.load %arg2[%c0_18, %c0_19, %c0_20] : memref<2x8x8xf32, #tpu.memory_space<vmem>>, vector<1x8x8xf32>
    %44 = vector.shape_cast %43 : vector<1x8x8xf32> to vector<8x8xf32>
    %45 = vector.extract_strided_slice %32 {offsets = [0, 0], sizes = [8, 128], strides = [1, 1]} : vector<16x256xf32> to vector<8x128xf32>
    %46 = arith.truncf %45 : vector<8x128xf32> to vector<8x128xbf16>
    %47 = vector.extract_strided_slice %41 {offsets = [0, 0], sizes = [8, 128], strides = [1, 1]} : vector<16x256xf32> to vector<8x128xf32>
    %48 = arith.truncf %47 : vector<8x128xf32> to vector<8x128xbf16>
    %49 = vector.extract_strided_slice %42 {offsets = [0, 0], sizes = [8, 128], strides = [1, 1]} : vector<16x256xf32> to vector<8x128xf32>
    %50 = arith.truncf %49 : vector<8x128xf32> to vector<8x128xbf16>
    %cst_21 = arith.constant dense<0.000000e+00> : vector<8x8xf32>
    %51 = tpu.matmul %46, %48, %cst_21 {dimension_numbers = #tpu.dot_dimension_numbers<[1], [1], [0], [0], [0, 0, 1, 0], [], []>} : vector<8x128xbf16>, vector<8x128xbf16>, vector<8x8xf32> -> vector<8x8xf32>
    %cst_22 = arith.constant 0.0883883461 : f32
    %52 = vector.broadcast %cst_22 : f32 to vector<8x8xf32>
    %53 = arith.mulf %51, %52 : vector<8x8xf32>
    %54 = arith.addf %53, %44 : vector<8x8xf32>
    %cst_23 = arith.constant dense<0xFF800000> : vector<8xf32>
    %55 = vector.multi_reduction <maximumf>, %54, %cst_23 [1] : vector<8x8xf32> to vector<8xf32>
    %56 = vector.shape_cast %55 : vector<8xf32> to vector<8x1xf32>
    %57 = vector.broadcast %56 : vector<8x1xf32> to vector<8x8xf32>
    %58 = arith.subf %54, %57 : vector<8x8xf32>
    %59 = math.exp %58 : vector<8x8xf32>
    %cst_24 = arith.constant dense<0.000000e+00> : vector<8xf32>
    %60 = vector.multi_reduction <add>, %59, %cst_24 [1] : vector<8x8xf32> to vector<8xf32>
    %61 = vector.shape_cast %60 : vector<8xf32> to vector<8x1xf32>
    %62 = tpu.reciprocal %61 {approx = true} : vector<8x1xf32> -> vector<8x1xf32>
    %63 = vector.broadcast %62 : vector<8x1xf32> to vector<8x8xf32>
    %64 = arith.mulf %59, %63 : vector<8x8xf32>
    %65 = arith.truncf %64 : vector<8x8xf32> to vector<8x8xbf16>
    %cst_25 = arith.constant dense<0.000000e+00> : vector<8x128xf32>
    %66 = tpu.matmul %65, %50, %cst_25 {dimension_numbers = #tpu.dot_dimension_numbers<[1], [0], [0], [1], [0, 0, 1, 1], [], []>} : vector<8x8xbf16>, vector<8x128xbf16>, vector<8x128xf32> -> vector<8x128xf32>
    %c0_26 = arith.constant 0 : index
    %c0_27 = arith.constant 0 : index
    %67 = vector.load %arg15[%c0_26, %c0_27] : memref<16x256xf32, #tpu.memory_space<vmem>>, vector<8x128xf32>
    tpu.vector_store %arg15[%c0_26, %c0_27], %66 {strides = array<i32>} : memref<16x256xf32, #tpu.memory_space<vmem>>, vector<8x128xf32>,
    %68 = vector.extract_strided_slice %32 {offsets = [0, 128], sizes = [8, 128], strides = [1, 1]} : vector<16x256xf32> to vector<8x128xf32>
    %69 = arith.truncf %68 : vector<8x128xf32> to vector<8x128xbf16>
    %70 = vector.extract_strided_slice %41 {offsets = [0, 128], sizes = [8, 128], strides = [1, 1]} : vector<16x256xf32> to vector<8x128xf32>
    %71 = arith.truncf %70 : vector<8x128xf32> to vector<8x128xbf16>
    %72 = vector.extract_strided_slice %42 {offsets = [0, 128], sizes = [8, 128], strides = [1, 1]} : vector<16x256xf32> to vector<8x128xf32>
    %73 = arith.truncf %72 : vector<8x128xf32> to vector<8x128xbf16>
    %cst_28 = arith.constant dense<0.000000e+00> : vector<8x8xf32>
    %74 = tpu.matmul %69, %71, %cst_28 {dimension_numbers = #tpu.dot_dimension_numbers<[1], [1], [0], [0], [0, 0, 1, 0], [], []>} : vector<8x128xbf16>, vector<8x128xbf16>, vector<8x8xf32> -> vector<8x8xf32>
    %cst_29 = arith.constant 0.0883883461 : f32
    %75 = vector.broadcast %cst_29 : f32 to vector<8x8xf32>
    %76 = arith.mulf %74, %75 : vector<8x8xf32>
    %77 = arith.addf %76, %44 : vector<8x8xf32>
    %cst_30 = arith.constant dense<0xFF800000> : vector<8xf32>
    %78 = vector.multi_reduction <maximumf>, %77, %cst_30 [1] : vector<8x8xf32> to vector<8xf32>
    %79 = vector.shape_cast %78 : vector<8xf32> to vector<8x1xf32>
    %80 = vector.broadcast %79 : vector<8x1xf32> to vector<8x8xf32>
    %81 = arith.subf %77, %80 : vector<8x8xf32>
    %82 = math.exp %81 : vector<8x8xf32>
    %cst_31 = arith.constant dense<0.000000e+00> : vector<8xf32>
    %83 = vector.multi_reduction <add>, %82, %cst_31 [1] : vector<8x8xf32> to vector<8xf32>
    %84 = vector.shape_cast %83 : vector<8xf32> to vector<8x1xf32>
    %85 = tpu.reciprocal %84 {approx = true} : vector<8x1xf32> -> vector<8x1xf32>
    %86 = vector.broadcast %85 : vector<8x1xf32> to vector<8x8xf32>
    %87 = arith.mulf %82, %86 : vector<8x8xf32>
    %88 = arith.truncf %87 : vector<8x8xf32> to vector<8x8xbf16>
    %cst_32 = arith.constant dense<0.000000e+00> : vector<8x128xf32>
    %89 = tpu.matmul %88, %73, %cst_32 {dimension_numbers = #tpu.dot_dimension_numbers<[1], [0], [0], [1], [0, 0, 1, 1], [], []>} : vector<8x8xbf16>, vector<8x128xbf16>, vector<8x128xf32> -> vector<8x128xf32>
    %c0_33 = arith.constant 0 : index
    %c128 = arith.constant 128 : index
    %90 = vector.load %arg15[%c0_33, %c128] : memref<16x256xf32, #tpu.memory_space<vmem>>, vector<8x128xf32>
    tpu.vector_store %arg15[%c0_33, %c128], %89 {strides = array<i32>} : memref<16x256xf32, #tpu.memory_space<vmem>>, vector<8x128xf32>,
    %c1 = arith.constant 1 : index
    %c0_34 = arith.constant 0 : index
    %c0_35 = arith.constant 0 : index
    %91 = vector.load %arg2[%c1, %c0_34, %c0_35] : memref<2x8x8xf32, #tpu.memory_space<vmem>>, vector<1x8x8xf32>
    %92 = vector.shape_cast %91 : vector<1x8x8xf32> to vector<8x8xf32>
    %93 = vector.extract_strided_slice %32 {offsets = [8, 0], sizes = [8, 128], strides = [1, 1]} : vector<16x256xf32> to vector<8x128xf32>
    %94 = arith.truncf %93 : vector<8x128xf32> to vector<8x128xbf16>
    %95 = vector.extract_strided_slice %41 {offsets = [8, 0], sizes = [8, 128], strides = [1, 1]} : vector<16x256xf32> to vector<8x128xf32>
    %96 = arith.truncf %95 : vector<8x128xf32> to vector<8x128xbf16>
    %97 = vector.extract_strided_slice %42 {offsets = [8, 0], sizes = [8, 128], strides = [1, 1]} : vector<16x256xf32> to vector<8x128xf32>
    %98 = arith.truncf %97 : vector<8x128xf32> to vector<8x128xbf16>
    %cst_36 = arith.constant dense<0.000000e+00> : vector<8x8xf32>
    %99 = tpu.matmul %94, %96, %cst_36 {dimension_numbers = #tpu.dot_dimension_numbers<[1], [1], [0], [0], [0, 0, 1, 0], [], []>} : vector<8x128xbf16>, vector<8x128xbf16>, vector<8x8xf32> -> vector<8x8xf32>
    %cst_37 = arith.constant 0.0883883461 : f32
    %100 = vector.broadcast %cst_37 : f32 to vector<8x8xf32>
    %101 = arith.mulf %99, %100 : vector<8x8xf32>
    %102 = arith.addf %101, %92 : vector<8x8xf32>
    %cst_38 = arith.constant dense<0xFF800000> : vector<8xf32>
    %103 = vector.multi_reduction <maximumf>, %102, %cst_38 [1] : vector<8x8xf32> to vector<8xf32>
    %104 = vector.shape_cast %103 : vector<8xf32> to vector<8x1xf32>
    %105 = vector.broadcast %104 : vector<8x1xf32> to vector<8x8xf32>
    %106 = arith.subf %102, %105 : vector<8x8xf32>
    %107 = math.exp %106 : vector<8x8xf32>
    %cst_39 = arith.constant dense<0.000000e+00> : vector<8xf32>
    %108 = vector.multi_reduction <add>, %107, %cst_39 [1] : vector<8x8xf32> to vector<8xf32>
    %109 = vector.shape_cast %108 : vector<8xf32> to vector<8x1xf32>
    %110 = tpu.reciprocal %109 {approx = true} : vector<8x1xf32> -> vector<8x1xf32>
    %111 = vector.broadcast %110 : vector<8x1xf32> to vector<8x8xf32>
    %112 = arith.mulf %107, %111 : vector<8x8xf32>
    %113 = arith.truncf %112 : vector<8x8xf32> to vector<8x8xbf16>
    %cst_40 = arith.constant dense<0.000000e+00> : vector<8x128xf32>
    %114 = tpu.matmul %113, %98, %cst_40 {dimension_numbers = #tpu.dot_dimension_numbers<[1], [0], [0], [1], [0, 0, 1, 1], [], []>} : vector<8x8xbf16>, vector<8x128xbf16>, vector<8x128xf32> -> vector<8x128xf32>
    %c8 = arith.constant 8 : index
    %c0_41 = arith.constant 0 : index
    %115 = vector.load %arg15[%c8, %c0_41] : memref<16x256xf32, #tpu.memory_space<vmem>>, vector<8x128xf32>
    tpu.vector_store %arg15[%c8, %c0_41], %114 {strides = array<i32>} : memref<16x256xf32, #tpu.memory_space<vmem>>, vector<8x128xf32>,
    %116 = vector.extract_strided_slice %32 {offsets = [8, 128], sizes = [8, 128], strides = [1, 1]} : vector<16x256xf32> to vector<8x128xf32>
    %117 = arith.truncf %116 : vector<8x128xf32> to vector<8x128xbf16>
    %118 = vector.extract_strided_slice %41 {offsets = [8, 128], sizes = [8, 128], strides = [1, 1]} : vector<16x256xf32> to vector<8x128xf32>
    %119 = arith.truncf %118 : vector<8x128xf32> to vector<8x128xbf16>
    %120 = vector.extract_strided_slice %42 {offsets = [8, 128], sizes = [8, 128], strides = [1, 1]} : vector<16x256xf32> to vector<8x128xf32>
    %121 = arith.truncf %120 : vector<8x128xf32> to vector<8x128xbf16>
    %cst_42 = arith.constant dense<0.000000e+00> : vector<8x8xf32>
    %122 = tpu.matmul %117, %119, %cst_42 {dimension_numbers = #tpu.dot_dimension_numbers<[1], [1], [0], [0], [0, 0, 1, 0], [], []>} : vector<8x128xbf16>, vector<8x128xbf16>, vector<8x8xf32> -> vector<8x8xf32>
    %cst_43 = arith.constant 0.0883883461 : f32
    %123 = vector.broadcast %cst_43 : f32 to vector<8x8xf32>
    %124 = arith.mulf %122, %123 : vector<8x8xf32>
    %125 = arith.addf %124, %92 : vector<8x8xf32>
    %cst_44 = arith.constant dense<0xFF800000> : vector<8xf32>
    %126 = vector.multi_reduction <maximumf>, %125, %cst_44 [1] : vector<8x8xf32> to vector<8xf32>
    %127 = vector.shape_cast %126 : vector<8xf32> to vector<8x1xf32>
    %128 = vector.broadcast %127 : vector<8x1xf32> to vector<8x8xf32>
    %129 = arith.subf %125, %128 : vector<8x8xf32>
    %130 = math.exp %129 : vector<8x8xf32>
    %cst_45 = arith.constant dense<0.000000e+00> : vector<8xf32>
    %131 = vector.multi_reduction <add>, %130, %cst_45 [1] : vector<8x8xf32> to vector<8xf32>
    %132 = vector.shape_cast %131 : vector<8xf32> to vector<8x1xf32>
    %133 = tpu.reciprocal %132 {approx = true} : vector<8x1xf32> -> vector<8x1xf32>
    %134 = vector.broadcast %133 : vector<8x1xf32> to vector<8x8xf32>
    %135 = arith.mulf %130, %134 : vector<8x8xf32>
    %136 = arith.truncf %135 : vector<8x8xf32> to vector<8x8xbf16>
    %cst_46 = arith.constant dense<0.000000e+00> : vector<8x128xf32>
    %137 = tpu.matmul %136, %121, %cst_46 {dimension_numbers = #tpu.dot_dimension_numbers<[1], [0], [0], [1], [0, 0, 1, 1], [], []>} : vector<8x8xbf16>, vector<8x128xbf16>, vector<8x128xf32> -> vector<8x128xf32>
    %c8_47 = arith.constant 8 : index
    %c128_48 = arith.constant 128 : index
    %138 = vector.load %arg15[%c8_47, %c128_48] : memref<16x256xf32, #tpu.memory_space<vmem>>, vector<8x128xf32>
    tpu.vector_store %arg15[%c8_47, %c128_48], %137 {strides = array<i32>} : memref<16x256xf32, #tpu.memory_space<vmem>>, vector<8x128xf32>,
    %c0_49 = arith.constant 0 : index
    %c0_50 = arith.constant 0 : index
    %139 = vector.load %arg15[%c0_49, %c0_50] : memref<16x256xf32, #tpu.memory_space<vmem>>, vector<16x256xf32>
    %140 = arith.truncf %139 : vector<16x256xf32> to vector<16x256xbf16>
    %c0_51 = arith.constant 0 : index
    %c0_52 = arith.constant 0 : index
    %c0_53 = arith.constant 0 : index
    %141 = vector.load %arg7[%c0_51, %c0_52, %c0_53] : memref<1x256x256xbf16, #tpu.memory_space<vmem>>, vector<1x256x256xbf16>
    %142 = vector.shape_cast %141 : vector<1x256x256xbf16> to vector<256x256xbf16>
    %cst_54 = arith.constant dense<0.000000e+00> : vector<16x256xf32>
    %143 = tpu.matmul %140, %142, %cst_54 {dimension_numbers = #tpu.dot_dimension_numbers<[1], [0], [0], [1], [0, 0, 1, 1], [], []>} : vector<16x256xbf16>, vector<256x256xbf16>, vector<16x256xf32> -> vector<16x256xf32>
    %144 = arith.addf %3, %143 : vector<16x256xf32>
    %c0_55 = arith.constant 0 : index
    %c0_56 = arith.constant 0 : index
    %c0_57 = arith.constant 0 : index
    %145 = vector.load %arg8[%c0_55, %c0_56, %c0_57] : memref<1x1x256xf32, #tpu.memory_space<vmem>>, vector<1x1x256xf32>
    %146 = vector.shape_cast %145 : vector<1x1x256xf32> to vector<1x256xf32>
    %147 = arith.mulf %144, %144 : vector<16x256xf32>
    %cst_58 = arith.constant dense<0.000000e+00> : vector<16xf32>
    %148 = vector.multi_reduction <add>, %147, %cst_58 [1] : vector<16x256xf32> to vector<16xf32>
    %149 = vector.shape_cast %148 : vector<16xf32> to vector<16x1xf32>
    %cst_59 = arith.constant 2.560000e+02 : f32
    %150 = vector.broadcast %cst_59 : f32 to vector<16x1xf32>
    %151 = arith.divf %149, %150 : vector<16x1xf32>
    %cst_60 = arith.constant 9.99999997E-7 : f32
    %152 = vector.broadcast %cst_60 : f32 to vector<16x1xf32>
    %153 = arith.addf %151, %152 : vector<16x1xf32>
    %154 = math.rsqrt %153 : vector<16x1xf32>
    %155 = vector.broadcast %154 : vector<16x1xf32> to vector<16x256xf32>
    %156 = arith.mulf %144, %155 : vector<16x256xf32>
    %157 = vector.broadcast %146 : vector<1x256xf32> to vector<16x256xf32>
    %158 = arith.mulf %156, %157 : vector<16x256xf32>
    %159 = arith.truncf %158 : vector<16x256xf32> to vector<16x256xbf16>
    %c0_61 = arith.constant 0 : index
    %c0_62 = arith.constant 0 : index
    %c0_63 = arith.constant 0 : index
    %160 = vector.load %arg9[%c0_61, %c0_62, %c0_63] : memref<1x256x1024xbf16, #tpu.memory_space<vmem>>, vector<1x256x1024xbf16>
    %161 = vector.shape_cast %160 : vector<1x256x1024xbf16> to vector<256x1024xbf16>
    %cst_64 = arith.constant dense<0.000000e+00> : vector<16x1024xf32>
    %162 = tpu.matmul %159, %161, %cst_64 {dimension_numbers = #tpu.dot_dimension_numbers<[1], [0], [0], [1], [0, 0, 1, 1], [], []>} : vector<16x256xbf16>, vector<256x1024xbf16>, vector<16x1024xf32> -> vector<16x1024xf32>
    %163 = vector.extract_strided_slice %162 {offsets = [0, 0], sizes = [16, 512], strides = [1, 1]} : vector<16x1024xf32> to vector<16x512xf32>
    %164 = vector.extract_strided_slice %162 {offsets = [0, 512], sizes = [16, 512], strides = [1, 1]} : vector<16x1024xf32> to vector<16x512xf32>
    %165 = arith.negf %163 : vector<16x512xf32>
    %166 = math.exp %165 : vector<16x512xf32>
    %cst_65 = arith.constant 1.000000e+00 : f32
    %167 = vector.broadcast %cst_65 : f32 to vector<16x512xf32>
    %168 = arith.addf %167, %166 : vector<16x512xf32>
    %169 = arith.divf %167, %168 : vector<16x512xf32>
    %170 = arith.mulf %163, %169 : vector<16x512xf32>
    %171 = arith.mulf %170, %164 : vector<16x512xf32>
    %172 = arith.truncf %171 : vector<16x512xf32> to vector<16x512xbf16>
    %c0_66 = arith.constant 0 : index
    %c0_67 = arith.constant 0 : index
    %c0_68 = arith.constant 0 : index
    %173 = vector.load %arg10[%c0_66, %c0_67, %c0_68] : memref<1x512x256xbf16, #tpu.memory_space<vmem>>, vector<1x512x256xbf16>
    %174 = vector.shape_cast %173 : vector<1x512x256xbf16> to vector<512x256xbf16>
    %cst_69 = arith.constant dense<0.000000e+00> : vector<16x256xf32>
    %175 = tpu.matmul %172, %174, %cst_69 {dimension_numbers = #tpu.dot_dimension_numbers<[1], [0], [0], [1], [0, 0, 1, 1], [], []>} : vector<16x512xbf16>, vector<512x256xbf16>, vector<16x256xf32> -> vector<16x256xf32>
    %176 = arith.addf %144, %175 : vector<16x256xf32>
    %c0_70 = arith.constant 0 : index
    %c0_71 = arith.constant 0 : index
    %177 = vector.load %arg14[%c0_70, %c0_71] : memref<16x256xf32, #tpu.memory_space<vmem>>, vector<16x256xf32>
    tpu.vector_store %arg14[%c0_70, %c0_71], %176 {strides = array<i32>} : memref<16x256xf32, #tpu.memory_space<vmem>>, vector<16x256xf32>,
    %c1_i32 = arith.constant 1 : i32
    %178 = arith.cmpi eq, %arg0, %c1_i32 : i32
    %179 = arith.extui %178 : i1 to i32
    %c0_i32_72 = arith.constant 0 : i32
    %180 = arith.cmpi ne, %179, %c0_i32_72 : i32
    scf.if %180 {
      %c0_73 = arith.constant 0 : index
      %c0_74 = arith.constant 0 : index
      %181 = vector.load %arg14[%c0_73, %c0_74] : memref<16x256xf32, #tpu.memory_space<vmem>>, vector<16x256xf32>
      %c0_75 = arith.constant 0 : index
      %c0_76 = arith.constant 0 : index
      %182 = vector.load %arg11[%c0_75, %c0_76] : memref<1x256xf32, #tpu.memory_space<vmem>>, vector<1x256xf32>
      %183 = arith.mulf %181, %181 : vector<16x256xf32>
      %cst_77 = arith.constant dense<0.000000e+00> : vector<16xf32>
      %184 = vector.multi_reduction <add>, %183, %cst_77 [1] : vector<16x256xf32> to vector<16xf32>
      %185 = vector.shape_cast %184 : vector<16xf32> to vector<16x1xf32>
      %cst_78 = arith.constant 2.560000e+02 : f32
      %186 = vector.broadcast %cst_78 : f32 to vector<16x1xf32>
      %187 = arith.divf %185, %186 : vector<16x1xf32>
      %cst_79 = arith.constant 9.99999997E-7 : f32
      %188 = vector.broadcast %cst_79 : f32 to vector<16x1xf32>
      %189 = arith.addf %187, %188 : vector<16x1xf32>
      %190 = math.rsqrt %189 : vector<16x1xf32>
      %191 = vector.broadcast %190 : vector<16x1xf32> to vector<16x256xf32>
      %192 = arith.mulf %181, %191 : vector<16x256xf32>
      %193 = vector.broadcast %182 : vector<1x256xf32> to vector<16x256xf32>
      %194 = arith.mulf %192, %193 : vector<16x256xf32>
      %195 = arith.truncf %194 : vector<16x256xf32> to vector<16x256xbf16>
      %c0_80 = arith.constant 0 : index
      %c0_81 = arith.constant 0 : index
      %196 = vector.load %arg12[%c0_80, %c0_81] : memref<256x512xbf16, #tpu.memory_space<vmem>>, vector<256x512xbf16>
      %cst_82 = arith.constant dense<0.000000e+00> : vector<16x512xf32>
      %197 = tpu.matmul %195, %196, %cst_82 {dimension_numbers = #tpu.dot_dimension_numbers<[1], [0], [0], [1], [0, 0, 1, 1], [], []>} : vector<16x256xbf16>, vector<256x512xbf16>, vector<16x512xf32> -> vector<16x512xf32>
      %c0_83 = arith.constant 0 : index
      %c0_84 = arith.constant 0 : index
      %198 = vector.load %arg13[%c0_83, %c0_84] : memref<16x512xf32, #tpu.memory_space<vmem>>, vector<16x512xf32>
      tpu.vector_store %arg13[%c0_83, %c0_84], %197 {strides = array<i32>} : memref<16x512xf32, #tpu.memory_space<vmem>>, vector<16x512xf32>,
    } else {
    }
    return
  }
  func.func @transform_0(%arg0: i32) -> (i32, i32) {
    %c0_i32 = arith.constant 0 : i32
    %c0_i32_0 = arith.constant 0 : i32
    %c0_i32_1 = arith.constant 0 : i32
    return %c0_i32, %c0_i32_0 : i32, i32
  }
  func.func @transform_1(%arg0: i32) -> (i32, i32, i32) {
    %c0_i32 = arith.constant 0 : i32
    %c0_i32_0 = arith.constant 0 : i32
    %c0_i32_1 = arith.constant 0 : i32
    %c0_i32_2 = arith.constant 0 : i32
    return %c0_i32, %c0_i32_0, %c0_i32_1 : i32, i32, i32
  }
  func.func @transform_2(%arg0: i32) -> (i32, i32) {
    %c0_i32 = arith.constant 0 : i32
    %c0_i32_0 = arith.constant 0 : i32
    %c0_i32_1 = arith.constant 0 : i32
    return %c0_i32, %c0_i32_0 : i32, i32
  }
  func.func @transform_3(%arg0: i32) -> (i32, i32) {
    %c0_i32 = arith.constant 0 : i32
    %c0_i32_0 = arith.constant 0 : i32
    %c0_i32_1 = arith.constant 0 : i32
    return %c0_i32, %c0_i32_0 : i32, i32
  }
  func.func @transform_4(%arg0: i32) -> (i32, i32, i32) {
    %c0_i32 = arith.constant 0 : i32
    %c0_i32_0 = arith.constant 0 : i32
    %c0_i32_1 = arith.constant 0 : i32
    return %arg0, %c0_i32, %c0_i32_0 : i32, i32, i32
  }
  func.func @transform_5(%arg0: i32) -> (i32, i32, i32) {
    %c0_i32 = arith.constant 0 : i32
    %c0_i32_0 = arith.constant 0 : i32
    %c0_i32_1 = arith.constant 0 : i32
    return %arg0, %c0_i32, %c0_i32_0 : i32, i32, i32
  }
  func.func @transform_6(%arg0: i32) -> (i32, i32, i32) {
    %c0_i32 = arith.constant 0 : i32
    %c0_i32_0 = arith.constant 0 : i32
    %c0_i32_1 = arith.constant 0 : i32
    return %arg0, %c0_i32, %c0_i32_0 : i32, i32, i32
  }
  func.func @transform_7(%arg0: i32) -> (i32, i32, i32) {
    %c0_i32 = arith.constant 0 : i32
    %c0_i32_0 = arith.constant 0 : i32
    %c0_i32_1 = arith.constant 0 : i32
    return %arg0, %c0_i32, %c0_i32_0 : i32, i32, i32
  }
  func.func @transform_8(%arg0: i32) -> (i32, i32, i32) {
    %c0_i32 = arith.constant 0 : i32
    %c0_i32_0 = arith.constant 0 : i32
    %c0_i32_1 = arith.constant 0 : i32
    return %arg0, %c0_i32, %c0_i32_0 : i32, i32, i32
  }
  func.func @transform_9(%arg0: i32) -> (i32, i32, i32) {
    %c0_i32 = arith.constant 0 : i32
    %c0_i32_0 = arith.constant 0 : i32
    %c0_i32_1 = arith.constant 0 : i32
    return %arg0, %c0_i32, %c0_i32_0 : i32, i32, i32
  }
  func.func @transform_10(%arg0: i32) -> (i32, i32) {
    %c0_i32 = arith.constant 0 : i32
    %c0_i32_0 = arith.constant 0 : i32
    %c0_i32_1 = arith.constant 0 : i32
    return %c0_i32, %c0_i32_0 : i32, i32
  }
  func.func @transform_11(%arg0: i32) -> (i32, i32) {
    %c0_i32 = arith.constant 0 : i32
    %c0_i32_0 = arith.constant 0 : i32
    %c0_i32_1 = arith.constant 0 : i32
    return %c0_i32, %c0_i32_0 : i32, i32
  }
  func.func @transform_12(%arg0: i32) -> (i32, i32) {
    %c0_i32 = arith.constant 0 : i32
    %c0_i32_0 = arith.constant 0 : i32
    %c0_i32_1 = arith.constant 0 : i32
    return %c0_i32, %c0_i32_0 : i32, i32
  }
}

</mosaic_0001>

<llo_original>
// kernel: part4_forward.1
$region0: #{part4_forward.1}
  #allocation0 [shape = 'u32[]', space=smem, size = 0x4, offset = 0x4, fixed_abs, tag = 'smem constant byte address 0x4 - core index']
  #allocation1 [shape = 'u32[144,128]{1,0:T(1,128)}', space=vmem, size = 0x12000, scoped, tag = 'internal scratch']
  #allocation2 [shape = 'f32[16,256]{1,0:T(8,128)}', space=vmem, size = 0x4000, scoped, tag = 'scratch operand']
  #allocation3 [shape = 'f32[16,256]{1,0:T(8,128)}', space=vmem, size = 0x4000, scoped, tag = 'scratch operand']
  %s0 = inlined_call_operand.vmem [shape: f32[16,256], index: 0, kind: input, shape index: {}]
  %s1 = inlined_call_operand.vmem [shape: f32[2,8,8], index: 1, kind: input, shape index: {}]
  %s2 = inlined_call_operand.hbm [shape: f32[16,256], index: 2, kind: input, shape index: {}]
  %s3 = inlined_call_operand.hbm [shape: f32[16,256], index: 3, kind: input, shape index: {}]
  %s4 = inlined_call_operand.vmem [shape: f32[2,1,256], index: 4, kind: input, shape index: {}]
  %s5 = inlined_call_operand.hbm [shape: bf16[2,256,768], index: 5, kind: input, shape index: {}]
  %s6 = inlined_call_operand.hbm [shape: bf16[2,256,256], index: 6, kind: input, shape index: {}]
  %s7 = inlined_call_operand.vmem [shape: f32[2,1,256], index: 7, kind: input, shape index: {}]
  %s8 = inlined_call_operand.hbm [shape: bf16[2,256,1024], index: 8, kind: input, shape index: {}]
  %s9 = inlined_call_operand.hbm [shape: bf16[2,512,256], index: 9, kind: input, shape index: {}]
  %s10 = inlined_call_operand.vmem [shape: f32[1,256], index: 10, kind: input, shape index: {}]
  %s11 = inlined_call_operand.hbm [shape: bf16[256,512], index: 11, kind: input, shape index: {}]
  %s12 = inlined_call_operand.hbm [shape: f32[16,512], index: 12, kind: output, shape index: {}]
  %s13 = sld [smem:[#allocation0]]
  $region117: #{part4_forward.1} parent=0
    _
  %s15 = ssub.s32 1, %s13
  %s16 = scalar_select 0, %s15, %s13
  $region1: #{part4_forward.1} parent=0
    #allocation4 [shape = 'u8[16384]{0}', space=vmem, size = 0x4000, scoped, tag = 'input window, operand 2, single buffered']
    #allocation5 [shape = 's32[2]{0}', space=sflag, size = 0x8, scoped, tag = 'scoped memory for part4_forward.1']
    #allocation6 [shape = 's32[2]{0}', space=sflag, size = 0x8, scoped, tag = 'scoped memory for part4_forward.1']
    #allocation7 [shape = 'u8[16384]{0}', space=vmem, size = 0x4000, scoped, tag = 'input window, operand 3, single buffered']
    #allocation8 [shape = 's32[1]{0}', space=sflag, size = 0x4, scoped, tag = 'scoped memory for part4_forward.1']
    #allocation9 [shape = 'u8[786432]{0}', space=vmem, size = 0xc0000, scoped, tag = 'input window, operand 5']
    #allocation10 [shape = 'u8[262144]{0}', space=vmem, size = 0x40000, scoped, tag = 'input window, operand 6']
    #allocation11 [shape = 'u8[1048576]{0}', space=vmem, size = 0x100000, scoped, tag = 'input window, operand 8']
    #allocation12 [shape = 'u8[524288]{0}', space=vmem, size = 0x80000, scoped, tag = 'input window, operand 9']
    #allocation13 [shape = 'u8[262144]{0}', space=vmem, size = 0x40000, scoped, tag = 'input window, operand 11, single buffered']
    #allocation14 [shape = 'u8[32768]{0}', space=vmem, size = 0x8000, scoped, tag = 'output window, operand 0, single buffered']
    %17 = vsyncpa [#allocation5], 0
    %18 = vsyncpa [#allocation8], 0
    %19 = vsyncpa [#allocation6], 0
    loop: start=0, step=1, limit=4
    $region2: #{part4_forward.1} parent=1 // loop_pre_header
      _
    $region3: #{part4_forward.1} parent=1 // loop_header
      %s21 = sphi 0, %s25
      %p22 = scmp.ge.s32.totalorder %s21, 4
      %s29 = sphi 0, %s29
      %s31 = sphi 0, %s29
      %s32 = sphi 0, %s31
      %s46 = sphi 0, %s32
      %s50 = sphi 0, %s50
      %s52 = sphi 0, %s50
      %s53 = sphi 0, %s52
      %s67 = sphi 0, %s53
      %s71 = sphi 0, %s71
      %s73 = sphi 0, %s71
      %s74 = sphi 0, %s73
      %s88 = sphi 0, %s74
      %s92 = sphi 0, %s92
      %s94 = sphi 0, %s92
      %s95 = sphi 0, %s94
      %s109 = sphi 0, %s95
      %s115 = sphi 0, %s117
      %s118 = sphi 0, %s115
      %s119 = sphi 0, %s118
      %s135 = sphi 0, %s119
      %s141 = sphi 0, %s143
      %s144 = sphi 0, %s141
      %s145 = sphi 0, %s144
      %s161 = sphi 0, %s145
      %s167 = sphi 0, %s169
      %s170 = sphi 0, %s167
      %s171 = sphi 0, %s170
      %s187 = sphi 0, %s171
      %s193 = sphi 0, %s195
      %s196 = sphi 0, %s193
      %s197 = sphi 0, %s196
      %s213 = sphi 0, %s197
      %s219 = sphi 0, %s221
      %s222 = sphi 0, %s219
      %s223 = sphi 0, %s222
      %s239 = sphi 0, %s223
      %s245 = sphi 0, %s247
      %s248 = sphi 0, %s245
      %s249 = sphi 0, %s248
      %s265 = sphi 0, %s249
      %s269 = sphi 0, %s269
      %s271 = sphi 0, %s269
      %s272 = sphi 0, %s271
      %s286 = sphi 0, %s272
      %s290 = sphi 0, %s290
      %s292 = sphi 0, %s290
      %s293 = sphi 0, %s292
      %s307 = sphi 0, %s293
      %s311 = sphi 0, %s311
      %s313 = sphi 0, %s311
      %s314 = sphi 0, %s313
      %s328 = sphi 0, %s314
    $region4: #{part4_forward.1} parent=1 // loop_header_branch
      %24 = sbr.rel (%p22) target = $region8
    $region5: #{part4_forward.1} parent=1 // loop_body
      %s26 = ssub.s32 %s21, 1
      %s27 = ssub.s32 %s21, 2
      %s28 = sadd.s32 %s21, 1
      %s30 = sadd.s32 %s29, 1
      %p33 = scmp.eq.s32.totalorder %s21, 1
      %p34 = scmp.ne.s32.totalorder %s29, %s31
      %p35 = scmp.eq.s32.totalorder %s21, 0
      %p36 = por %p34, %p35
      %p37 = scmp.ne.s32.totalorder %s29, %s31
      %p38 = scmp.eq.s32.totalorder %s26, 1
      %p39 = por %p37, %p38
      %p40 = scmp.ne.s32.totalorder %s31, %s32
      %p41 = scmp.eq.s32.totalorder %s26, 0
      %p42 = por %p40, %p41
      %p43 = scmp.ne.s32.totalorder %s31, %s32
      %p44 = scmp.eq.s32.totalorder %s27, 1
      %p45 = por %p43, %p44
      %p47 = scmp.ne.s32.totalorder %s32, %s46
      %p48 = scmp.eq.s32.totalorder %s27, 0
      %p49 = por %p47, %p48
      %s51 = sadd.s32 %s50, 1
      %p54 = scmp.eq.s32.totalorder %s21, 1
      %p55 = scmp.ne.s32.totalorder %s50, %s52
      %p56 = scmp.eq.s32.totalorder %s21, 0
      %p57 = por %p55, %p56
      %p58 = scmp.ne.s32.totalorder %s50, %s52
      %p59 = scmp.eq.s32.totalorder %s26, 1
      %p60 = por %p58, %p59
      %p61 = scmp.ne.s32.totalorder %s52, %s53
      %p62 = scmp.eq.s32.totalorder %s26, 0
      %p63 = por %p61, %p62
      %p64 = scmp.ne.s32.totalorder %s52, %s53
      %p65 = scmp.eq.s32.totalorder %s27, 1
      %p66 = por %p64, %p65
      %p68 = scmp.ne.s32.totalorder %s53, %s67
      %p69 = scmp.eq.s32.totalorder %s27, 0
      %p70 = por %p68, %p69
      %s72 = sadd.s32 %s71, 1
      %p75 = scmp.eq.s32.totalorder %s21, 1
      %p76 = scmp.ne.s32.totalorder %s71, %s73
      %p77 = scmp.eq.s32.totalorder %s21, 0
      %p78 = por %p76, %p77
      %p79 = scmp.ne.s32.totalorder %s71, %s73
      %p80 = scmp.eq.s32.totalorder %s26, 1
      %p81 = por %p79, %p80
      %p82 = scmp.ne.s32.totalorder %s73, %s74
      %p83 = scmp.eq.s32.totalorder %s26, 0
      %p84 = por %p82, %p83
      %p85 = scmp.ne.s32.totalorder %s73, %s74
      %p86 = scmp.eq.s32.totalorder %s27, 1
      %p87 = por %p85, %p86
      %p89 = scmp.ne.s32.totalorder %s74, %s88
      %p90 = scmp.eq.s32.totalorder %s27, 0
      %p91 = por %p89, %p90
      %s93 = sadd.s32 %s92, 1
      %p96 = scmp.eq.s32.totalorder %s21, 1
      %p97 = scmp.ne.s32.totalorder %s92, %s94
      %p98 = scmp.eq.s32.totalorder %s21, 0
      %p99 = por %p97, %p98
      %p100 = scmp.ne.s32.totalorder %s92, %s94
      %p101 = scmp.eq.s32.totalorder %s26, 1
      %p102 = por %p100, %p101
      %p103 = scmp.ne.s32.totalorder %s94, %s95
      %p104 = scmp.eq.s32.totalorder %s26, 0
      %p105 = por %p103, %p104
      %p106 = scmp.ne.s32.totalorder %s94, %s95
      %p107 = scmp.eq.s32.totalorder %s27, 1
      %p108 = por %p106, %p107
      %p110 = scmp.ne.s32.totalorder %s95, %s109
      %p111 = scmp.eq.s32.totalorder %s27, 0
      %p112 = por %p110, %p111
      %s113 = ssub.s32 %s21, %s28
      %p114 = scmp.eq.s32.totalorder %s113, 0
      %s116 = sadd.s32 %s115, 1
      %s117 = scalar_select %p114, %s115, %s116
      %p120 = pneg %p114
      %p121 = scmp.eq.s32.totalorder %s21, 1
      %p122 = por %p120, %p121
      %p123 = scmp.ne.s32.totalorder %s115, %s118
      %p124 = scmp.eq.s32.totalorder %s21, 0
      %p125 = por %p123, %p124
      %p126 = scmp.ne.s32.totalorder %s115, %s118
      %p127 = scmp.eq.s32.totalorder %s26, 1
      %p128 = por %p126, %p127
      %p129 = scmp.ne.s32.totalorder %s118, %s119
      %p130 = scmp.eq.s32.totalorder %s26, 0
      %p131 = por %p129, %p130
      %p132 = scmp.ne.s32.totalorder %s118, %s119
      %p133 = scmp.eq.s32.totalorder %s27, 1
      %p134 = por %p132, %p133
      %p136 = scmp.ne.s32.totalorder %s119, %s135
      %p137 = scmp.eq.s32.totalorder %s27, 0
      %p138 = por %p136, %p137
      %s139 = ssub.s32 %s21, %s28
      %p140 = scmp.eq.s32.totalorder %s139, 0
      %s142 = sadd.s32 %s141, 1
      %s143 = scalar_select %p140, %s141, %s142
      %p146 = pneg %p140
      %p147 = scmp.eq.s32.totalorder %s21, 1
      %p148 = por %p146, %p147
      %p149 = scmp.ne.s32.totalorder %s141, %s144
      %p150 = scmp.eq.s32.totalorder %s21, 0
      %p151 = por %p149, %p150
      %p152 = scmp.ne.s32.totalorder %s141, %s144
      %p153 = scmp.eq.s32.totalorder %s26, 1
      %p154 = por %p152, %p153
      %p155 = scmp.ne.s32.totalorder %s144, %s145
      %p156 = scmp.eq.s32.totalorder %s26, 0
      %p157 = por %p155, %p156
      %p158 = scmp.ne.s32.totalorder %s144, %s145
      %p159 = scmp.eq.s32.totalorder %s27, 1
      %p160 = por %p158, %p159
      %p162 = scmp.ne.s32.totalorder %s145, %s161
      %p163 = scmp.eq.s32.totalorder %s27, 0
      %p164 = por %p162, %p163
      %s165 = ssub.s32 %s21, %s28
      %p166 = scmp.eq.s32.totalorder %s165, 0
      %s168 = sadd.s32 %s167, 1
      %s169 = scalar_select %p166, %s167, %s168
      %p172 = pneg %p166
      %p173 = scmp.eq.s32.totalorder %s21, 1
      %p174 = por %p172, %p173
      %p175 = scmp.ne.s32.totalorder %s167, %s170
      %p176 = scmp.eq.s32.totalorder %s21, 0
      %p177 = por %p175, %p176
      %p178 = scmp.ne.s32.totalorder %s167, %s170
      %p179 = scmp.eq.s32.totalorder %s26, 1
      %p180 = por %p178, %p179
      %p181 = scmp.ne.s32.totalorder %s170, %s171
      %p182 = scmp.eq.s32.totalorder %s26, 0
      %p183 = por %p181, %p182
      %p184 = scmp.ne.s32.totalorder %s170, %s171
      %p185 = scmp.eq.s32.totalorder %s27, 1
      %p186 = por %p184, %p185
      %p188 = scmp.ne.s32.totalorder %s171, %s187
      %p189 = scmp.eq.s32.totalorder %s27, 0
      %p190 = por %p188, %p189
      %s191 = ssub.s32 %s21, %s28
      %p192 = scmp.eq.s32.totalorder %s191, 0
      %s194 = sadd.s32 %s193, 1
      %s195 = scalar_select %p192, %s193, %s194
      %p198 = pneg %p192
      %p199 = scmp.eq.s32.totalorder %s21, 1
      %p200 = por %p198, %p199
      %p201 = scmp.ne.s32.totalorder %s193, %s196
      %p202 = scmp.eq.s32.totalorder %s21, 0
      %p203 = por %p201, %p202
      %p204 = scmp.ne.s32.totalorder %s193, %s196
      %p205 = scmp.eq.s32.totalorder %s26, 1
      %p206 = por %p204, %p205
      %p207 = scmp.ne.s32.totalorder %s196, %s197
      %p208 = scmp.eq.s32.totalorder %s26, 0
      %p209 = por %p207, %p208
      %p210 = scmp.ne.s32.totalorder %s196, %s197
      %p211 = scmp.eq.s32.totalorder %s27, 1
      %p212 = por %p210, %p211
      %p214 = scmp.ne.s32.totalorder %s197, %s213
      %p215 = scmp.eq.s32.totalorder %s27, 0
      %p216 = por %p214, %p215
      %s217 = ssub.s32 %s21, %s28
      %p218 = scmp.eq.s32.totalorder %s217, 0
      %s220 = sadd.s32 %s219, 1
      %s221 = scalar_select %p218, %s219, %s220
      %p224 = pneg %p218
      %p225 = scmp.eq.s32.totalorder %s21, 1
      %p226 = por %p224, %p225
      %p227 = scmp.ne.s32.totalorder %s219, %s222
      %p228 = scmp.eq.s32.totalorder %s21, 0
      %p229 = por %p227, %p228
      %p230 = scmp.ne.s32.totalorder %s219, %s222
      %p231 = scmp.eq.s32.totalorder %s26, 1
      %p232 = por %p230, %p231
      %p233 = scmp.ne.s32.totalorder %s222, %s223
      %p234 = scmp.eq.s32.totalorder %s26, 0
      %p235 = por %p233, %p234
      %p236 = scmp.ne.s32.totalorder %s222, %s223
      %p237 = scmp.eq.s32.totalorder %s27, 1
      %p238 = por %p236, %p237
      %p240 = scmp.ne.s32.totalorder %s223, %s239
      %p241 = scmp.eq.s32.totalorder %s27, 0
      %p242 = por %p240, %p241
      %s243 = ssub.s32 %s21, %s28
      %p244 = scmp.eq.s32.totalorder %s243, 0
      %s246 = sadd.s32 %s245, 1
      %s247 = scalar_select %p244, %s245, %s246
      %p250 = pneg %p244
      %p251 = scmp.eq.s32.totalorder %s21, 1
      %p252 = por %p250, %p251
      %p253 = scmp.ne.s32.totalorder %s245, %s248
      %p254 = scmp.eq.s32.totalorder %s21, 0
      %p255 = por %p253, %p254
      %p256 = scmp.ne.s32.totalorder %s245, %s248
      %p257 = scmp.eq.s32.totalorder %s26, 1
      %p258 = por %p256, %p257
      %p259 = scmp.ne.s32.totalorder %s248, %s249
      %p260 = scmp.eq.s32.totalorder %s26, 0
      %p261 = por %p259, %p260
      %p262 = scmp.ne.s32.totalorder %s248, %s249
      %p263 = scmp.eq.s32.totalorder %s27, 1
      %p264 = por %p262, %p263
      %p266 = scmp.ne.s32.totalorder %s249, %s265
      %p267 = scmp.eq.s32.totalorder %s27, 0
      %p268 = por %p266, %p267
      %s270 = sadd.s32 %s269, 1
      %p273 = scmp.eq.s32.totalorder %s21, 1
      %p274 = scmp.ne.s32.totalorder %s269, %s271
      %p275 = scmp.eq.s32.totalorder %s21, 0
      %p276 = por %p274, %p275
      %p277 = scmp.ne.s32.totalorder %s269, %s271
      %p278 = scmp.eq.s32.totalorder %s26, 1
      %p279 = por %p277, %p278
      %p280 = scmp.ne.s32.totalorder %s271, %s272
      %p281 = scmp.eq.s32.totalorder %s26, 0
      %p282 = por %p280, %p281
      %p283 = scmp.ne.s32.totalorder %s271, %s272
      %p284 = scmp.eq.s32.totalorder %s27, 1
      %p285 = por %p283, %p284
      %p287 = scmp.ne.s32.totalorder %s272, %s286
      %p288 = scmp.eq.s32.totalorder %s27, 0
      %p289 = por %p287, %p288
      %s291 = sadd.s32 %s290, 1
      %p294 = scmp.eq.s32.totalorder %s21, 1
      %p295 = scmp.ne.s32.totalorder %s290, %s292
      %p296 = scmp.eq.s32.totalorder %s21, 0
      %p297 = por %p295, %p296
      %p298 = scmp.ne.s32.totalorder %s290, %s292
      %p299 = scmp.eq.s32.totalorder %s26, 1
      %p300 = por %p298, %p299
      %p301 = scmp.ne.s32.totalorder %s292, %s293
      %p302 = scmp.eq.s32.totalorder %s26, 0
      %p303 = por %p301, %p302
      %p304 = scmp.ne.s32.totalorder %s292, %s293
      %p305 = scmp.eq.s32.totalorder %s27, 1
      %p306 = por %p304, %p305
      %p308 = scmp.ne.s32.totalorder %s293, %s307
      %p309 = scmp.eq.s32.totalorder %s27, 0
      %p310 = por %p308, %p309
      %s312 = sadd.s32 %s311, 1
      %p315 = scmp.eq.s32.totalorder %s21, 1
      %p316 = scmp.ne.s32.totalorder %s311, %s313
      %p317 = scmp.eq.s32.totalorder %s21, 0
      %p318 = por %p316, %p317
      %p319 = scmp.ne.s32.totalorder %s311, %s313
      %p320 = scmp.eq.s32.totalorder %s26, 1
      %p321 = por %p319, %p320
      %p322 = scmp.ne.s32.totalorder %s313, %s314
      %p323 = scmp.eq.s32.totalorder %s26, 0
      %p324 = por %p322, %p323
      %p325 = scmp.ne.s32.totalorder %s313, %s314
      %p326 = scmp.eq.s32.totalorder %s27, 1
      %p327 = por %p325, %p326
      %p329 = scmp.ne.s32.totalorder %s314, %s328
      %p330 = scmp.eq.s32.totalorder %s27, 0
      %p331 = por %p329, %p330
      %p332 = scmp.le.s32.totalorder 1, %s21
      %p333 = scmp.lt.s32.totalorder %s21, 3
      %p334 = pnand %p332, %p333
      %p335 = pneg %p334
      // Predicated region
      $region9: #{part4_forward.1} parent=5 // pred_check
        _
      $region10: #{part4_forward.1} parent=5 // pred_check_branch
        %337 = sbr.rel (%p334) target = $region12
      $region11: #{part4_forward.1} parent=5 // pred_region
        %s338 = ssub.s32 %s21, 1
        // Predicated region
        $region13: #{part4_forward.1} parent=11 // pred_check
          %p339 = pneg %p42
        $region14: #{part4_forward.1} parent=11 // pred_check_branch
          %341 = sbr.rel (%p339) target = $region16
        $region15: #{part4_forward.1} parent=11 // pred_region
          _
        $region16: #{part4_forward.1} parent=11 // pred_fallthru
          _
        // Predicated region
        $region17: #{part4_forward.1} parent=11 // pred_check
          %p342 = pneg %p63
        $region18: #{part4_forward.1} parent=11 // pred_check_branch
          %344 = sbr.rel (%p342) target = $region20
        $region19: #{part4_forward.1} parent=11 // pred_region
          _
        $region20: #{part4_forward.1} parent=11 // pred_fallthru
          _
        // Predicated region
        $region21: #{part4_forward.1} parent=11 // pred_check
          %p345 = pneg %p84
        $region22: #{part4_forward.1} parent=11 // pred_check_branch
          %347 = sbr.rel (%p345) target = $region24
        $region23: #{part4_forward.1} parent=11 // pred_region
          %s349 = ssub.s32 512, 512
          %350 = vsyncadd [#allocation5], %s349
          %s351 = sshll.u32 [#allocation4], 4
          %s352 = int_to_ptr.vmem [resolvable:$true] %s351
          %357 = dma.hbm_to_vmem [thread:$0]  %s2, 512, %s352, [#allocation5], 256, 256, 16
        $region24: #{part4_forward.1} parent=11 // pred_fallthru
          _
        // Predicated region
        $region25: #{part4_forward.1} parent=11 // pred_check
          %p358 = pneg %p105
        $region26: #{part4_forward.1} parent=11 // pred_check_branch
          %360 = sbr.rel (%p358) target = $region28
        $region27: #{part4_forward.1} parent=11 // pred_region
          %s362 = ssub.s32 512, 512
          %363 = vsyncadd [#allocation8], %s362
          %s364 = sshll.u32 [#allocation7], 4
          %s365 = int_to_ptr.vmem [resolvable:$true] %s364
          %370 = dma.hbm_to_vmem [thread:$0]  %s3, 512, %s365, [#allocation8], 256, 256, 16
        $region28: #{part4_forward.1} parent=11 // pred_fallthru
          _
        // Predicated region
        $region29: #{part4_forward.1} parent=11 // pred_check
          %p371 = pneg %p282
        $region30: #{part4_forward.1} parent=11 // pred_check_branch
          %373 = sbr.rel (%p371) target = $region32
        $region31: #{part4_forward.1} parent=11 // pred_region
          _
        $region32: #{part4_forward.1} parent=11 // pred_fallthru
          _
        // Predicated region
        $region33: #{part4_forward.1} parent=11 // pred_check
          %p374 = pneg %p303
        $region34: #{part4_forward.1} parent=11 // pred_check_branch
          %376 = sbr.rel (%p374) target = $region36
        $region35: #{part4_forward.1} parent=11 // pred_region
          %s378 = ssub.s32 8192, 8192
          %379 = vsyncadd [#allocation8], %s378
          %s380 = sshll.u32 [#allocation13], 4
          %s381 = int_to_ptr.vmem [resolvable:$true] %s380
          %386 = dma.hbm_to_vmem [thread:$0]  %s11, 8192, %s381, [#allocation8], 256, 256, 16
        $region36: #{part4_forward.1} parent=11 // pred_fallthru
          _
      $region12: #{part4_forward.1} parent=5 // pred_fallthru
        _
      %p387 = scmp.lt.s32.totalorder %s21, 2
      // Predicated region
      $region37: #{part4_forward.1} parent=5 // pred_check
        %p388 = pneg %p387
      $region38: #{part4_forward.1} parent=5 // pred_check_branch
        %390 = sbr.rel (%p388) target = $region40
      $region39: #{part4_forward.1} parent=5 // pred_region
        // Predicated region
        $region41: #{part4_forward.1} parent=39 // pred_check
          %p391 = pneg %p125
        $region42: #{part4_forward.1} parent=39 // pred_check_branch
          %393 = sbr.rel (%p391) target = $region44
        $region43: #{part4_forward.1} parent=39 // pred_region
          %p394 = scmp.lt.s32.totalorder %s21, 1
          %s395 = scalar_select %p394, %s21, 1
          %s396 = smul.addr %s395, 2
          %s397 = scalar_lea.vmem %s4, %s396
        $region44: #{part4_forward.1} parent=39 // pred_fallthru
          _
        // Predicated region
        $region45: #{part4_forward.1} parent=39 // pred_check
          %p398 = pneg %p151
        $region46: #{part4_forward.1} parent=39 // pred_check_branch
          %400 = sbr.rel (%p398) target = $region48
        $region47: #{part4_forward.1} parent=39 // pred_region
          %s401 = sand.u32 %s21, 1
          %s402 = scalar_lea.sflag [#allocation5], %s401
          %s403 = sand.u32 %s141, 1
          %s404 = smul.addr %s403, 768
          %s405 = scalar_lea.vmem [#allocation9], %s404
          %s407 = ssub.s32 12288, 12288
          %408 = vsyncadd %s402, %s407
          %s409 = smul.addr %s21, 192
          %s410 = smul.addr %s409, 64
          %s411 = scalar_lea.hbm %s5, %s410
          %s412 = sshll.u32 %s405, 4
          %s413 = int_to_ptr.vmem [resolvable:$true] %s412
          %418 = dma.hbm_to_vmem [thread:$0]  %s411, 12288, %s413, %s402, 384, 384, 24
        $region48: #{part4_forward.1} parent=39 // pred_fallthru
          _
        // Predicated region
        $region49: #{part4_forward.1} parent=39 // pred_check
          %p419 = pneg %p177
        $region50: #{part4_forward.1} parent=39 // pred_check_branch
          %421 = sbr.rel (%p419) target = $region52
        $region51: #{part4_forward.1} parent=39 // pred_region
          %s422 = sand.u32 %s21, 1
          %s423 = scalar_lea.sflag [#allocation5], %s422
          %s424 = sand.u32 %s167, 1
          %s425 = smul.addr %s424, 256
          %s426 = scalar_lea.vmem [#allocation10], %s425
          %s428 = ssub.s32 4096, 4096
          %429 = vsyncadd %s423, %s428
          %s430 = smul.addr %s21, 64
          %s431 = smul.addr %s430, 64
          %s432 = scalar_lea.hbm %s6, %s431
          %s433 = sshll.u32 %s426, 4
          %s434 = int_to_ptr.vmem [resolvable:$true] %s433
          %439 = dma.hbm_to_vmem [thread:$0]  %s432, 4096, %s434, %s423, 128, 128, 8
        $region52: #{part4_forward.1} parent=39 // pred_fallthru
          _
        // Predicated region
        $region53: #{part4_forward.1} parent=39 // pred_check
          %p440 = pneg %p203
        $region54: #{part4_forward.1} parent=39 // pred_check_branch
          %442 = sbr.rel (%p440) target = $region56
        $region55: #{part4_forward.1} parent=39 // pred_region
          %p443 = scmp.lt.s32.totalorder %s21, 1
          %s444 = scalar_select %p443, %s21, 1
          %s445 = smul.addr %s444, 2
          %s446 = scalar_lea.vmem %s7, %s445
        $region56: #{part4_forward.1} parent=39 // pred_fallthru
          _
        // Predicated region
        $region57: #{part4_forward.1} parent=39 // pred_check
          %p447 = pneg %p229
        $region58: #{part4_forward.1} parent=39 // pred_check_branch
          %449 = sbr.rel (%p447) target = $region60
        $region59: #{part4_forward.1} parent=39 // pred_region
          %s450 = sand.u32 %s21, 1
          %s451 = scalar_lea.sflag [#allocation5], %s450
          %s452 = sand.u32 %s219, 1
          %s453 = smul.addr %s452, 1024
          %s454 = scalar_lea.vmem [#allocation11], %s453
          %s456 = ssub.s32 16384, 16384
          %457 = vsyncadd %s451, %s456
          %s458 = smul.addr %s21, 256
          %s459 = smul.addr %s458, 64
          %s460 = scalar_lea.hbm %s8, %s459
          %s461 = sshll.u32 %s454, 4
          %s462 = int_to_ptr.vmem [resolvable:$true] %s461
          %467 = dma.hbm_to_vmem [thread:$0]  %s460, 16384, %s462, %s451, 512, 512, 32
        $region60: #{part4_forward.1} parent=39 // pred_fallthru
          _
        // Predicated region
        $region61: #{part4_forward.1} parent=39 // pred_check
          %p468 = pneg %p255
        $region62: #{part4_forward.1} parent=39 // pred_check_branch
          %470 = sbr.rel (%p468) target = $region64
        $region63: #{part4_forward.1} parent=39 // pred_region
          %s471 = sand.u32 %s21, 1
          %s472 = scalar_lea.sflag [#allocation5], %s471
          %s473 = sand.u32 %s245, 1
          %s474 = smul.addr %s473, 512
          %s475 = scalar_lea.vmem [#allocation12], %s474
          %s477 = ssub.s32 8192, 8192
          %478 = vsyncadd %s472, %s477
          %s479 = smul.addr %s21, 128
          %s480 = smul.addr %s479, 64
          %s481 = scalar_lea.hbm %s9, %s480
          %s482 = sshll.u32 %s475, 4
          %s483 = int_to_ptr.vmem [resolvable:$true] %s482
          %488 = dma.hbm_to_vmem [thread:$0]  %s481, 8192, %s483, %s472, 128, 128, 8
        $region64: #{part4_forward.1} parent=39 // pred_fallthru
          _
      $region40: #{part4_forward.1} parent=5 // pred_fallthru
        _
      %p489 = scmp.le.s32.totalorder 1, %s21
      %p490 = scmp.lt.s32.totalorder %s21, 3
      %p491 = pnand %p489, %p490
      %p492 = pneg %p491
      // Predicated region
      $region65: #{part4_forward.1} parent=5 // pred_check
        _
      $region66: #{part4_forward.1} parent=5 // pred_check_branch
        %494 = sbr.rel (%p491) target = $region68
      $region67: #{part4_forward.1} parent=5 // pred_region
        %s495 = ssub.s32 %s21, 1
        // Predicated region
        $region69: #{part4_forward.1} parent=67 // pred_check
          %p496 = pneg %p84
        $region70: #{part4_forward.1} parent=67 // pred_check_branch
          %498 = sbr.rel (%p496) target = $region72
        $region71: #{part4_forward.1} parent=67 // pred_region
          %499 = dma.done [#allocation5], 512
        $region72: #{part4_forward.1} parent=67 // pred_fallthru
          _
        // Predicated region
        $region73: #{part4_forward.1} parent=67 // pred_check
          %p500 = pneg %p105
        $region74: #{part4_forward.1} parent=67 // pred_check_branch
          %502 = sbr.rel (%p500) target = $region76
        $region75: #{part4_forward.1} parent=67 // pred_region
          %503 = dma.done [#allocation8], 512
        $region76: #{part4_forward.1} parent=67 // pred_fallthru
          _
        %s504 = sand.u32 %s26, 1
        %s505 = scalar_lea.sflag [#allocation5], %s504
        %s506 = sand.u32 %s144, 1
        %s507 = smul.addr %s506, 768
        %s508 = scalar_lea.vmem [#allocation9], %s507
        // Predicated region
        $region77: #{part4_forward.1} parent=67 // pred_check
          %p509 = pneg %p157
        $region78: #{part4_forward.1} parent=67 // pred_check_branch
          %511 = sbr.rel (%p509) target = $region80
        $region79: #{part4_forward.1} parent=67 // pred_region
          %512 = dma.done %s505, 12288
        $region80: #{part4_forward.1} parent=67 // pred_fallthru
          _
        %s513 = sand.u32 %s26, 1
        %s514 = scalar_lea.sflag [#allocation5], %s513
        %s515 = sand.u32 %s170, 1
        %s516 = smul.addr %s515, 256
        %s517 = scalar_lea.vmem [#allocation10], %s516
        // Predicated region
        $region81: #{part4_forward.1} parent=67 // pred_check
          %p518 = pneg %p183
        $region82: #{part4_forward.1} parent=67 // pred_check_branch
          %520 = sbr.rel (%p518) target = $region84
        $region83: #{part4_forward.1} parent=67 // pred_region
          %521 = dma.done %s514, 4096
        $region84: #{part4_forward.1} parent=67 // pred_fallthru
          _
        %s522 = sand.u32 %s26, 1
        %s523 = scalar_lea.sflag [#allocation5], %s522
        %s524 = sand.u32 %s222, 1
        %s525 = smul.addr %s524, 1024
        %s526 = scalar_lea.vmem [#allocation11], %s525
        // Predicated region
        $region85: #{part4_forward.1} parent=67 // pred_check
          %p527 = pneg %p235
        $region86: #{part4_forward.1} parent=67 // pred_check_branch
          %529 = sbr.rel (%p527) target = $region88
        $region87: #{part4_forward.1} parent=67 // pred_region
          %530 = dma.done %s523, 16384
        $region88: #{part4_forward.1} parent=67 // pred_fallthru
          _
        %s531 = sand.u32 %s26, 1
        %s532 = scalar_lea.sflag [#allocation5], %s531
        %s533 = sand.u32 %s248, 1
        %s534 = smul.addr %s533, 512
        %s535 = scalar_lea.vmem [#allocation12], %s534
        // Predicated region
        $region89: #{part4_forward.1} parent=67 // pred_check
          %p536 = pneg %p261
        $region90: #{part4_forward.1} parent=67 // pred_check_branch
          %538 = sbr.rel (%p536) target = $region92
        $region91: #{part4_forward.1} parent=67 // pred_region
          %539 = dma.done %s532, 8192
        $region92: #{part4_forward.1} parent=67 // pred_fallthru
          _
        // Predicated region
        $region93: #{part4_forward.1} parent=67 // pred_check
          %p540 = pneg %p303
        $region94: #{part4_forward.1} parent=67 // pred_check_branch
          %542 = sbr.rel (%p540) target = $region96
        $region95: #{part4_forward.1} parent=67 // pred_region
          %543 = dma.done [#allocation8], 8192
        $region96: #{part4_forward.1} parent=67 // pred_fallthru
          _
        %p544 = pneg %p42
        %p545 = pneg %p39
        %p546 = pneg %p63
        %p547 = pneg %p60
        %p548 = pneg %p84
        %p549 = pneg %p81
        %p550 = pneg %p105
        %p551 = pneg %p102
        %p552 = scmp.lt.s32.totalorder %s26, 1
        %s553 = scalar_select %p552, %s26, 1
        %s554 = smul.addr %s553, 2
        %s555 = scalar_lea.vmem %s4, %s554
        %p556 = pneg %p131
        %p557 = pneg %p128
        %s558 = sand.u32 %s26, 1
        %s559 = scalar_lea.sflag [#allocation5], %s558
        %s560 = sand.u32 %s144, 1
        %s561 = smul.addr %s560, 768
        %s562 = scalar_lea.vmem [#allocation9], %s561
        %p563 = pneg %p157
        %p564 = pneg %p154
        %s565 = sand.u32 %s26, 1
        %s566 = scalar_lea.sflag [#allocation5], %s565
        %s567 = sand.u32 %s170, 1
        %s568 = smul.addr %s567, 256
        %s569 = scalar_lea.vmem [#allocation10], %s568
        %p570 = pneg %p183
        %p571 = pneg %p180
        %p572 = scmp.lt.s32.totalorder %s26, 1
        %s573 = scalar_select %p572, %s26, 1
        %s574 = smul.addr %s573, 2
        %s575 = scalar_lea.vmem %s7, %s574
        %p576 = pneg %p209
        %p577 = pneg %p206
        %s578 = sand.u32 %s26, 1
        %s579 = scalar_lea.sflag [#allocation5], %s578
        %s580 = sand.u32 %s222, 1
        %s581 = smul.addr %s580, 1024
        %s582 = scalar_lea.vmem [#allocation11], %s581
        %p583 = pneg %p235
        %p584 = pneg %p232
        %s585 = sand.u32 %s26, 1
        %s586 = scalar_lea.sflag [#allocation5], %s585
        %s587 = sand.u32 %s248, 1
        %s588 = smul.addr %s587, 512
        %s589 = scalar_lea.vmem [#allocation12], %s588
        %p590 = pneg %p261
        %p591 = pneg %p258
        %p592 = pneg %p282
        %p593 = pneg %p279
        %p594 = pneg %p303
        %p595 = pneg %p300
        %p596 = pneg %p324
        %p597 = pneg %p321
        %p598 = scmp.lt.s32.totalorder %s26, 1
        %s599 = scalar_select %p598, %s26, 1
        %s600 = smul.addr %s599, 2
        %s601 = scalar_lea.vmem %s4, %s600
        %p602 = scmp.lt.s32.totalorder %s26, 1
        %s603 = scalar_select %p602, %s26, 1
        %s604 = smul.addr %s603, 2
        %s605 = scalar_lea.vmem %s7, %s604
        %p607 = scmp.eq.s32.totalorder %s26, 0
        // Predicated region
        $region97: #{part4_forward.1} parent=67 // pred_check
          %p608 = pneg %p607
        $region98: #{part4_forward.1} parent=67 // pred_check_branch
          %610 = sbr.rel (%p608) target = $region100
        $region99: #{part4_forward.1} parent=67 // pred_region
          %v611 = vld [vmem:[%s0] sm:$0xff]
          %v612 = vld [vmem:[%s0 + $0x8] sm:$0xff]
          %v613 = vld [vmem:[%s0 + $0x10] sm:$0xff]
          %v614 = vld [vmem:[%s0 + $0x18] sm:$0xff]
          %615 = vst [vmem:[#allocation2] sm:$0xff] %v611
          %616 = vst [vmem:[#allocation2 + $0x8] sm:$0xff] %v612
          %617 = vst [vmem:[#allocation2 + $0x10] sm:$0xff] %v613
          %618 = vst [vmem:[#allocation2 + $0x18] sm:$0xff] %v614
        $region100: #{part4_forward.1} parent=67 // pred_fallthru
          _
        %v619 = vld [vmem:[#allocation2] sm:$0xff]
        %v620 = vld [vmem:[#allocation2 + $0x8] sm:$0xff]
        %v621 = vld [vmem:[#allocation2 + $0x10] sm:$0xff]
        %v622 = vld [vmem:[#allocation2 + $0x18] sm:$0xff]
        %v623 = vld [vmem:[%s601] sm:$0x3]
        %v624 = vmul.f32 %v619, %v619
        %v625 = vmul.f32 %v620, %v620
        %v626 = vmul.f32 %v621, %v621
        %v627 = vmul.f32 %v622, %v622
        %v628 = vadd.f32 %v624, %v625
        %629 = vadd.xlane.f32.xlu0 %v628
        %v630 = vpop.xlane.xlu0 %629
        %v631 = vadd.f32 %v626, %v627
        %632 = vadd.xlane.f32.xlu0 %v631
        %v633 = vpop.xlane.xlu0 %632
        %v634 = vrcp.pop 256.0
        %v635 = vmul.f32 %v630, %v634
        %v636 = vmul.f32 %v633, %v634
        %v637 = vadd.f32 %v635, 1e-06
        %v638 = vadd.f32 %v636, 1e-06
        %v639 = vrsqrt.pop %v637
        %v640 = vrsqrt.pop %v638
        %v641 = vmul.f32 %v619, %v639
        %v642 = vmul.f32 %v620, %v639
        %v643 = vmul.f32 %v621, %v640
        %v644 = vmul.f32 %v622, %v640
        %v646 = vlaneseq
        %v647 = vshrl.u32 %v646, 7
        %v648 = vsub.s32 0, %v647
        %v649 = vrot.slane %v623, %v648
        %v650 = vlaneseq
        %v651 = vshrl.u32 %v650, 7
        %v652 = vsub.s32 1, %v651
        %v653 = vrot.slane %v623, %v652
        %v656 = vmul.f32 %v641, %v649
        %v657 = vmul.f32 %v642, %v653
        %v658 = vmul.f32 %v643, %v649
        %v659 = vmul.f32 %v644, %v653
        %v660 = vpack.c.bf16 %v658, %v656
        %v661 = vpack.c.bf16 %v659, %v657
        %v662 = vld [vmem:[%s508] sm:$0xff]
        %v663 = vld [vmem:[%s508 + $0x8] sm:$0xff]
        %v664 = vld [vmem:[%s508 + $0x10] sm:$0xff]
        %v665 = vld [vmem:[%s508 + $0x18] sm:$0xff]
        %v666 = vld [vmem:[%s508 + $0x20] sm:$0xff]
        %v667 = vld [vmem:[%s508 + $0x28] sm:$0xff]
        %v668 = vld [vmem:[%s508 + $0x30] sm:$0xff]
        %v669 = vld [vmem:[%s508 + $0x38] sm:$0xff]
        %v670 = vld [vmem:[%s508 + $0x40] sm:$0xff]
        %v671 = vld [vmem:[%s508 + $0x48] sm:$0xff]
        %v672 = vld [vmem:[%s508 + $0x50] sm:$0xff]
        %v673 = vld [vmem:[%s508 + $0x58] sm:$0xff]
        %v674 = vld [vmem:[%s508 + $0x60] sm:$0xff]
        %v675 = vld [vmem:[%s508 + $0x68] sm:$0xff]
        %v676 = vld [vmem:[%s508 + $0x70] sm:$0xff]
        %v677 = vld [vmem:[%s508 + $0x78] sm:$0xff]
        %v678 = vld [vmem:[%s508 + $0x80] sm:$0xff]
        %v679 = vld [vmem:[%s508 + $0x88] sm:$0xff]
        %v680 = vld [vmem:[%s508 + $0x90] sm:$0xff]
        %v681 = vld [vmem:[%s508 + $0x98] sm:$0xff]
        %v682 = vld [vmem:[%s508 + $0xa0] sm:$0xff]
        %v683 = vld [vmem:[%s508 + $0xa8] sm:$0xff]
        %v684 = vld [vmem:[%s508 + $0xb0] sm:$0xff]
        %v685 = vld [vmem:[%s508 + $0xb8] sm:$0xff]
        %v686 = vld [vmem:[%s508 + $0xc0] sm:$0xff]
        %v687 = vld [vmem:[%s508 + $0xc8] sm:$0xff]
        %v688 = vld [vmem:[%s508 + $0xd0] sm:$0xff]
        %v689 = vld [vmem:[%s508 + $0xd8] sm:$0xff]
        %v690 = vld [vmem:[%s508 + $0xe0] sm:$0xff]
        %v691 = vld [vmem:[%s508 + $0xe8] sm:$0xff]
        %v692 = vld [vmem:[%s508 + $0xf0] sm:$0xff]
        %v693 = vld [vmem:[%s508 + $0xf8] sm:$0xff]
        %v694 = vld [vmem:[%s508 + $0x100] sm:$0xff]
        %v695 = vld [vmem:[%s508 + $0x108] sm:$0xff]
        %v696 = vld [vmem:[%s508 + $0x110] sm:$0xff]
        %v697 = vld [vmem:[%s508 + $0x118] sm:$0xff]
        %v698 = vld [vmem:[%s508 + $0x120] sm:$0xff]
        %v699 = vld [vmem:[%s508 + $0x128] sm:$0xff]
        %v700 = vld [vmem:[%s508 + $0x130] sm:$0xff]
        %v701 = vld [vmem:[%s508 + $0x138] sm:$0xff]
        %v702 = vld [vmem:[%s508 + $0x140] sm:$0xff]
        %v703 = vld [vmem:[%s508 + $0x148] sm:$0xff]
        %v704 = vld [vmem:[%s508 + $0x150] sm:$0xff]
        %v705 = vld [vmem:[%s508 + $0x158] sm:$0xff]
        %v706 = vld [vmem:[%s508 + $0x160] sm:$0xff]
        %v707 = vld [vmem:[%s508 + $0x168] sm:$0xff]
        %v708 = vld [vmem:[%s508 + $0x170] sm:$0xff]
        %v709 = vld [vmem:[%s508 + $0x178] sm:$0xff]
        %v710 = vld [vmem:[%s508 + $0x180] sm:$0xff]
        %v711 = vld [vmem:[%s508 + $0x188] sm:$0xff]
        %v712 = vld [vmem:[%s508 + $0x190] sm:$0xff]
        %v713 = vld [vmem:[%s508 + $0x198] sm:$0xff]
        %v714 = vld [vmem:[%s508 + $0x1a0] sm:$0xff]
        %v715 = vld [vmem:[%s508 + $0x1a8] sm:$0xff]
        %v716 = vld [vmem:[%s508 + $0x1b0] sm:$0xff]
        %v717 = vld [vmem:[%s508 + $0x1b8] sm:$0xff]
        %v718 = vld [vmem:[%s508 + $0x1c0] sm:$0xff]
        %v719 = vld [vmem:[%s508 + $0x1c8] sm:$0xff]
        %v720 = vld [vmem:[%s508 + $0x1d0] sm:$0xff]
        %v721 = vld [vmem:[%s508 + $0x1d8] sm:$0xff]
        %v722 = vld [vmem:[%s508 + $0x1e0] sm:$0xff]
        %v723 = vld [vmem:[%s508 + $0x1e8] sm:$0xff]
        %v724 = vld [vmem:[%s508 + $0x1f0] sm:$0xff]
        %v725 = vld [vmem:[%s508 + $0x1f8] sm:$0xff]
        %v726 = vld [vmem:[%s508 + $0x200] sm:$0xff]
        %v727 = vld [vmem:[%s508 + $0x208] sm:$0xff]
        %v728 = vld [vmem:[%s508 + $0x210] sm:$0xff]
        %v729 = vld [vmem:[%s508 + $0x218] sm:$0xff]
        %v730 = vld [vmem:[%s508 + $0x220] sm:$0xff]
        %v731 = vld [vmem:[%s508 + $0x228] sm:$0xff]
        %v732 = vld [vmem:[%s508 + $0x230] sm:$0xff]
        %v733 = vld [vmem:[%s508 + $0x238] sm:$0xff]
        %v734 = vld [vmem:[%s508 + $0x240] sm:$0xff]
        %v735 = vld [vmem:[%s508 + $0x248] sm:$0xff]
        %v736 = vld [vmem:[%s508 + $0x250] sm:$0xff]
        %v737 = vld [vmem:[%s508 + $0x258] sm:$0xff]
        %v738 = vld [vmem:[%s508 + $0x260] sm:$0xff]
        %v739 = vld [vmem:[%s508 + $0x268] sm:$0xff]
        %v740 = vld [vmem:[%s508 + $0x270] sm:$0xff]
        %v741 = vld [vmem:[%s508 + $0x278] sm:$0xff]
        %v742 = vld [vmem:[%s508 + $0x280] sm:$0xff]
        %v743 = vld [vmem:[%s508 + $0x288] sm:$0xff]
        %v744 = vld [vmem:[%s508 + $0x290] sm:$0xff]
        %v745 = vld [vmem:[%s508 + $0x298] sm:$0xff]
        %v746 = vld [vmem:[%s508 + $0x2a0] sm:$0xff]
        %v747 = vld [vmem:[%s508 + $0x2a8] sm:$0xff]
        %v748 = vld [vmem:[%s508 + $0x2b0] sm:$0xff]
        %v749 = vld [vmem:[%s508 + $0x2b8] sm:$0xff]
        %v750 = vld [vmem:[%s508 + $0x2c0] sm:$0xff]
        %v751 = vld [vmem:[%s508 + $0x2c8] sm:$0xff]
        %v752 = vld [vmem:[%s508 + $0x2d0] sm:$0xff]
        %v753 = vld [vmem:[%s508 + $0x2d8] sm:$0xff]
        %v754 = vld [vmem:[%s508 + $0x2e0] sm:$0xff]
        %v755 = vld [vmem:[%s508 + $0x2e8] sm:$0xff]
        %v756 = vld [vmem:[%s508 + $0x2f0] sm:$0xff]
        %v757 = vld [vmem:[%s508 + $0x2f8] sm:$0xff]
        %v854 = vunpack.c.l.b16 %v662
        %v855 = vunpack.c.h.b16 %v662
        %v856 = vunpack.c.l.b16 %v663
        %v857 = vunpack.c.h.b16 %v663
        %v858 = vunpack.c.l.b16 %v664
        %v859 = vunpack.c.h.b16 %v664
        %v860 = vunpack.c.l.b16 %v665
        %v861 = vunpack.c.h.b16 %v665
        %v862 = vunpack.c.l.b16 %v666
        %v863 = vunpack.c.h.b16 %v666
        %v864 = vunpack.c.l.b16 %v667
        %v865 = vunpack.c.h.b16 %v667
        %v866 = vunpack.c.l.b16 %v668
        %v867 = vunpack.c.h.b16 %v668
        %v868 = vunpack.c.l.b16 %v669
        %v869 = vunpack.c.h.b16 %v669
        %v870 = vunpack.c.l.b16 %v670
        %v871 = vunpack.c.h.b16 %v670
        %v872 = vunpack.c.l.b16 %v671
        %v873 = vunpack.c.h.b16 %v671
        %v874 = vunpack.c.l.b16 %v672
        %v875 = vunpack.c.h.b16 %v672
        %v876 = vunpack.c.l.b16 %v673
        %v877 = vunpack.c.h.b16 %v673
        %v878 = vunpack.c.l.b16 %v674
        %v879 = vunpack.c.h.b16 %v674
        %v880 = vunpack.c.l.b16 %v675
        %v881 = vunpack.c.h.b16 %v675
        %v882 = vunpack.c.l.b16 %v676
        %v883 = vunpack.c.h.b16 %v676
        %v884 = vunpack.c.l.b16 %v677
        %v885 = vunpack.c.h.b16 %v677
        %v886 = vunpack.c.l.b16 %v678
        %v887 = vunpack.c.h.b16 %v678
        %v888 = vunpack.c.l.b16 %v679
        %v889 = vunpack.c.h.b16 %v679
        %v890 = vunpack.c.l.b16 %v680
        %v891 = vunpack.c.h.b16 %v680
        %v892 = vunpack.c.l.b16 %v681
        %v893 = vunpack.c.h.b16 %v681
        %v894 = vunpack.c.l.b16 %v682
        %v895 = vunpack.c.h.b16 %v682
        %v896 = vunpack.c.l.b16 %v683
        %v897 = vunpack.c.h.b16 %v683
        %v898 = vunpack.c.l.b16 %v684
        %v899 = vunpack.c.h.b16 %v684
        %v900 = vunpack.c.l.b16 %v685
        %v901 = vunpack.c.h.b16 %v685
        %v902 = vunpack.c.l.b16 %v686
        %v903 = vunpack.c.h.b16 %v686
        %v904 = vunpack.c.l.b16 %v687
        %v905 = vunpack.c.h.b16 %v687
        %v906 = vunpack.c.l.b16 %v688
        %v907 = vunpack.c.h.b16 %v688
        %v908 = vunpack.c.l.b16 %v689
        %v909 = vunpack.c.h.b16 %v689
        %v910 = vunpack.c.l.b16 %v690
        %v911 = vunpack.c.h.b16 %v690
        %v912 = vunpack.c.l.b16 %v691
        %v913 = vunpack.c.h.b16 %v691
        %v914 = vunpack.c.l.b16 %v692
        %v915 = vunpack.c.h.b16 %v692
        %v916 = vunpack.c.l.b16 %v693
        %v917 = vunpack.c.h.b16 %v693
        %v918 = vunpack.c.l.b16 %v694
        %v919 = vunpack.c.h.b16 %v694
        %v920 = vunpack.c.l.b16 %v695
        %v921 = vunpack.c.h.b16 %v695
        %v922 = vunpack.c.l.b16 %v696
        %v923 = vunpack.c.h.b16 %v696
        %v924 = vunpack.c.l.b16 %v697
        %v925 = vunpack.c.h.b16 %v697
        %v926 = vunpack.c.l.b16 %v698
        %v927 = vunpack.c.h.b16 %v698
        %v928 = vunpack.c.l.b16 %v699
        %v929 = vunpack.c.h.b16 %v699
        %v930 = vunpack.c.l.b16 %v700
        %v931 = vunpack.c.h.b16 %v700
        %v932 = vunpack.c.l.b16 %v701
        %v933 = vunpack.c.h.b16 %v701
        %v934 = vunpack.c.l.b16 %v702
        %v935 = vunpack.c.h.b16 %v702
        %v936 = vunpack.c.l.b16 %v703
        %v937 = vunpack.c.h.b16 %v703
        %v938 = vunpack.c.l.b16 %v704
        %v939 = vunpack.c.h.b16 %v704
        %v940 = vunpack.c.l.b16 %v705
        %v941 = vunpack.c.h.b16 %v705
        %v942 = vunpack.c.l.b16 %v706
        %v943 = vunpack.c.h.b16 %v706
        %v944 = vunpack.c.l.b16 %v707
        %v945 = vunpack.c.h.b16 %v707
        %v946 = vunpack.c.l.b16 %v708
        %v947 = vunpack.c.h.b16 %v708
        %v948 = vunpack.c.l.b16 %v709
        %v949 = vunpack.c.h.b16 %v709
        %v950 = vunpack.c.l.b16 %v710
        %v951 = vunpack.c.h.b16 %v710
        %v952 = vunpack.c.l.b16 %v711
        %v953 = vunpack.c.h.b16 %v711
        %v954 = vunpack.c.l.b16 %v712
        %v955 = vunpack.c.h.b16 %v712
        %v956 = vunpack.c.l.b16 %v713
        %v957 = vunpack.c.h.b16 %v713
        %v958 = vunpack.c.l.b16 %v714
        %v959 = vunpack.c.h.b16 %v714
        %v960 = vunpack.c.l.b16 %v715
        %v961 = vunpack.c.h.b16 %v715
        %v962 = vunpack.c.l.b16 %v716
        %v963 = vunpack.c.h.b16 %v716
        %v964 = vunpack.c.l.b16 %v717
        %v965 = vunpack.c.h.b16 %v717
        %v966 = vunpack.c.l.b16 %v718
        %v967 = vunpack.c.h.b16 %v718
        %v968 = vunpack.c.l.b16 %v719
        %v969 = vunpack.c.h.b16 %v719
        %v970 = vunpack.c.l.b16 %v720
        %v971 = vunpack.c.h.b16 %v720
        %v972 = vunpack.c.l.b16 %v721
        %v973 = vunpack.c.h.b16 %v721
        %v974 = vunpack.c.l.b16 %v722
        %v975 = vunpack.c.h.b16 %v722
        %v976 = vunpack.c.l.b16 %v723
        %v977 = vunpack.c.h.b16 %v723
        %v978 = vunpack.c.l.b16 %v724
        %v979 = vunpack.c.h.b16 %v724
        %v980 = vunpack.c.l.b16 %v725
        %v981 = vunpack.c.h.b16 %v725
        %v982 = vunpack.c.l.b16 %v726
        %v983 = vunpack.c.h.b16 %v726
        %v984 = vunpack.c.l.b16 %v727
        %v985 = vunpack.c.h.b16 %v727
        %v986 = vunpack.c.l.b16 %v728
        %v987 = vunpack.c.h.b16 %v728
        %v988 = vunpack.c.l.b16 %v729
        %v989 = vunpack.c.h.b16 %v729
        %v990 = vunpack.c.l.b16 %v730
        %v991 = vunpack.c.h.b16 %v730
        %v992 = vunpack.c.l.b16 %v731
        %v993 = vunpack.c.h.b16 %v731
        %v994 = vunpack.c.l.b16 %v732
        %v995 = vunpack.c.h.b16 %v732
        %v996 = vunpack.c.l.b16 %v733
        %v997 = vunpack.c.h.b16 %v733
        %v998 = vunpack.c.l.b16 %v734
        %v999 = vunpack.c.h.b16 %v734
        %v1000 = vunpack.c.l.b16 %v735
        %v1001 = vunpack.c.h.b16 %v735
        %v1002 = vunpack.c.l.b16 %v736
        %v1003 = vunpack.c.h.b16 %v736
        %v1004 = vunpack.c.l.b16 %v737
        %v1005 = vunpack.c.h.b16 %v737
        %v1006 = vunpack.c.l.b16 %v738
        %v1007 = vunpack.c.h.b16 %v738
        %v1008 = vunpack.c.l.b16 %v739
        %v1009 = vunpack.c.h.b16 %v739
        %v1010 = vunpack.c.l.b16 %v740
        %v1011 = vunpack.c.h.b16 %v740
        %v1012 = vunpack.c.l.b16 %v741
        %v1013 = vunpack.c.h.b16 %v741
        %v1014 = vunpack.c.l.b16 %v742
        %v1015 = vunpack.c.h.b16 %v742
        %v1016 = vunpack.c.l.b16 %v743
        %v1017 = vunpack.c.h.b16 %v743
        %v1018 = vunpack.c.l.b16 %v744
        %v1019 = vunpack.c.h.b16 %v744
        %v1020 = vunpack.c.l.b16 %v745
        %v1021 = vunpack.c.h.b16 %v745
        %v1022 = vunpack.c.l.b16 %v746
        %v1023 = vunpack.c.h.b16 %v746
        %v1024 = vunpack.c.l.b16 %v747
        %v1025 = vunpack.c.h.b16 %v747
        %v1026 = vunpack.c.l.b16 %v748
        %v1027 = vunpack.c.h.b16 %v748
        %v1028 = vunpack.c.l.b16 %v749
        %v1029 = vunpack.c.h.b16 %v749
        %v1030 = vunpack.c.l.b16 %v750
        %v1031 = vunpack.c.h.b16 %v750
        %v1032 = vunpack.c.l.b16 %v751
        %v1033 = vunpack.c.h.b16 %v751
        %v1034 = vunpack.c.l.b16 %v752
        %v1035 = vunpack.c.h.b16 %v752
        %v1036 = vunpack.c.l.b16 %v753
        %v1037 = vunpack.c.h.b16 %v753
        %v1038 = vunpack.c.l.b16 %v754
        %v1039 = vunpack.c.h.b16 %v754
        %v1040 = vunpack.c.l.b16 %v755
        %v1041 = vunpack.c.h.b16 %v755
        %v1042 = vunpack.c.l.b16 %v756
        %v1043 = vunpack.c.h.b16 %v756
        %v1044 = vunpack.c.l.b16 %v757
        %v1045 = vunpack.c.h.b16 %v757
        %v1046 = vpack.c.b16 %v860, %v854
        %v1047 = vpack.c.b16 %v861, %v855
        %v1048 = vpack.c.b16 %v862, %v856
        %v1049 = vpack.c.b16 %v863, %v857
        %v1050 = vpack.c.b16 %v864, %v858
        %v1051 = vpack.c.b16 %v865, %v859
        %v1052 = vpack.c.b16 %v872, %v866
        %v1053 = vpack.c.b16 %v873, %v867
        %v1054 = vpack.c.b16 %v874, %v868
        %v1055 = vpack.c.b16 %v875, %v869
        %v1056 = vpack.c.b16 %v876, %v870
        %v1057 = vpack.c.b16 %v877, %v871
        %v1058 = vpack.c.b16 %v884, %v878
        %v1059 = vpack.c.b16 %v885, %v879
        %v1060 = vpack.c.b16 %v886, %v880
        %v1061 = vpack.c.b16 %v887, %v881
        %v1062 = vpack.c.b16 %v888, %v882
        %v1063 = vpack.c.b16 %v889, %v883
        %v1064 = vpack.c.b16 %v896, %v890
        %v1065 = vpack.c.b16 %v897, %v891
        %v1066 = vpack.c.b16 %v898, %v892
        %v1067 = vpack.c.b16 %v899, %v893
        %v1068 = vpack.c.b16 %v900, %v894
        %v1069 = vpack.c.b16 %v901, %v895
        %v1070 = vpack.c.b16 %v908, %v902
        %v1071 = vpack.c.b16 %v909, %v903
        %v1072 = vpack.c.b16 %v910, %v904
        %v1073 = vpack.c.b16 %v911, %v905
        %v1074 = vpack.c.b16 %v912, %v906
        %v1075 = vpack.c.b16 %v913, %v907
        %v1076 = vpack.c.b16 %v920, %v914
        %v1077 = vpack.c.b16 %v921, %v915
        %v1078 = vpack.c.b16 %v922, %v916
        %v1079 = vpack.c.b16 %v923, %v917
        %v1080 = vpack.c.b16 %v924, %v918
        %v1081 = vpack.c.b16 %v925, %v919
        %v1082 = vpack.c.b16 %v932, %v926
        %v1083 = vpack.c.b16 %v933, %v927
        %v1084 = vpack.c.b16 %v934, %v928
        %v1085 = vpack.c.b16 %v935, %v929
        %v1086 = vpack.c.b16 %v936, %v930
        %v1087 = vpack.c.b16 %v937, %v931
        %v1088 = vpack.c.b16 %v944, %v938
        %v1089 = vpack.c.b16 %v945, %v939
        %v1090 = vpack.c.b16 %v946, %v940
        %v1091 = vpack.c.b16 %v947, %v941
        %v1092 = vpack.c.b16 %v948, %v942
        %v1093 = vpack.c.b16 %v949, %v943
        %v1094 = vpack.c.b16 %v956, %v950
        %v1095 = vpack.c.b16 %v957, %v951
        %v1096 = vpack.c.b16 %v958, %v952
        %v1097 = vpack.c.b16 %v959, %v953
        %v1098 = vpack.c.b16 %v960, %v954
        %v1099 = vpack.c.b16 %v961, %v955
        %v1100 = vpack.c.b16 %v968, %v962
        %v1101 = vpack.c.b16 %v969, %v963
        %v1102 = vpack.c.b16 %v970, %v964
        %v1103 = vpack.c.b16 %v971, %v965
        %v1104 = vpack.c.b16 %v972, %v966
        %v1105 = vpack.c.b16 %v973, %v967
        %v1106 = vpack.c.b16 %v980, %v974
        %v1107 = vpack.c.b16 %v981, %v975
        %v1108 = vpack.c.b16 %v982, %v976
        %v1109 = vpack.c.b16 %v983, %v977
        %v1110 = vpack.c.b16 %v984, %v978
        %v1111 = vpack.c.b16 %v985, %v979
        %v1112 = vpack.c.b16 %v992, %v986
        %v1113 = vpack.c.b16 %v993, %v987
        %v1114 = vpack.c.b16 %v994, %v988
        %v1115 = vpack.c.b16 %v995, %v989
        %v1116 = vpack.c.b16 %v996, %v990
        %v1117 = vpack.c.b16 %v997, %v991
        %v1118 = vpack.c.b16 %v1004, %v998
        %v1119 = vpack.c.b16 %v1005, %v999
        %v1120 = vpack.c.b16 %v1006, %v1000
        %v1121 = vpack.c.b16 %v1007, %v1001
        %v1122 = vpack.c.b16 %v1008, %v1002
        %v1123 = vpack.c.b16 %v1009, %v1003
        %v1124 = vpack.c.b16 %v1016, %v1010
        %v1125 = vpack.c.b16 %v1017, %v1011
        %v1126 = vpack.c.b16 %v1018, %v1012
        %v1127 = vpack.c.b16 %v1019, %v1013
        %v1128 = vpack.c.b16 %v1020, %v1014
        %v1129 = vpack.c.b16 %v1021, %v1015
        %v1130 = vpack.c.b16 %v1028, %v1022
        %v1131 = vpack.c.b16 %v1029, %v1023
        %v1132 = vpack.c.b16 %v1030, %v1024
        %v1133 = vpack.c.b16 %v1031, %v1025
        %v1134 = vpack.c.b16 %v1032, %v1026
        %v1135 = vpack.c.b16 %v1033, %v1027
        %v1136 = vpack.c.b16 %v1040, %v1034
        %v1137 = vpack.c.b16 %v1041, %v1035
        %v1138 = vpack.c.b16 %v1042, %v1036
        %v1139 = vpack.c.b16 %v1043, %v1037
        %v1140 = vpack.c.b16 %v1044, %v1038
        %v1141 = vpack.c.b16 %v1045, %v1039
        %1238 = vmatprep.subr.bf16.mxu0 %v1047
        %1239 = vmatpush1.bf16.msra.mxu0 %v1046
        %1240 = vmatprep.subr.bf16.mxu0 %v1053
        %1241 = vmatpush1.bf16.msra.mxu0 %v1052
        %1242 = vmatprep.subr.bf16.mxu0 %v1059
        %1243 = vmatpush1.bf16.msra.mxu0 %v1058
        %1244 = vmatprep.subr.bf16.mxu0 %v1065
        %1245 = vmatpush1.bf16.msra.mxu0 %v1064
        %1246 = vmatprep.subr.bf16.mxu0 %v1071
        %1247 = vmatpush1.bf16.msra.mxu0 %v1070
        %1248 = vmatprep.subr.bf16.mxu0 %v1077
        %1249 = vmatpush1.bf16.msra.mxu0 %v1076
        %1250 = vmatprep.subr.bf16.mxu0 %v1083
        %1251 = vmatpush1.bf16.msra.mxu0 %v1082
        %1252 = vmatprep.subr.bf16.mxu0 %v1089
        %1253 = vmatpush1.bf16.msra.mxu0 %v1088
        %1254 = vmatprep.subr.bf16.mxu0 %v1095
        %1255 = vmatpush1.bf16.msra.mxu0 %v1094
        %1256 = vmatprep.subr.bf16.mxu0 %v1101
        %1257 = vmatpush1.bf16.msra.mxu0 %v1100
        %1258 = vmatprep.subr.bf16.mxu0 %v1107
        %1259 = vmatpush1.bf16.msra.mxu0 %v1106
        %1260 = vmatprep.subr.bf16.mxu0 %v1113
        %1261 = vmatpush1.bf16.msra.mxu0 %v1112
        %1262 = vmatprep.subr.bf16.mxu0 %v1119
        %1263 = vmatpush1.bf16.msra.mxu0 %v1118
        %1264 = vmatprep.subr.bf16.mxu0 %v1125
        %1265 = vmatpush1.bf16.msra.mxu0 %v1124
        %1266 = vmatprep.subr.bf16.mxu0 %v1131
        %1267 = vmatpush1.bf16.msra.mxu0 %v1130
        %1268 = vmatprep.subr.bf16.mxu0 %v1137
        %1269 = vmatpush1.bf16.msra.mxu0 %v1136
        %1270 = vmatprep.mubr.bf16.mxu0 %v661
        %1271 = vmatmul.mubr.bf16.gmra.mrb[0].mxu0 %v660
        %v1272 = vpop.f32.mrb[0].mxu0
        %v1273 = vadd.f32 0.0, %v1272
        %v1274 = vpop.f32.mrb[0].mxu0
        %v1275 = vadd.f32 0.0, %v1274
        %v1276 = vpop.f32.mrb[0].mxu0
        %v1277 = vadd.f32 0.0, %v1276
        %v1278 = vpop.f32.mrb[0].mxu0
        %v1279 = vadd.f32 0.0, %v1278
        %1280 = vdwg.mxu0
        %1281 = vmatprep.subr.bf16.mxu0 %v1049
        %1282 = vmatpush1.bf16.msra.mxu0 %v1048
        %1283 = vmatprep.subr.bf16.mxu0 %v1055
        %1284 = vmatpush1.bf16.msra.mxu0 %v1054
        %1285 = vmatprep.subr.bf16.mxu0 %v1061
        %1286 = vmatpush1.bf16.msra.mxu0 %v1060
        %1287 = vmatprep.subr.bf16.mxu0 %v1067
        %1288 = vmatpush1.bf16.msra.mxu0 %v1066
        %1289 = vmatprep.subr.bf16.mxu0 %v1073
        %1290 = vmatpush1.bf16.msra.mxu0 %v1072
        %1291 = vmatprep.subr.bf16.mxu0 %v1079
        %1292 = vmatpush1.bf16.msra.mxu0 %v1078
        %1293 = vmatprep.subr.bf16.mxu0 %v1085
        %1294 = vmatpush1.bf16.msra.mxu0 %v1084
        %1295 = vmatprep.subr.bf16.mxu0 %v1091
        %1296 = vmatpush1.bf16.msra.mxu0 %v1090
        %1297 = vmatprep.subr.bf16.mxu0 %v1097
        %1298 = vmatpush1.bf16.msra.mxu0 %v1096
        %1299 = vmatprep.subr.bf16.mxu0 %v1103
        %1300 = vmatpush1.bf16.msra.mxu0 %v1102
        %1301 = vmatprep.subr.bf16.mxu0 %v1109
        %1302 = vmatpush1.bf16.msra.mxu0 %v1108
        %1303 = vmatprep.subr.bf16.mxu0 %v1115
        %1304 = vmatpush1.bf16.msra.mxu0 %v1114
        %1305 = vmatprep.subr.bf16.mxu0 %v1121
        %1306 = vmatpush1.bf16.msra.mxu0 %v1120
        %1307 = vmatprep.subr.bf16.mxu0 %v1127
        %1308 = vmatpush1.bf16.msra.mxu0 %v1126
        %1309 = vmatprep.subr.bf16.mxu0 %v1133
        %1310 = vmatpush1.bf16.msra.mxu0 %v1132
        %1311 = vmatprep.subr.bf16.mxu0 %v1139
        %1312 = vmatpush1.bf16.msra.mxu0 %v1138
        %1313 = vmatprep.mubr.bf16.mxu0 %v661
        %1314 = vmatmul.mubr.bf16.gmra.mrb[0].mxu0 %v660
        %v1315 = vpop.f32.mrb[0].mxu0
        %v1316 = vadd.f32 0.0, %v1315
        %v1317 = vpop.f32.mrb[0].mxu0
        %v1318 = vadd.f32 0.0, %v1317
        %v1319 = vpop.f32.mrb[0].mxu0
        %v1320 = vadd.f32 0.0, %v1319
        %v1321 = vpop.f32.mrb[0].mxu0
        %v1322 = vadd.f32 0.0, %v1321
        %1323 = vdwg.mxu0
        %1324 = vmatprep.subr.bf16.mxu0 %v1051
        %1325 = vmatpush1.bf16.msra.mxu0 %v1050
        %1326 = vmatprep.subr.bf16.mxu0 %v1057
        %1327 = vmatpush1.bf16.msra.mxu0 %v1056
        %1328 = vmatprep.subr.bf16.mxu0 %v1063
        %1329 = vmatpush1.bf16.msra.mxu0 %v1062
        %1330 = vmatprep.subr.bf16.mxu0 %v1069
        %1331 = vmatpush1.bf16.msra.mxu0 %v1068
        %1332 = vmatprep.subr.bf16.mxu0 %v1075
        %1333 = vmatpush1.bf16.msra.mxu0 %v1074
        %1334 = vmatprep.subr.bf16.mxu0 %v1081
        %1335 = vmatpush1.bf16.msra.mxu0 %v1080
        %1336 = vmatprep.subr.bf16.mxu0 %v1087
        %1337 = vmatpush1.bf16.msra.mxu0 %v1086
        %1338 = vmatprep.subr.bf16.mxu0 %v1093
        %1339 = vmatpush1.bf16.msra.mxu0 %v1092
        %1340 = vmatprep.subr.bf16.mxu0 %v1099
        %1341 = vmatpush1.bf16.msra.mxu0 %v1098
        %1342 = vmatprep.subr.bf16.mxu0 %v1105
        %1343 = vmatpush1.bf16.msra.mxu0 %v1104
        %1344 = vmatprep.subr.bf16.mxu0 %v1111
        %1345 = vmatpush1.bf16.msra.mxu0 %v1110
        %1346 = vmatprep.subr.bf16.mxu0 %v1117
        %1347 = vmatpush1.bf16.msra.mxu0 %v1116
        %1348 = vmatprep.subr.bf16.mxu0 %v1123
        %1349 = vmatpush1.bf16.msra.mxu0 %v1122
        %1350 = vmatprep.subr.bf16.mxu0 %v1129
        %1351 = vmatpush1.bf16.msra.mxu0 %v1128
        %1352 = vmatprep.subr.bf16.mxu0 %v1135
        %1353 = vmatpush1.bf16.msra.mxu0 %v1134
        %1354 = vmatprep.subr.bf16.mxu0 %v1141
        %1355 = vmatpush1.bf16.msra.mxu0 %v1140
        %1356 = vmatprep.mubr.bf16.mxu0 %v661
        %1357 = vmatmul.mubr.bf16.gmra.mrb[0].mxu0 %v660
        %v1358 = vpop.f32.mrb[0].mxu0
        %v1359 = vadd.f32 0.0, %v1358
        %v1360 = vpop.f32.mrb[0].mxu0
        %v1361 = vadd.f32 0.0, %v1360
        %v1362 = vpop.f32.mrb[0].mxu0
        %v1363 = vadd.f32 0.0, %v1362
        %v1364 = vpop.f32.mrb[0].mxu0
        %v1365 = vadd.f32 0.0, %v1364
        %1366 = vdwg.mxu0
        %v1367 = vld [vmem:[#allocation4] sm:$0xff]
        %v1368 = vld [vmem:[#allocation4 + $0x8] sm:$0xff]
        %v1369 = vld [vmem:[#allocation4 + $0x10] sm:$0xff]
        %v1370 = vld [vmem:[#allocation4 + $0x18] sm:$0xff]
        %v1371 = vld [vmem:[#allocation7] sm:$0xff]
        %v1372 = vld [vmem:[#allocation7 + $0x8] sm:$0xff]
        %v1373 = vld [vmem:[#allocation7 + $0x10] sm:$0xff]
        %v1374 = vld [vmem:[#allocation7 + $0x18] sm:$0xff]
        %1375 = vrot.lane.b32.xlu0 %v1273, 64
        %v1376 = vpop.permute.xlu0 %1375
        %1377 = vrot.lane.b32.xlu0 %v1277, 64
        %v1378 = vpop.permute.xlu0 %1377
        %1379 = vrot.lane.b32.xlu0 %v1275, 64
        %v1380 = vpop.permute.xlu0 %1379
        %1381 = vrot.lane.b32.xlu0 %v1279, 64
        %v1382 = vpop.permute.xlu0 %1381
        %v1383 = vmul.f32 %v1273, %v1367
        %v1384 = vmul.f32 %v1275, %v1368
        %v1385 = vmul.f32 %v1277, %v1369
        %v1386 = vmul.f32 %v1279, %v1370
        %v1387 = vmul.f32 %v1376, %v1371
        %v1388 = vmul.f32 %v1380, %v1372
        %v1389 = vmul.f32 %v1378, %v1373
        %v1390 = vmul.f32 %v1382, %v1374
        %v1391 = vadd.f32 %v1383, %v1387
        %v1392 = vadd.f32 %v1384, %v1388
        %v1393 = vadd.f32 %v1385, %v1389
        %v1394 = vadd.f32 %v1386, %v1390
        %1395 = vrot.lane.b32.xlu0 %v1316, 64
        %v1396 = vpop.permute.xlu0 %1395
        %1397 = vrot.lane.b32.xlu0 %v1320, 64
        %v1398 = vpop.permute.xlu0 %1397
        %1399 = vrot.lane.b32.xlu0 %v1318, 64
        %v1400 = vpop.permute.xlu0 %1399
        %1401 = vrot.lane.b32.xlu0 %v1322, 64
        %v1402 = vpop.permute.xlu0 %1401
        %v1403 = vmul.f32 %v1316, %v1367
        %v1404 = vmul.f32 %v1318, %v1368
        %v1405 = vmul.f32 %v1320, %v1369
        %v1406 = vmul.f32 %v1322, %v1370
        %v1407 = vmul.f32 %v1396, %v1371
        %v1408 = vmul.f32 %v1400, %v1372
        %v1409 = vmul.f32 %v1398, %v1373
        %v1410 = vmul.f32 %v1402, %v1374
        %v1411 = vadd.f32 %v1403, %v1407
        %v1412 = vadd.f32 %v1404, %v1408
        %v1413 = vadd.f32 %v1405, %v1409
        %v1414 = vadd.f32 %v1406, %v1410
        %v1415 = vld [vmem:[%s1] sm:$0xff]
        %v1416 = vpack.c.bf16 %v1391, %v1391
        %v1417 = vpack.c.bf16 %v1411, %v1411
        %v1418 = vpack.c.bf16 %v1359, %v1359
        %1419 = vmatprep.subr.bf16.mxu0 0
        %1420 = vmatpush1.bf16.xpose.msra.mxu0 %v1417
        %1421 = vmatprep.subr.bf16.mxu0 0
        %1422 = vmatpush1.bf16.xpose.msra.mxu0 0
        %1423 = vmatprep.subr.bf16.mxu0 0
        %1424 = vmatpush1.bf16.xpose.msra.mxu0 0
        %1425 = vmatprep.subr.bf16.mxu0 0
        %1426 = vmatpush1.bf16.xpose.msra.mxu0 0
        %1427 = vmatprep.subr.bf16.mxu0 0
        %1428 = vmatpush1.bf16.xpose.msra.mxu0 0
        %1429 = vmatprep.subr.bf16.mxu0 0
        %1430 = vmatpush1.bf16.xpose.msra.mxu0 0
        %1431 = vmatprep.subr.bf16.mxu0 0
        %1432 = vmatpush1.bf16.xpose.msra.mxu0 0
        %1433 = vmatprep.subr.bf16.mxu0 0
        %1434 = vmatpush1.bf16.xpose.msra.mxu0 0
        %1435 = vmatprep.subr.bf16.mxu0 0
        %1436 = vmatpush1.bf16.xpose.msra.mxu0 0
        %1437 = vmatprep.subr.bf16.mxu0 0
        %1438 = vmatpush1.bf16.xpose.msra.mxu0 0
        %1439 = vmatprep.subr.bf16.mxu0 0
        %1440 = vmatpush1.bf16.xpose.msra.mxu0 0
        %1441 = vmatprep.subr.bf16.mxu0 0
        %1442 = vmatpush1.bf16.xpose.msra.mxu0 0
        %1443 = vmatprep.subr.bf16.mxu0 0
        %1444 = vmatpush1.bf16.xpose.msra.mxu0 0
        %1445 = vmatprep.subr.bf16.mxu0 0
        %1446 = vmatpush1.bf16.xpose.msra.mxu0 0
        %1447 = vmatprep.subr.bf16.mxu0 0
        %1448 = vmatpush1.bf16.xpose.msra.mxu0 0
        %1449 = vmatprep.subr.bf16.mxu0 0
        %1450 = vmatpush1.bf16.xpose.msra.mxu0 0
        %1451 = vmatprep.mubr.bf16.mxu0 0
        %1452 = vmatmul.mubr.bf16.gmra.mrb[0].mxu0 %v1416
        %v1453 = vpop.f32.mrb[0].mxu0
        %v1454 = vadd.f32 0.0, %v1453
        %v1455 = vpop.f32.mrb[0].mxu0
        %v1456 = vpop.f32.mrb[0].mxu0
        %v1457 = vpop.f32.mrb[0].mxu0
        %1458 = vdwg.mxu0
        %v1459 = vmul.f32 %v1454, 0.088388346
        %v1460 = vadd.f32 %v1459, %v1415
        %vm1461 = vcmask 64512
        %v1462 = vsel %vm1461, %v1460, -inf
        %1463 = vmax.xlane.f32.xlu0 %v1462
        %v1464 = vpop.xlane.xlu0 %1463
        %v1465 = vsub.f32 %v1460, %v1464
        %v1466 = vmul.f32 %v1465, 1.442695
        %v1467 = vpow.pop %v1466
        %v1468 = vsel %vm1461, %v1467, 0.0
        %1469 = vadd.xlane.f32.xlu0 %v1468
        %v1470 = vpop.xlane.xlu0 %1469
        %v1471 = vrcp.pop %v1470
        %v1472 = vmul.f32 %v1467, %v1471
        %v1473 = vpack.c.bf16 %v1472, %v1472
        %v1475 = vsel %vm1461, %v1473, 0
        %vm1477 = vcmask 1043456
        %v1479 = vsel %vm1477, %v1418, 0
        %1481 = vmatprep.subr.bf16.mxu0 0
        %1482 = vmatpush1.bf16.msra.mxu0 %v1479
        %1483 = vmatprep.subr.bf16.mxu0 0
        %1484 = vmatpush1.bf16.msra.mxu0 0
        %1485 = vmatprep.subr.bf16.mxu0 0
        %1486 = vmatpush1.bf16.msra.mxu0 0
        %1487 = vmatprep.subr.bf16.mxu0 0
        %1488 = vmatpush1.bf16.msra.mxu0 0
        %1489 = vmatprep.subr.bf16.mxu0 0
        %1490 = vmatpush1.bf16.msra.mxu0 0
        %1491 = vmatprep.subr.bf16.mxu0 0
        %1492 = vmatpush1.bf16.msra.mxu0 0
        %1493 = vmatprep.subr.bf16.mxu0 0
        %1494 = vmatpush1.bf16.msra.mxu0 0
        %1495 = vmatprep.subr.bf16.mxu0 0
        %1496 = vmatpush1.bf16.msra.mxu0 0
        %1497 = vmatprep.subr.bf16.mxu0 0
        %1498 = vmatpush1.bf16.msra.mxu0 0
        %1499 = vmatprep.subr.bf16.mxu0 0
        %1500 = vmatpush1.bf16.msra.mxu0 0
        %1501 = vmatprep.subr.bf16.mxu0 0
        %1502 = vmatpush1.bf16.msra.mxu0 0
        %1503 = vmatprep.subr.bf16.mxu0 0
        %1504 = vmatpush1.bf16.msra.mxu0 0
        %1505 = vmatprep.subr.bf16.mxu0 0
        %1506 = vmatpush1.bf16.msra.mxu0 0
        %1507 = vmatprep.subr.bf16.mxu0 0
        %1508 = vmatpush1.bf16.msra.mxu0 0
        %1509 = vmatprep.subr.bf16.mxu0 0
        %1510 = vmatpush1.bf16.msra.mxu0 0
        %1511 = vmatprep.subr.bf16.mxu0 0
        %1512 = vmatpush1.bf16.msra.mxu0 0
        %1513 = vmatprep.mubr.bf16.mxu0 0
        %1514 = vmatmul.mubr.bf16.gmra.mrb[0].mxu0 %v1475
        %v1515 = vpop.f32.mrb[0].mxu0
        %v1516 = vadd.f32 0.0, %v1515
        %v1517 = vpop.f32.mrb[0].mxu0
        %v1518 = vpop.f32.mrb[0].mxu0
        %v1519 = vpop.f32.mrb[0].mxu0
        %1520 = vdwg.mxu0
        %1521 = vst [vmem:[#allocation3] sm:$0xff] %v1516
        %v1522 = vpack.c.bf16 %v1392, %v1392
        %v1523 = vpack.c.bf16 %v1412, %v1412
        %v1524 = vpack.c.bf16 %v1361, %v1361
        %1525 = vmatprep.subr.bf16.mxu0 0
        %1526 = vmatpush1.bf16.xpose.msra.mxu0 %v1523
        %1527 = vmatprep.subr.bf16.mxu0 0
        %1528 = vmatpush1.bf16.xpose.msra.mxu0 0
        %1529 = vmatprep.subr.bf16.mxu0 0
        %1530 = vmatpush1.bf16.xpose.msra.mxu0 0
        %1531 = vmatprep.subr.bf16.mxu0 0
        %1532 = vmatpush1.bf16.xpose.msra.mxu0 0
        %1533 = vmatprep.subr.bf16.mxu0 0
        %1534 = vmatpush1.bf16.xpose.msra.mxu0 0
        %1535 = vmatprep.subr.bf16.mxu0 0
        %1536 = vmatpush1.bf16.xpose.msra.mxu0 0
        %1537 = vmatprep.subr.bf16.mxu0 0
        %1538 = vmatpush1.bf16.xpose.msra.mxu0 0
        %1539 = vmatprep.subr.bf16.mxu0 0
        %1540 = vmatpush1.bf16.xpose.msra.mxu0 0
        %1541 = vmatprep.subr.bf16.mxu0 0
        %1542 = vmatpush1.bf16.xpose.msra.mxu0 0
        %1543 = vmatprep.subr.bf16.mxu0 0
        %1544 = vmatpush1.bf16.xpose.msra.mxu0 0
        %1545 = vmatprep.subr.bf16.mxu0 0
        %1546 = vmatpush1.bf16.xpose.msra.mxu0 0
        %1547 = vmatprep.subr.bf16.mxu0 0
        %1548 = vmatpush1.bf16.xpose.msra.mxu0 0
        %1549 = vmatprep.subr.bf16.mxu0 0
        %1550 = vmatpush1.bf16.xpose.msra.mxu0 0
        %1551 = vmatprep.subr.bf16.mxu0 0
        %1552 = vmatpush1.bf16.xpose.msra.mxu0 0
        %1553 = vmatprep.subr.bf16.mxu0 0
        %1554 = vmatpush1.bf16.xpose.msra.mxu0 0
        %1555 = vmatprep.subr.bf16.mxu0 0
        %1556 = vmatpush1.bf16.xpose.msra.mxu0 0
        %1557 = vmatprep.mubr.bf16.mxu0 0
        %1558 = vmatmul.mubr.bf16.gmra.mrb[0].mxu0 %v1522
        %v1559 = vpop.f32.mrb[0].mxu0
        %v1560 = vadd.f32 0.0, %v1559
        %v1561 = vpop.f32.mrb[0].mxu0
        %v1562 = vpop.f32.mrb[0].mxu0
        %v1563 = vpop.f32.mrb[0].mxu0
        %1564 = vdwg.mxu0
        %v1565 = vmul.f32 %v1560, 0.088388346
        %v1566 = vadd.f32 %v1565, %v1415
        %v1567 = vsel %vm1461, %v1566, -inf
        %1568 = vmax.xlane.f32.xlu0 %v1567
        %v1569 = vpop.xlane.xlu0 %1568
        %v1570 = vsub.f32 %v1566, %v1569
        %v1571 = vmul.f32 %v1570, 1.442695
        %v1572 = vpow.pop %v1571
        %v1573 = vsel %vm1461, %v1572, 0.0
        %1574 = vadd.xlane.f32.xlu0 %v1573
        %v1575 = vpop.xlane.xlu0 %1574
        %v1576 = vrcp.pop %v1575
        %v1577 = vmul.f32 %v1572, %v1576
        %v1578 = vpack.c.bf16 %v1577, %v1577
        %v1580 = vsel %vm1461, %v1578, 0
        %v1583 = vsel %vm1477, %v1524, 0
        %1585 = vmatprep.subr.bf16.mxu0 0
        %1586 = vmatpush1.bf16.msra.mxu0 %v1583
        %1587 = vmatprep.subr.bf16.mxu0 0
        %1588 = vmatpush1.bf16.msra.mxu0 0
        %1589 = vmatprep.subr.bf16.mxu0 0
        %1590 = vmatpush1.bf16.msra.mxu0 0
        %1591 = vmatprep.subr.bf16.mxu0 0
        %1592 = vmatpush1.bf16.msra.mxu0 0
        %1593 = vmatprep.subr.bf16.mxu0 0
        %1594 = vmatpush1.bf16.msra.mxu0 0
        %1595 = vmatprep.subr.bf16.mxu0 0
        %1596 = vmatpush1.bf16.msra.mxu0 0
        %1597 = vmatprep.subr.bf16.mxu0 0
        %1598 = vmatpush1.bf16.msra.mxu0 0
        %1599 = vmatprep.subr.bf16.mxu0 0
        %1600 = vmatpush1.bf16.msra.mxu0 0
        %1601 = vmatprep.subr.bf16.mxu0 0
        %1602 = vmatpush1.bf16.msra.mxu0 0
        %1603 = vmatprep.subr.bf16.mxu0 0
        %1604 = vmatpush1.bf16.msra.mxu0 0
        %1605 = vmatprep.subr.bf16.mxu0 0
        %1606 = vmatpush1.bf16.msra.mxu0 0
        %1607 = vmatprep.subr.bf16.mxu0 0
        %1608 = vmatpush1.bf16.msra.mxu0 0
        %1609 = vmatprep.subr.bf16.mxu0 0
        %1610 = vmatpush1.bf16.msra.mxu0 0
        %1611 = vmatprep.subr.bf16.mxu0 0
        %1612 = vmatpush1.bf16.msra.mxu0 0
        %1613 = vmatprep.subr.bf16.mxu0 0
        %1614 = vmatpush1.bf16.msra.mxu0 0
        %1615 = vmatprep.subr.bf16.mxu0 0
        %1616 = vmatpush1.bf16.msra.mxu0 0
        %1617 = vmatprep.mubr.bf16.mxu0 0
        %1618 = vmatmul.mubr.bf16.gmra.mrb[0].mxu0 %v1580
        %v1619 = vpop.f32.mrb[0].mxu0
        %v1620 = vadd.f32 0.0, %v1619
        %v1621 = vpop.f32.mrb[0].mxu0
        %v1622 = vpop.f32.mrb[0].mxu0
        %v1623 = vpop.f32.mrb[0].mxu0
        %1624 = vdwg.mxu0
        %1625 = vst [vmem:[#allocation3 + $0x8] sm:$0xff] %v1620
        %s1626 = scalar_lea.vmem %s1, 8
        %v1627 = vld [vmem:[%s1626] sm:$0xff]
        %v1628 = vpack.c.bf16 %v1393, %v1393
        %v1629 = vpack.c.bf16 %v1413, %v1413
        %v1630 = vpack.c.bf16 %v1363, %v1363
        %1631 = vmatprep.subr.bf16.mxu0 0
        %1632 = vmatpush1.bf16.xpose.msra.mxu0 %v1629
        %1633 = vmatprep.subr.bf16.mxu0 0
        %1634 = vmatpush1.bf16.xpose.msra.mxu0 0
        %1635 = vmatprep.subr.bf16.mxu0 0
        %1636 = vmatpush1.bf16.xpose.msra.mxu0 0
        %1637 = vmatprep.subr.bf16.mxu0 0
        %1638 = vmatpush1.bf16.xpose.msra.mxu0 0
        %1639 = vmatprep.subr.bf16.mxu0 0
        %1640 = vmatpush1.bf16.xpose.msra.mxu0 0
        %1641 = vmatprep.subr.bf16.mxu0 0
        %1642 = vmatpush1.bf16.xpose.msra.mxu0 0
        %1643 = vmatprep.subr.bf16.mxu0 0
        %1644 = vmatpush1.bf16.xpose.msra.mxu0 0
        %1645 = vmatprep.subr.bf16.mxu0 0
        %1646 = vmatpush1.bf16.xpose.msra.mxu0 0
        %1647 = vmatprep.subr.bf16.mxu0 0
        %1648 = vmatpush1.bf16.xpose.msra.mxu0 0
        %1649 = vmatprep.subr.bf16.mxu0 0
        %1650 = vmatpush1.bf16.xpose.msra.mxu0 0
        %1651 = vmatprep.subr.bf16.mxu0 0
        %1652 = vmatpush1.bf16.xpose.msra.mxu0 0
        %1653 = vmatprep.subr.bf16.mxu0 0
        %1654 = vmatpush1.bf16.xpose.msra.mxu0 0
        %1655 = vmatprep.subr.bf16.mxu0 0
        %1656 = vmatpush1.bf16.xpose.msra.mxu0 0
        %1657 = vmatprep.subr.bf16.mxu0 0
        %1658 = vmatpush1.bf16.xpose.msra.mxu0 0
        %1659 = vmatprep.subr.bf16.mxu0 0
        %1660 = vmatpush1.bf16.xpose.msra.mxu0 0
        %1661 = vmatprep.subr.bf16.mxu0 0
        %1662 = vmatpush1.bf16.xpose.msra.mxu0 0
        %1663 = vmatprep.mubr.bf16.mxu0 0
        %1664 = vmatmul.mubr.bf16.gmra.mrb[0].mxu0 %v1628
        %v1665 = vpop.f32.mrb[0].mxu0
        %v1666 = vadd.f32 0.0, %v1665
        %v1667 = vpop.f32.mrb[0].mxu0
        %v1668 = vpop.f32.mrb[0].mxu0
        %v1669 = vpop.f32.mrb[0].mxu0
        %1670 = vdwg.mxu0
        %v1671 = vmul.f32 %v1666, 0.088388346
        %v1672 = vadd.f32 %v1671, %v1627
        %v1673 = vsel %vm1461, %v1672, -inf
        %1674 = vmax.xlane.f32.xlu0 %v1673
        %v1675 = vpop.xlane.xlu0 %1674
        %v1676 = vsub.f32 %v1672, %v1675
        %v1677 = vmul.f32 %v1676, 1.442695
        %v1678 = vpow.pop %v1677
        %v1679 = vsel %vm1461, %v1678, 0.0
        %1680 = vadd.xlane.f32.xlu0 %v1679
        %v1681 = vpop.xlane.xlu0 %1680
        %v1682 = vrcp.pop %v1681
        %v1683 = vmul.f32 %v1678, %v1682
        %v1684 = vpack.c.bf16 %v1683, %v1683
        %v1686 = vsel %vm1461, %v1684, 0
        %v1689 = vsel %vm1477, %v1630, 0
        %1691 = vmatprep.subr.bf16.mxu0 0
        %1692 = vmatpush1.bf16.msra.mxu0 %v1689
        %1693 = vmatprep.subr.bf16.mxu0 0
        %1694 = vmatpush1.bf16.msra.mxu0 0
        %1695 = vmatprep.subr.bf16.mxu0 0
        %1696 = vmatpush1.bf16.msra.mxu0 0
        %1697 = vmatprep.subr.bf16.mxu0 0
        %1698 = vmatpush1.bf16.msra.mxu0 0
        %1699 = vmatprep.subr.bf16.mxu0 0
        %1700 = vmatpush1.bf16.msra.mxu0 0
        %1701 = vmatprep.subr.bf16.mxu0 0
        %1702 = vmatpush1.bf16.msra.mxu0 0
        %1703 = vmatprep.subr.bf16.mxu0 0
        %1704 = vmatpush1.bf16.msra.mxu0 0
        %1705 = vmatprep.subr.bf16.mxu0 0
        %1706 = vmatpush1.bf16.msra.mxu0 0
        %1707 = vmatprep.subr.bf16.mxu0 0
        %1708 = vmatpush1.bf16.msra.mxu0 0
        %1709 = vmatprep.subr.bf16.mxu0 0
        %1710 = vmatpush1.bf16.msra.mxu0 0
        %1711 = vmatprep.subr.bf16.mxu0 0
        %1712 = vmatpush1.bf16.msra.mxu0 0
        %1713 = vmatprep.subr.bf16.mxu0 0
        %1714 = vmatpush1.bf16.msra.mxu0 0
        %1715 = vmatprep.subr.bf16.mxu0 0
        %1716 = vmatpush1.bf16.msra.mxu0 0
        %1717 = vmatprep.subr.bf16.mxu0 0
        %1718 = vmatpush1.bf16.msra.mxu0 0
        %1719 = vmatprep.subr.bf16.mxu0 0
        %1720 = vmatpush1.bf16.msra.mxu0 0
        %1721 = vmatprep.subr.bf16.mxu0 0
        %1722 = vmatpush1.bf16.msra.mxu0 0
        %1723 = vmatprep.mubr.bf16.mxu0 0
        %1724 = vmatmul.mubr.bf16.gmra.mrb[0].mxu0 %v1686
        %v1725 = vpop.f32.mrb[0].mxu0
        %v1726 = vadd.f32 0.0, %v1725
        %v1727 = vpop.f32.mrb[0].mxu0
        %v1728 = vpop.f32.mrb[0].mxu0
        %v1729 = vpop.f32.mrb[0].mxu0
        %1730 = vdwg.mxu0
        %1731 = vst [vmem:[#allocation3 + $0x10] sm:$0xff] %v1726
        %v1732 = vpack.c.bf16 %v1394, %v1394
        %v1733 = vpack.c.bf16 %v1414, %v1414
        %v1734 = vpack.c.bf16 %v1365, %v1365
        %1735 = vmatprep.subr.bf16.mxu0 0
        %1736 = vmatpush1.bf16.xpose.msra.mxu0 %v1733
        %1737 = vmatprep.subr.bf16.mxu0 0
        %1738 = vmatpush1.bf16.xpose.msra.mxu0 0
        %1739 = vmatprep.subr.bf16.mxu0 0
        %1740 = vmatpush1.bf16.xpose.msra.mxu0 0
        %1741 = vmatprep.subr.bf16.mxu0 0
        %1742 = vmatpush1.bf16.xpose.msra.mxu0 0
        %1743 = vmatprep.subr.bf16.mxu0 0
        %1744 = vmatpush1.bf16.xpose.msra.mxu0 0
        %1745 = vmatprep.subr.bf16.mxu0 0
        %1746 = vmatpush1.bf16.xpose.msra.mxu0 0
        %1747 = vmatprep.subr.bf16.mxu0 0
        %1748 = vmatpush1.bf16.xpose.msra.mxu0 0
        %1749 = vmatprep.subr.bf16.mxu0 0
        %1750 = vmatpush1.bf16.xpose.msra.mxu0 0
        %1751 = vmatprep.subr.bf16.mxu0 0
        %1752 = vmatpush1.bf16.xpose.msra.mxu0 0
        %1753 = vmatprep.subr.bf16.mxu0 0
        %1754 = vmatpush1.bf16.xpose.msra.mxu0 0
        %1755 = vmatprep.subr.bf16.mxu0 0
        %1756 = vmatpush1.bf16.xpose.msra.mxu0 0
        %1757 = vmatprep.subr.bf16.mxu0 0
        %1758 = vmatpush1.bf16.xpose.msra.mxu0 0
        %1759 = vmatprep.subr.bf16.mxu0 0
        %1760 = vmatpush1.bf16.xpose.msra.mxu0 0
        %1761 = vmatprep.subr.bf16.mxu0 0
        %1762 = vmatpush1.bf16.xpose.msra.mxu0 0
        %1763 = vmatprep.subr.bf16.mxu0 0
        %1764 = vmatpush1.bf16.xpose.msra.mxu0 0
        %1765 = vmatprep.subr.bf16.mxu0 0
        %1766 = vmatpush1.bf16.xpose.msra.mxu0 0
        %1767 = vmatprep.mubr.bf16.mxu0 0
        %1768 = vmatmul.mubr.bf16.gmra.mrb[0].mxu0 %v1732
        %v1769 = vpop.f32.mrb[0].mxu0
        %v1770 = vadd.f32 0.0, %v1769
        %v1771 = vpop.f32.mrb[0].mxu0
        %v1772 = vpop.f32.mrb[0].mxu0
        %v1773 = vpop.f32.mrb[0].mxu0
        %1774 = vdwg.mxu0
        %v1775 = vmul.f32 %v1770, 0.088388346
        %v1776 = vadd.f32 %v1775, %v1627
        %v1777 = vsel %vm1461, %v1776, -inf
        %1778 = vmax.xlane.f32.xlu0 %v1777
        %v1779 = vpop.xlane.xlu0 %1778
        %v1780 = vsub.f32 %v1776, %v1779
        %v1781 = vmul.f32 %v1780, 1.442695
        %v1782 = vpow.pop %v1781
        %v1783 = vsel %vm1461, %v1782, 0.0
        %1784 = vadd.xlane.f32.xlu0 %v1783
        %v1785 = vpop.xlane.xlu0 %1784
        %v1786 = vrcp.pop %v1785
        %v1787 = vmul.f32 %v1782, %v1786
        %v1788 = vpack.c.bf16 %v1787, %v1787
        %v1790 = vsel %vm1461, %v1788, 0
        %v1793 = vsel %vm1477, %v1734, 0
        %1795 = vmatprep.subr.bf16.mxu0 0
        %1796 = vmatpush1.bf16.msra.mxu0 %v1793
        %1797 = vmatprep.subr.bf16.mxu0 0
        %1798 = vmatpush1.bf16.msra.mxu0 0
        %1799 = vmatprep.subr.bf16.mxu0 0
        %1800 = vmatpush1.bf16.msra.mxu0 0
        %1801 = vmatprep.subr.bf16.mxu0 0
        %1802 = vmatpush1.bf16.msra.mxu0 0
        %1803 = vmatprep.subr.bf16.mxu0 0
        %1804 = vmatpush1.bf16.msra.mxu0 0
        %1805 = vmatprep.subr.bf16.mxu0 0
        %1806 = vmatpush1.bf16.msra.mxu0 0
        %1807 = vmatprep.subr.bf16.mxu0 0
        %1808 = vmatpush1.bf16.msra.mxu0 0
        %1809 = vmatprep.subr.bf16.mxu0 0
        %1810 = vmatpush1.bf16.msra.mxu0 0
        %1811 = vmatprep.subr.bf16.mxu0 0
        %1812 = vmatpush1.bf16.msra.mxu0 0
        %1813 = vmatprep.subr.bf16.mxu0 0
        %1814 = vmatpush1.bf16.msra.mxu0 0
        %1815 = vmatprep.subr.bf16.mxu0 0
        %1816 = vmatpush1.bf16.msra.mxu0 0
        %1817 = vmatprep.subr.bf16.mxu0 0
        %1818 = vmatpush1.bf16.msra.mxu0 0
        %1819 = vmatprep.subr.bf16.mxu0 0
        %1820 = vmatpush1.bf16.msra.mxu0 0
        %1821 = vmatprep.subr.bf16.mxu0 0
        %1822 = vmatpush1.bf16.msra.mxu0 0
        %1823 = vmatprep.subr.bf16.mxu0 0
        %1824 = vmatpush1.bf16.msra.mxu0 0
        %1825 = vmatprep.subr.bf16.mxu0 0
        %1826 = vmatpush1.bf16.msra.mxu0 0
        %1827 = vmatprep.mubr.bf16.mxu0 0
        %1828 = vmatmul.mubr.bf16.gmra.mrb[0].mxu0 %v1790
        %v1829 = vpop.f32.mrb[0].mxu0
        %v1830 = vadd.f32 0.0, %v1829
        %v1831 = vpop.f32.mrb[0].mxu0
        %v1832 = vpop.f32.mrb[0].mxu0
        %v1833 = vpop.f32.mrb[0].mxu0
        %1834 = vdwg.mxu0
        %1835 = vst [vmem:[#allocation3 + $0x18] sm:$0xff] %v1830
        %v1836 = vld [vmem:[#allocation3] sm:$0xff]
        %v1837 = vld [vmem:[#allocation3 + $0x8] sm:$0xff]
        %v1838 = vld [vmem:[#allocation3 + $0x10] sm:$0xff]
        %v1839 = vld [vmem:[#allocation3 + $0x18] sm:$0xff]
        %v1840 = vpack.c.bf16 %v1838, %v1836
        %v1841 = vpack.c.bf16 %v1839, %v1837
        %v1842 = vld [vmem:[%s517] sm:$0xff]
        %v1843 = vld [vmem:[%s517 + $0x8] sm:$0xff]
        %v1844 = vld [vmem:[%s517 + $0x10] sm:$0xff]
        %v1845 = vld [vmem:[%s517 + $0x18] sm:$0xff]
        %v1846 = vld [vmem:[%s517 + $0x20] sm:$0xff]
        %v1847 = vld [vmem:[%s517 + $0x28] sm:$0xff]
        %v1848 = vld [vmem:[%s517 + $0x30] sm:$0xff]
        %v1849 = vld [vmem:[%s517 + $0x38] sm:$0xff]
        %v1850 = vld [vmem:[%s517 + $0x40] sm:$0xff]
        %v1851 = vld [vmem:[%s517 + $0x48] sm:$0xff]
        %v1852 = vld [vmem:[%s517 + $0x50] sm:$0xff]
        %v1853 = vld [vmem:[%s517 + $0x58] sm:$0xff]
        %v1854 = vld [vmem:[%s517 + $0x60] sm:$0xff]
        %v1855 = vld [vmem:[%s517 + $0x68] sm:$0xff]
        %v1856 = vld [vmem:[%s517 + $0x70] sm:$0xff]
        %v1857 = vld [vmem:[%s517 + $0x78] sm:$0xff]
        %v1858 = vld [vmem:[%s517 + $0x80] sm:$0xff]
        %v1859 = vld [vmem:[%s517 + $0x88] sm:$0xff]
        %v1860 = vld [vmem:[%s517 + $0x90] sm:$0xff]
        %v1861 = vld [vmem:[%s517 + $0x98] sm:$0xff]
        %v1862 = vld [vmem:[%s517 + $0xa0] sm:$0xff]
        %v1863 = vld [vmem:[%s517 + $0xa8] sm:$0xff]
        %v1864 = vld [vmem:[%s517 + $0xb0] sm:$0xff]
        %v1865 = vld [vmem:[%s517 + $0xb8] sm:$0xff]
        %v1866 = vld [vmem:[%s517 + $0xc0] sm:$0xff]
        %v1867 = vld [vmem:[%s517 + $0xc8] sm:$0xff]
        %v1868 = vld [vmem:[%s517 + $0xd0] sm:$0xff]
        %v1869 = vld [vmem:[%s517 + $0xd8] sm:$0xff]
        %v1870 = vld [vmem:[%s517 + $0xe0] sm:$0xff]
        %v1871 = vld [vmem:[%s517 + $0xe8] sm:$0xff]
        %v1872 = vld [vmem:[%s517 + $0xf0] sm:$0xff]
        %v1873 = vld [vmem:[%s517 + $0xf8] sm:$0xff]
        %v1906 = vunpack.c.l.b16 %v1842
        %v1907 = vunpack.c.h.b16 %v1842
        %v1908 = vunpack.c.l.b16 %v1843
        %v1909 = vunpack.c.h.b16 %v1843
        %v1910 = vunpack.c.l.b16 %v1844
        %v1911 = vunpack.c.h.b16 %v1844
        %v1912 = vunpack.c.l.b16 %v1845
        %v1913 = vunpack.c.h.b16 %v1845
        %v1914 = vunpack.c.l.b16 %v1846
        %v1915 = vunpack.c.h.b16 %v1846
        %v1916 = vunpack.c.l.b16 %v1847
        %v1917 = vunpack.c.h.b16 %v1847
        %v1918 = vunpack.c.l.b16 %v1848
        %v1919 = vunpack.c.h.b16 %v1848
        %v1920 = vunpack.c.l.b16 %v1849
        %v1921 = vunpack.c.h.b16 %v1849
        %v1922 = vunpack.c.l.b16 %v1850
        %v1923 = vunpack.c.h.b16 %v1850
        %v1924 = vunpack.c.l.b16 %v1851
        %v1925 = vunpack.c.h.b16 %v1851
        %v1926 = vunpack.c.l.b16 %v1852
        %v1927 = vunpack.c.h.b16 %v1852
        %v1928 = vunpack.c.l.b16 %v1853
        %v1929 = vunpack.c.h.b16 %v1853
        %v1930 = vunpack.c.l.b16 %v1854
        %v1931 = vunpack.c.h.b16 %v1854
        %v1932 = vunpack.c.l.b16 %v1855
        %v1933 = vunpack.c.h.b16 %v1855
        %v1934 = vunpack.c.l.b16 %v1856
        %v1935 = vunpack.c.h.b16 %v1856
        %v1936 = vunpack.c.l.b16 %v1857
        %v1937 = vunpack.c.h.b16 %v1857
        %v1938 = vunpack.c.l.b16 %v1858
        %v1939 = vunpack.c.h.b16 %v1858
        %v1940 = vunpack.c.l.b16 %v1859
        %v1941 = vunpack.c.h.b16 %v1859
        %v1942 = vunpack.c.l.b16 %v1860
        %v1943 = vunpack.c.h.b16 %v1860
        %v1944 = vunpack.c.l.b16 %v1861
        %v1945 = vunpack.c.h.b16 %v1861
        %v1946 = vunpack.c.l.b16 %v1862
        %v1947 = vunpack.c.h.b16 %v1862
        %v1948 = vunpack.c.l.b16 %v1863
        %v1949 = vunpack.c.h.b16 %v1863
        %v1950 = vunpack.c.l.b16 %v1864
        %v1951 = vunpack.c.h.b16 %v1864
        %v1952 = vunpack.c.l.b16 %v1865
        %v1953 = vunpack.c.h.b16 %v1865
        %v1954 = vunpack.c.l.b16 %v1866
        %v1955 = vunpack.c.h.b16 %v1866
        %v1956 = vunpack.c.l.b16 %v1867
        %v1957 = vunpack.c.h.b16 %v1867
        %v1958 = vunpack.c.l.b16 %v1868
        %v1959 = vunpack.c.h.b16 %v1868
        %v1960 = vunpack.c.l.b16 %v1869
        %v1961 = vunpack.c.h.b16 %v1869
        %v1962 = vunpack.c.l.b16 %v1870
        %v1963 = vunpack.c.h.b16 %v1870
        %v1964 = vunpack.c.l.b16 %v1871
        %v1965 = vunpack.c.h.b16 %v1871
        %v1966 = vunpack.c.l.b16 %v1872
        %v1967 = vunpack.c.h.b16 %v1872
        %v1968 = vunpack.c.l.b16 %v1873
        %v1969 = vunpack.c.h.b16 %v1873
        %v1970 = vpack.c.b16 %v1908, %v1906
        %v1971 = vpack.c.b16 %v1909, %v1907
        %v1972 = vpack.c.b16 %v1912, %v1910
        %v1973 = vpack.c.b16 %v1913, %v1911
        %v1974 = vpack.c.b16 %v1916, %v1914
        %v1975 = vpack.c.b16 %v1917, %v1915
        %v1976 = vpack.c.b16 %v1920, %v1918
        %v1977 = vpack.c.b16 %v1921, %v1919
        %v1978 = vpack.c.b16 %v1924, %v1922
        %v1979 = vpack.c.b16 %v1925, %v1923
        %v1980 = vpack.c.b16 %v1928, %v1926
        %v1981 = vpack.c.b16 %v1929, %v1927
        %v1982 = vpack.c.b16 %v1932, %v1930
        %v1983 = vpack.c.b16 %v1933, %v1931
        %v1984 = vpack.c.b16 %v1936, %v1934
        %v1985 = vpack.c.b16 %v1937, %v1935
        %v1986 = vpack.c.b16 %v1940, %v1938
        %v1987 = vpack.c.b16 %v1941, %v1939
        %v1988 = vpack.c.b16 %v1944, %v1942
        %v1989 = vpack.c.b16 %v1945, %v1943
        %v1990 = vpack.c.b16 %v1948, %v1946
        %v1991 = vpack.c.b16 %v1949, %v1947
        %v1992 = vpack.c.b16 %v1952, %v1950
        %v1993 = vpack.c.b16 %v1953, %v1951
        %v1994 = vpack.c.b16 %v1956, %v1954
        %v1995 = vpack.c.b16 %v1957, %v1955
        %v1996 = vpack.c.b16 %v1960, %v1958
        %v1997 = vpack.c.b16 %v1961, %v1959
        %v1998 = vpack.c.b16 %v1964, %v1962
        %v1999 = vpack.c.b16 %v1965, %v1963
        %v2000 = vpack.c.b16 %v1968, %v1966
        %v2001 = vpack.c.b16 %v1969, %v1967
        %2034 = vmatprep.subr.bf16.mxu0 %v1971
        %2035 = vmatpush1.bf16.msra.mxu0 %v1970
        %2036 = vmatprep.subr.bf16.mxu0 %v1973
        %2037 = vmatpush1.bf16.msra.mxu0 %v1972
        %2038 = vmatprep.subr.bf16.mxu0 %v1975
        %2039 = vmatpush1.bf16.msra.mxu0 %v1974
        %2040 = vmatprep.subr.bf16.mxu0 %v1977
        %2041 = vmatpush1.bf16.msra.mxu0 %v1976
        %2042 = vmatprep.subr.bf16.mxu0 %v1979
        %2043 = vmatpush1.bf16.msra.mxu0 %v1978
        %2044 = vmatprep.subr.bf16.mxu0 %v1981
        %2045 = vmatpush1.bf16.msra.mxu0 %v1980
        %2046 = vmatprep.subr.bf16.mxu0 %v1983
        %2047 = vmatpush1.bf16.msra.mxu0 %v1982
        %2048 = vmatprep.subr.bf16.mxu0 %v1985
        %2049 = vmatpush1.bf16.msra.mxu0 %v1984
        %2050 = vmatprep.subr.bf16.mxu0 %v1987
        %2051 = vmatpush1.bf16.msra.mxu0 %v1986
        %2052 = vmatprep.subr.bf16.mxu0 %v1989
        %2053 = vmatpush1.bf16.msra.mxu0 %v1988
        %2054 = vmatprep.subr.bf16.mxu0 %v1991
        %2055 = vmatpush1.bf16.msra.mxu0 %v1990
        %2056 = vmatprep.subr.bf16.mxu0 %v1993
        %2057 = vmatpush1.bf16.msra.mxu0 %v1992
        %2058 = vmatprep.subr.bf16.mxu0 %v1995
        %2059 = vmatpush1.bf16.msra.mxu0 %v1994
        %2060 = vmatprep.subr.bf16.mxu0 %v1997
        %2061 = vmatpush1.bf16.msra.mxu0 %v1996
        %2062 = vmatprep.subr.bf16.mxu0 %v1999
        %2063 = vmatpush1.bf16.msra.mxu0 %v1998
        %2064 = vmatprep.subr.bf16.mxu0 %v2001
        %2065 = vmatpush1.bf16.msra.mxu0 %v2000
        %2066 = vmatprep.mubr.bf16.mxu0 %v1841
        %2067 = vmatmul.mubr.bf16.gmra.mrb[0].mxu0 %v1840
        %v2068 = vpop.f32.mrb[0].mxu0
        %v2069 = vadd.f32 0.0, %v2068
        %v2070 = vpop.f32.mrb[0].mxu0
        %v2071 = vadd.f32 0.0, %v2070
        %v2072 = vpop.f32.mrb[0].mxu0
        %v2073 = vadd.f32 0.0, %v2072
        %v2074 = vpop.f32.mrb[0].mxu0
        %v2075 = vadd.f32 0.0, %v2074
        %2076 = vdwg.mxu0
        %v2077 = vadd.f32 %v619, %v2069
        %v2078 = vadd.f32 %v620, %v2071
        %v2079 = vadd.f32 %v621, %v2073
        %v2080 = vadd.f32 %v622, %v2075
        %v2081 = vld [vmem:[%s605] sm:$0x3]
        %v2082 = vmul.f32 %v2077, %v2077
        %v2083 = vmul.f32 %v2078, %v2078
        %v2084 = vmul.f32 %v2079, %v2079
        %v2085 = vmul.f32 %v2080, %v2080
        %v2086 = vadd.f32 %v2082, %v2083
        %2087 = vadd.xlane.f32.xlu0 %v2086
        %v2088 = vpop.xlane.xlu0 %2087
        %v2089 = vadd.f32 %v2084, %v2085
        %2090 = vadd.xlane.f32.xlu0 %v2089
        %v2091 = vpop.xlane.xlu0 %2090
        %v2092 = vmul.f32 %v2088, %v634
        %v2093 = vmul.f32 %v2091, %v634
        %v2094 = vadd.f32 %v2092, 1e-06
        %v2095 = vadd.f32 %v2093, 1e-06
        %v2096 = vrsqrt.pop %v2094
        %v2097 = vrsqrt.pop %v2095
        %v2098 = vmul.f32 %v2077, %v2096
        %v2099 = vmul.f32 %v2078, %v2096
        %v2100 = vmul.f32 %v2079, %v2097
        %v2101 = vmul.f32 %v2080, %v2097
        %v2103 = vlaneseq
        %v2104 = vshrl.u32 %v2103, 7
        %v2105 = vsub.s32 0, %v2104
        %v2106 = vrot.slane %v2081, %v2105
        %v2107 = vlaneseq
        %v2108 = vshrl.u32 %v2107, 7
        %v2109 = vsub.s32 1, %v2108
        %v2110 = vrot.slane %v2081, %v2109
        %v2113 = vmul.f32 %v2098, %v2106
        %v2114 = vmul.f32 %v2099, %v2110
        %v2115 = vmul.f32 %v2100, %v2106
        %v2116 = vmul.f32 %v2101, %v2110
        %v2117 = vpack.c.bf16 %v2115, %v2113
        %v2118 = vpack.c.bf16 %v2116, %v2114
        %v2119 = vld [vmem:[%s526] sm:$0xff]
        %v2120 = vld [vmem:[%s526 + $0x8] sm:$0xff]
        %v2121 = vld [vmem:[%s526 + $0x10] sm:$0xff]
        %v2122 = vld [vmem:[%s526 + $0x18] sm:$0xff]
        %v2123 = vld [vmem:[%s526 + $0x20] sm:$0xff]
        %v2124 = vld [vmem:[%s526 + $0x28] sm:$0xff]
        %v2125 = vld [vmem:[%s526 + $0x30] sm:$0xff]
        %v2126 = vld [vmem:[%s526 + $0x38] sm:$0xff]
        %v2127 = vld [vmem:[%s526 + $0x40] sm:$0xff]
        %v2128 = vld [vmem:[%s526 + $0x48] sm:$0xff]
        %v2129 = vld [vmem:[%s526 + $0x50] sm:$0xff]
        %v2130 = vld [vmem:[%s526 + $0x58] sm:$0xff]
        %v2131 = vld [vmem:[%s526 + $0x60] sm:$0xff]
        %v2132 = vld [vmem:[%s526 + $0x68] sm:$0xff]
        %v2133 = vld [vmem:[%s526 + $0x70] sm:$0xff]
        %v2134 = vld [vmem:[%s526 + $0x78] sm:$0xff]
        %v2135 = vld [vmem:[%s526 + $0x80] sm:$0xff]
        %v2136 = vld [vmem:[%s526 + $0x88] sm:$0xff]
        %v2137 = vld [vmem:[%s526 + $0x90] sm:$0xff]
        %v2138 = vld [vmem:[%s526 + $0x98] sm:$0xff]
        %v2139 = vld [vmem:[%s526 + $0xa0] sm:$0xff]
        %v2140 = vld [vmem:[%s526 + $0xa8] sm:$0xff]
        %v2141 = vld [vmem:[%s526 + $0xb0] sm:$0xff]
        %v2142 = vld [vmem:[%s526 + $0xb8] sm:$0xff]
        %v2143 = vld [vmem:[%s526 + $0xc0] sm:$0xff]
        %v2144 = vld [vmem:[%s526 + $0xc8] sm:$0xff]
        %v2145 = vld [vmem:[%s526 + $0xd0] sm:$0xff]
        %v2146 = vld [vmem:[%s526 + $0xd8] sm:$0xff]
        %v2147 = vld [vmem:[%s526 + $0xe0] sm:$0xff]
        %v2148 = vld [vmem:[%s526 + $0xe8] sm:$0xff]
        %v2149 = vld [vmem:[%s526 + $0xf0] sm:$0xff]
        %v2150 = vld [vmem:[%s526 + $0xf8] sm:$0xff]
        %v2151 = vld [vmem:[%s526 + $0x100] sm:$0xff]
        %v2152 = vld [vmem:[%s526 + $0x108] sm:$0xff]
        %v2153 = vld [vmem:[%s526 + $0x110] sm:$0xff]
        %v2154 = vld [vmem:[%s526 + $0x118] sm:$0xff]
        %v2155 = vld [vmem:[%s526 + $0x120] sm:$0xff]
        %v2156 = vld [vmem:[%s526 + $0x128] sm:$0xff]
        %v2157 = vld [vmem:[%s526 + $0x130] sm:$0xff]
        %v2158 = vld [vmem:[%s526 + $0x138] sm:$0xff]
        %v2159 = vld [vmem:[%s526 + $0x140] sm:$0xff]
        %v2160 = vld [vmem:[%s526 + $0x148] sm:$0xff]
        %v2161 = vld [vmem:[%s526 + $0x150] sm:$0xff]
        %v2162 = vld [vmem:[%s526 + $0x158] sm:$0xff]
        %v2163 = vld [vmem:[%s526 + $0x160] sm:$0xff]
        %v2164 = vld [vmem:[%s526 + $0x168] sm:$0xff]
        %v2165 = vld [vmem:[%s526 + $0x170] sm:$0xff]
        %v2166 = vld [vmem:[%s526 + $0x178] sm:$0xff]
        %v2167 = vld [vmem:[%s526 + $0x180] sm:$0xff]
        %v2168 = vld [vmem:[%s526 + $0x188] sm:$0xff]
        %v2169 = vld [vmem:[%s526 + $0x190] sm:$0xff]
        %v2170 = vld [vmem:[%s526 + $0x198] sm:$0xff]
        %v2171 = vld [vmem:[%s526 + $0x1a0] sm:$0xff]
        %v2172 = vld [vmem:[%s526 + $0x1a8] sm:$0xff]
        %v2173 = vld [vmem:[%s526 + $0x1b0] sm:$0xff]
        %v2174 = vld [vmem:[%s526 + $0x1b8] sm:$0xff]
        %v2175 = vld [vmem:[%s526 + $0x1c0] sm:$0xff]
        %v2176 = vld [vmem:[%s526 + $0x1c8] sm:$0xff]
        %v2177 = vld [vmem:[%s526 + $0x1d0] sm:$0xff]
        %v2178 = vld [vmem:[%s526 + $0x1d8] sm:$0xff]
        %v2179 = vld [vmem:[%s526 + $0x1e0] sm:$0xff]
        %v2180 = vld [vmem:[%s526 + $0x1e8] sm:$0xff]
        %v2181 = vld [vmem:[%s526 + $0x1f0] sm:$0xff]
        %v2182 = vld [vmem:[%s526 + $0x1f8] sm:$0xff]
        %v2183 = vld [vmem:[%s526 + $0x200] sm:$0xff]
        %v2184 = vld [vmem:[%s526 + $0x208] sm:$0xff]
        %v2185 = vld [vmem:[%s526 + $0x210] sm:$0xff]
        %v2186 = vld [vmem:[%s526 + $0x218] sm:$0xff]
        %v2187 = vld [vmem:[%s526 + $0x220] sm:$0xff]
        %v2188 = vld [vmem:[%s526 + $0x228] sm:$0xff]
        %v2189 = vld [vmem:[%s526 + $0x230] sm:$0xff]
        %v2190 = vld [vmem:[%s526 + $0x238] sm:$0xff]
        %v2191 = vld [vmem:[%s526 + $0x240] sm:$0xff]
        %v2192 = vld [vmem:[%s526 + $0x248] sm:$0xff]
        %v2193 = vld [vmem:[%s526 + $0x250] sm:$0xff]
        %v2194 = vld [vmem:[%s526 + $0x258] sm:$0xff]
        %v2195 = vld [vmem:[%s526 + $0x260] sm:$0xff]
        %v2196 = vld [vmem:[%s526 + $0x268] sm:$0xff]
        %v2197 = vld [vmem:[%s526 + $0x270] sm:$0xff]
        %v2198 = vld [vmem:[%s526 + $0x278] sm:$0xff]
        %v2199 = vld [vmem:[%s526 + $0x280] sm:$0xff]
        %v2200 = vld [vmem:[%s526 + $0x288] sm:$0xff]
        %v2201 = vld [vmem:[%s526 + $0x290] sm:$0xff]
        %v2202 = vld [vmem:[%s526 + $0x298] sm:$0xff]
        %v2203 = vld [vmem:[%s526 + $0x2a0] sm:$0xff]
        %v2204 = vld [vmem:[%s526 + $0x2a8] sm:$0xff]
        %v2205 = vld [vmem:[%s526 + $0x2b0] sm:$0xff]
        %v2206 = vld [vmem:[%s526 + $0x2b8] sm:$0xff]
        %v2207 = vld [vmem:[%s526 + $0x2c0] sm:$0xff]
        %v2208 = vld [vmem:[%s526 + $0x2c8] sm:$0xff]
        %v2209 = vld [vmem:[%s526 + $0x2d0] sm:$0xff]
        %v2210 = vld [vmem:[%s526 + $0x2d8] sm:$0xff]
        %v2211 = vld [vmem:[%s526 + $0x2e0] sm:$0xff]
        %v2212 = vld [vmem:[%s526 + $0x2e8] sm:$0xff]
        %v2213 = vld [vmem:[%s526 + $0x2f0] sm:$0xff]
        %v2214 = vld [vmem:[%s526 + $0x2f8] sm:$0xff]
        %v2215 = vld [vmem:[%s526 + $0x300] sm:$0xff]
        %v2216 = vld [vmem:[%s526 + $0x308] sm:$0xff]
        %v2217 = vld [vmem:[%s526 + $0x310] sm:$0xff]
        %v2218 = vld [vmem:[%s526 + $0x318] sm:$0xff]
        %v2219 = vld [vmem:[%s526 + $0x320] sm:$0xff]
        %v2220 = vld [vmem:[%s526 + $0x328] sm:$0xff]
        %v2221 = vld [vmem:[%s526 + $0x330] sm:$0xff]
        %v2222 = vld [vmem:[%s526 + $0x338] sm:$0xff]
        %v2223 = vld [vmem:[%s526 + $0x340] sm:$0xff]
        %v2224 = vld [vmem:[%s526 + $0x348] sm:$0xff]
        %v2225 = vld [vmem:[%s526 + $0x350] sm:$0xff]
        %v2226 = vld [vmem:[%s526 + $0x358] sm:$0xff]
        %v2227 = vld [vmem:[%s526 + $0x360] sm:$0xff]
        %v2228 = vld [vmem:[%s526 + $0x368] sm:$0xff]
        %v2229 = vld [vmem:[%s526 + $0x370] sm:$0xff]
        %v2230 = vld [vmem:[%s526 + $0x378] sm:$0xff]
        %v2231 = vld [vmem:[%s526 + $0x380] sm:$0xff]
        %v2232 = vld [vmem:[%s526 + $0x388] sm:$0xff]
        %v2233 = vld [vmem:[%s526 + $0x390] sm:$0xff]
        %v2234 = vld [vmem:[%s526 + $0x398] sm:$0xff]
        %v2235 = vld [vmem:[%s526 + $0x3a0] sm:$0xff]
        %v2236 = vld [vmem:[%s526 + $0x3a8] sm:$0xff]
        %v2237 = vld [vmem:[%s526 + $0x3b0] sm:$0xff]
        %v2238 = vld [vmem:[%s526 + $0x3b8] sm:$0xff]
        %v2239 = vld [vmem:[%s526 + $0x3c0] sm:$0xff]
        %v2240 = vld [vmem:[%s526 + $0x3c8] sm:$0xff]
        %v2241 = vld [vmem:[%s526 + $0x3d0] sm:$0xff]
        %v2242 = vld [vmem:[%s526 + $0x3d8] sm:$0xff]
        %v2243 = vld [vmem:[%s526 + $0x3e0] sm:$0xff]
        %v2244 = vld [vmem:[%s526 + $0x3e8] sm:$0xff]
        %v2245 = vld [vmem:[%s526 + $0x3f0] sm:$0xff]
        %v2246 = vld [vmem:[%s526 + $0x3f8] sm:$0xff]
        %v2375 = vunpack.c.l.b16 %v2119
        %v2376 = vunpack.c.h.b16 %v2119
        %v2377 = vunpack.c.l.b16 %v2120
        %v2378 = vunpack.c.h.b16 %v2120
        %v2379 = vunpack.c.l.b16 %v2121
        %v2380 = vunpack.c.h.b16 %v2121
        %v2381 = vunpack.c.l.b16 %v2122
        %v2382 = vunpack.c.h.b16 %v2122
        %v2383 = vunpack.c.l.b16 %v2123
        %v2384 = vunpack.c.h.b16 %v2123
        %v2385 = vunpack.c.l.b16 %v2124
        %v2386 = vunpack.c.h.b16 %v2124
        %v2387 = vunpack.c.l.b16 %v2125
        %v2388 = vunpack.c.h.b16 %v2125
        %v2389 = vunpack.c.l.b16 %v2126
        %v2390 = vunpack.c.h.b16 %v2126
        %v2391 = vunpack.c.l.b16 %v2127
        %v2392 = vunpack.c.h.b16 %v2127
        %v2393 = vunpack.c.l.b16 %v2128
        %v2394 = vunpack.c.h.b16 %v2128
        %v2395 = vunpack.c.l.b16 %v2129
        %v2396 = vunpack.c.h.b16 %v2129
        %v2397 = vunpack.c.l.b16 %v2130
        %v2398 = vunpack.c.h.b16 %v2130
        %v2399 = vunpack.c.l.b16 %v2131
        %v2400 = vunpack.c.h.b16 %v2131
        %v2401 = vunpack.c.l.b16 %v2132
        %v2402 = vunpack.c.h.b16 %v2132
        %v2403 = vunpack.c.l.b16 %v2133
        %v2404 = vunpack.c.h.b16 %v2133
        %v2405 = vunpack.c.l.b16 %v2134
        %v2406 = vunpack.c.h.b16 %v2134
        %v2407 = vunpack.c.l.b16 %v2135
        %v2408 = vunpack.c.h.b16 %v2135
        %v2409 = vunpack.c.l.b16 %v2136
        %v2410 = vunpack.c.h.b16 %v2136
        %v2411 = vunpack.c.l.b16 %v2137
        %v2412 = vunpack.c.h.b16 %v2137
        %v2413 = vunpack.c.l.b16 %v2138
        %v2414 = vunpack.c.h.b16 %v2138
        %v2415 = vunpack.c.l.b16 %v2139
        %v2416 = vunpack.c.h.b16 %v2139
        %v2417 = vunpack.c.l.b16 %v2140
        %v2418 = vunpack.c.h.b16 %v2140
        %v2419 = vunpack.c.l.b16 %v2141
        %v2420 = vunpack.c.h.b16 %v2141
        %v2421 = vunpack.c.l.b16 %v2142
        %v2422 = vunpack.c.h.b16 %v2142
        %v2423 = vunpack.c.l.b16 %v2143
        %v2424 = vunpack.c.h.b16 %v2143
        %v2425 = vunpack.c.l.b16 %v2144
        %v2426 = vunpack.c.h.b16 %v2144
        %v2427 = vunpack.c.l.b16 %v2145
        %v2428 = vunpack.c.h.b16 %v2145
        %v2429 = vunpack.c.l.b16 %v2146
        %v2430 = vunpack.c.h.b16 %v2146
        %v2431 = vunpack.c.l.b16 %v2147
        %v2432 = vunpack.c.h.b16 %v2147
        %v2433 = vunpack.c.l.b16 %v2148
        %v2434 = vunpack.c.h.b16 %v2148
        %v2435 = vunpack.c.l.b16 %v2149
        %v2436 = vunpack.c.h.b16 %v2149
        %v2437 = vunpack.c.l.b16 %v2150
        %v2438 = vunpack.c.h.b16 %v2150
        %v2439 = vunpack.c.l.b16 %v2151
        %v2440 = vunpack.c.h.b16 %v2151
        %v2441 = vunpack.c.l.b16 %v2152
        %v2442 = vunpack.c.h.b16 %v2152
        %v2443 = vunpack.c.l.b16 %v2153
        %v2444 = vunpack.c.h.b16 %v2153
        %v2445 = vunpack.c.l.b16 %v2154
        %v2446 = vunpack.c.h.b16 %v2154
        %v2447 = vunpack.c.l.b16 %v2155
        %v2448 = vunpack.c.h.b16 %v2155
        %v2449 = vunpack.c.l.b16 %v2156
        %v2450 = vunpack.c.h.b16 %v2156
        %v2451 = vunpack.c.l.b16 %v2157
        %v2452 = vunpack.c.h.b16 %v2157
        %v2453 = vunpack.c.l.b16 %v2158
        %v2454 = vunpack.c.h.b16 %v2158
        %v2455 = vunpack.c.l.b16 %v2159
        %v2456 = vunpack.c.h.b16 %v2159
        %v2457 = vunpack.c.l.b16 %v2160
        %v2458 = vunpack.c.h.b16 %v2160
        %v2459 = vunpack.c.l.b16 %v2161
        %v2460 = vunpack.c.h.b16 %v2161
        %v2461 = vunpack.c.l.b16 %v2162
        %v2462 = vunpack.c.h.b16 %v2162
        %v2463 = vunpack.c.l.b16 %v2163
        %v2464 = vunpack.c.h.b16 %v2163
        %v2465 = vunpack.c.l.b16 %v2164
        %v2466 = vunpack.c.h.b16 %v2164
        %v2467 = vunpack.c.l.b16 %v2165
        %v2468 = vunpack.c.h.b16 %v2165
        %v2469 = vunpack.c.l.b16 %v2166
        %v2470 = vunpack.c.h.b16 %v2166
        %v2471 = vunpack.c.l.b16 %v2167
        %v2472 = vunpack.c.h.b16 %v2167
        %v2473 = vunpack.c.l.b16 %v2168
        %v2474 = vunpack.c.h.b16 %v2168
        %v2475 = vunpack.c.l.b16 %v2169
        %v2476 = vunpack.c.h.b16 %v2169
        %v2477 = vunpack.c.l.b16 %v2170
        %v2478 = vunpack.c.h.b16 %v2170
        %v2479 = vunpack.c.l.b16 %v2171
        %v2480 = vunpack.c.h.b16 %v2171
        %v2481 = vunpack.c.l.b16 %v2172
        %v2482 = vunpack.c.h.b16 %v2172
        %v2483 = vunpack.c.l.b16 %v2173
        %v2484 = vunpack.c.h.b16 %v2173
        %v2485 = vunpack.c.l.b16 %v2174
        %v2486 = vunpack.c.h.b16 %v2174
        %v2487 = vunpack.c.l.b16 %v2175
        %v2488 = vunpack.c.h.b16 %v2175
        %v2489 = vunpack.c.l.b16 %v2176
        %v2490 = vunpack.c.h.b16 %v2176
        %v2491 = vunpack.c.l.b16 %v2177
        %v2492 = vunpack.c.h.b16 %v2177
        %v2493 = vunpack.c.l.b16 %v2178
        %v2494 = vunpack.c.h.b16 %v2178
        %v2495 = vunpack.c.l.b16 %v2179
        %v2496 = vunpack.c.h.b16 %v2179
        %v2497 = vunpack.c.l.b16 %v2180
        %v2498 = vunpack.c.h.b16 %v2180
        %v2499 = vunpack.c.l.b16 %v2181
        %v2500 = vunpack.c.h.b16 %v2181
        %v2501 = vunpack.c.l.b16 %v2182
        %v2502 = vunpack.c.h.b16 %v2182
        %v2503 = vunpack.c.l.b16 %v2183
        %v2504 = vunpack.c.h.b16 %v2183
        %v2505 = vunpack.c.l.b16 %v2184
        %v2506 = vunpack.c.h.b16 %v2184
        %v2507 = vunpack.c.l.b16 %v2185
        %v2508 = vunpack.c.h.b16 %v2185
        %v2509 = vunpack.c.l.b16 %v2186
        %v2510 = vunpack.c.h.b16 %v2186
        %v2511 = vunpack.c.l.b16 %v2187
        %v2512 = vunpack.c.h.b16 %v2187
        %v2513 = vunpack.c.l.b16 %v2188
        %v2514 = vunpack.c.h.b16 %v2188
        %v2515 = vunpack.c.l.b16 %v2189
        %v2516 = vunpack.c.h.b16 %v2189
        %v2517 = vunpack.c.l.b16 %v2190
        %v2518 = vunpack.c.h.b16 %v2190
        %v2519 = vunpack.c.l.b16 %v2191
        %v2520 = vunpack.c.h.b16 %v2191
        %v2521 = vunpack.c.l.b16 %v2192
        %v2522 = vunpack.c.h.b16 %v2192
        %v2523 = vunpack.c.l.b16 %v2193
        %v2524 = vunpack.c.h.b16 %v2193
        %v2525 = vunpack.c.l.b16 %v2194
        %v2526 = vunpack.c.h.b16 %v2194
        %v2527 = vunpack.c.l.b16 %v2195
        %v2528 = vunpack.c.h.b16 %v2195
        %v2529 = vunpack.c.l.b16 %v2196
        %v2530 = vunpack.c.h.b16 %v2196
        %v2531 = vunpack.c.l.b16 %v2197
        %v2532 = vunpack.c.h.b16 %v2197
        %v2533 = vunpack.c.l.b16 %v2198
        %v2534 = vunpack.c.h.b16 %v2198
        %v2535 = vunpack.c.l.b16 %v2199
        %v2536 = vunpack.c.h.b16 %v2199
        %v2537 = vunpack.c.l.b16 %v2200
        %v2538 = vunpack.c.h.b16 %v2200
        %v2539 = vunpack.c.l.b16 %v2201
        %v2540 = vunpack.c.h.b16 %v2201
        %v2541 = vunpack.c.l.b16 %v2202
        %v2542 = vunpack.c.h.b16 %v2202
        %v2543 = vunpack.c.l.b16 %v2203
        %v2544 = vunpack.c.h.b16 %v2203
        %v2545 = vunpack.c.l.b16 %v2204
        %v2546 = vunpack.c.h.b16 %v2204
        %v2547 = vunpack.c.l.b16 %v2205
        %v2548 = vunpack.c.h.b16 %v2205
        %v2549 = vunpack.c.l.b16 %v2206
        %v2550 = vunpack.c.h.b16 %v2206
        %v2551 = vunpack.c.l.b16 %v2207
        %v2552 = vunpack.c.h.b16 %v2207
        %v2553 = vunpack.c.l.b16 %v2208
        %v2554 = vunpack.c.h.b16 %v2208
        %v2555 = vunpack.c.l.b16 %v2209
        %v2556 = vunpack.c.h.b16 %v2209
        %v2557 = vunpack.c.l.b16 %v2210
        %v2558 = vunpack.c.h.b16 %v2210
        %v2559 = vunpack.c.l.b16 %v2211
        %v2560 = vunpack.c.h.b16 %v2211
        %v2561 = vunpack.c.l.b16 %v2212
        %v2562 = vunpack.c.h.b16 %v2212
        %v2563 = vunpack.c.l.b16 %v2213
        %v2564 = vunpack.c.h.b16 %v2213
        %v2565 = vunpack.c.l.b16 %v2214
        %v2566 = vunpack.c.h.b16 %v2214
        %v2567 = vunpack.c.l.b16 %v2215
        %v2568 = vunpack.c.h.b16 %v2215
        %v2569 = vunpack.c.l.b16 %v2216
        %v2570 = vunpack.c.h.b16 %v2216
        %v2571 = vunpack.c.l.b16 %v2217
        %v2572 = vunpack.c.h.b16 %v2217
        %v2573 = vunpack.c.l.b16 %v2218
        %v2574 = vunpack.c.h.b16 %v2218
        %v2575 = vunpack.c.l.b16 %v2219
        %v2576 = vunpack.c.h.b16 %v2219
        %v2577 = vunpack.c.l.b16 %v2220
        %v2578 = vunpack.c.h.b16 %v2220
        %v2579 = vunpack.c.l.b16 %v2221
        %v2580 = vunpack.c.h.b16 %v2221
        %v2581 = vunpack.c.l.b16 %v2222
        %v2582 = vunpack.c.h.b16 %v2222
        %v2583 = vunpack.c.l.b16 %v2223
        %v2584 = vunpack.c.h.b16 %v2223
        %v2585 = vunpack.c.l.b16 %v2224
        %v2586 = vunpack.c.h.b16 %v2224
        %v2587 = vunpack.c.l.b16 %v2225
        %v2588 = vunpack.c.h.b16 %v2225
        %v2589 = vunpack.c.l.b16 %v2226
        %v2590 = vunpack.c.h.b16 %v2226
        %v2591 = vunpack.c.l.b16 %v2227
        %v2592 = vunpack.c.h.b16 %v2227
        %v2593 = vunpack.c.l.b16 %v2228
        %v2594 = vunpack.c.h.b16 %v2228
        %v2595 = vunpack.c.l.b16 %v2229
        %v2596 = vunpack.c.h.b16 %v2229
        %v2597 = vunpack.c.l.b16 %v2230
        %v2598 = vunpack.c.h.b16 %v2230
        %v2599 = vunpack.c.l.b16 %v2231
        %v2600 = vunpack.c.h.b16 %v2231
        %v2601 = vunpack.c.l.b16 %v2232
        %v2602 = vunpack.c.h.b16 %v2232
        %v2603 = vunpack.c.l.b16 %v2233
        %v2604 = vunpack.c.h.b16 %v2233
        %v2605 = vunpack.c.l.b16 %v2234
        %v2606 = vunpack.c.h.b16 %v2234
        %v2607 = vunpack.c.l.b16 %v2235
        %v2608 = vunpack.c.h.b16 %v2235
        %v2609 = vunpack.c.l.b16 %v2236
        %v2610 = vunpack.c.h.b16 %v2236
        %v2611 = vunpack.c.l.b16 %v2237
        %v2612 = vunpack.c.h.b16 %v2237
        %v2613 = vunpack.c.l.b16 %v2238
        %v2614 = vunpack.c.h.b16 %v2238
        %v2615 = vunpack.c.l.b16 %v2239
        %v2616 = vunpack.c.h.b16 %v2239
        %v2617 = vunpack.c.l.b16 %v2240
        %v2618 = vunpack.c.h.b16 %v2240
        %v2619 = vunpack.c.l.b16 %v2241
        %v2620 = vunpack.c.h.b16 %v2241
        %v2621 = vunpack.c.l.b16 %v2242
        %v2622 = vunpack.c.h.b16 %v2242
        %v2623 = vunpack.c.l.b16 %v2243
        %v2624 = vunpack.c.h.b16 %v2243
        %v2625 = vunpack.c.l.b16 %v2244
        %v2626 = vunpack.c.h.b16 %v2244
        %v2627 = vunpack.c.l.b16 %v2245
        %v2628 = vunpack.c.h.b16 %v2245
        %v2629 = vunpack.c.l.b16 %v2246
        %v2630 = vunpack.c.h.b16 %v2246
        %v2631 = vpack.c.b16 %v2383, %v2375
        %v2632 = vpack.c.b16 %v2384, %v2376
        %v2633 = vpack.c.b16 %v2385, %v2377
        %v2634 = vpack.c.b16 %v2386, %v2378
        %v2635 = vpack.c.b16 %v2387, %v2379
        %v2636 = vpack.c.b16 %v2388, %v2380
        %v2637 = vpack.c.b16 %v2389, %v2381
        %v2638 = vpack.c.b16 %v2390, %v2382
        %v2639 = vpack.c.b16 %v2399, %v2391
        %v2640 = vpack.c.b16 %v2400, %v2392
        %v2641 = vpack.c.b16 %v2401, %v2393
        %v2642 = vpack.c.b16 %v2402, %v2394
        %v2643 = vpack.c.b16 %v2403, %v2395
        %v2644 = vpack.c.b16 %v2404, %v2396
        %v2645 = vpack.c.b16 %v2405, %v2397
        %v2646 = vpack.c.b16 %v2406, %v2398
        %v2647 = vpack.c.b16 %v2415, %v2407
        %v2648 = vpack.c.b16 %v2416, %v2408
        %v2649 = vpack.c.b16 %v2417, %v2409
        %v2650 = vpack.c.b16 %v2418, %v2410
        %v2651 = vpack.c.b16 %v2419, %v2411
        %v2652 = vpack.c.b16 %v2420, %v2412
        %v2653 = vpack.c.b16 %v2421, %v2413
        %v2654 = vpack.c.b16 %v2422, %v2414
        %v2655 = vpack.c.b16 %v2431, %v2423
        %v2656 = vpack.c.b16 %v2432, %v2424
        %v2657 = vpack.c.b16 %v2433, %v2425
        %v2658 = vpack.c.b16 %v2434, %v2426
        %v2659 = vpack.c.b16 %v2435, %v2427
        %v2660 = vpack.c.b16 %v2436, %v2428
        %v2661 = vpack.c.b16 %v2437, %v2429
        %v2662 = vpack.c.b16 %v2438, %v2430
        %v2663 = vpack.c.b16 %v2447, %v2439
        %v2664 = vpack.c.b16 %v2448, %v2440
        %v2665 = vpack.c.b16 %v2449, %v2441
        %v2666 = vpack.c.b16 %v2450, %v2442
        %v2667 = vpack.c.b16 %v2451, %v2443
        %v2668 = vpack.c.b16 %v2452, %v2444
        %v2669 = vpack.c.b16 %v2453, %v2445
        %v2670 = vpack.c.b16 %v2454, %v2446
        %v2671 = vpack.c.b16 %v2463, %v2455
        %v2672 = vpack.c.b16 %v2464, %v2456
        %v2673 = vpack.c.b16 %v2465, %v2457
        %v2674 = vpack.c.b16 %v2466, %v2458
        %v2675 = vpack.c.b16 %v2467, %v2459
        %v2676 = vpack.c.b16 %v2468, %v2460
        %v2677 = vpack.c.b16 %v2469, %v2461
        %v2678 = vpack.c.b16 %v2470, %v2462
        %v2679 = vpack.c.b16 %v2479, %v2471
        %v2680 = vpack.c.b16 %v2480, %v2472
        %v2681 = vpack.c.b16 %v2481, %v2473
        %v2682 = vpack.c.b16 %v2482, %v2474
        %v2683 = vpack.c.b16 %v2483, %v2475
        %v2684 = vpack.c.b16 %v2484, %v2476
        %v2685 = vpack.c.b16 %v2485, %v2477
        %v2686 = vpack.c.b16 %v2486, %v2478
        %v2687 = vpack.c.b16 %v2495, %v2487
        %v2688 = vpack.c.b16 %v2496, %v2488
        %v2689 = vpack.c.b16 %v2497, %v2489
        %v2690 = vpack.c.b16 %v2498, %v2490
        %v2691 = vpack.c.b16 %v2499, %v2491
        %v2692 = vpack.c.b16 %v2500, %v2492
        %v2693 = vpack.c.b16 %v2501, %v2493
        %v2694 = vpack.c.b16 %v2502, %v2494
        %v2695 = vpack.c.b16 %v2511, %v2503
        %v2696 = vpack.c.b16 %v2512, %v2504
        %v2697 = vpack.c.b16 %v2513, %v2505
        %v2698 = vpack.c.b16 %v2514, %v2506
        %v2699 = vpack.c.b16 %v2515, %v2507
        %v2700 = vpack.c.b16 %v2516, %v2508
        %v2701 = vpack.c.b16 %v2517, %v2509
        %v2702 = vpack.c.b16 %v2518, %v2510
        %v2703 = vpack.c.b16 %v2527, %v2519
        %v2704 = vpack.c.b16 %v2528, %v2520
        %v2705 = vpack.c.b16 %v2529, %v2521
        %v2706 = vpack.c.b16 %v2530, %v2522
        %v2707 = vpack.c.b16 %v2531, %v2523
        %v2708 = vpack.c.b16 %v2532, %v2524
        %v2709 = vpack.c.b16 %v2533, %v2525
        %v2710 = vpack.c.b16 %v2534, %v2526
        %v2711 = vpack.c.b16 %v2543, %v2535
        %v2712 = vpack.c.b16 %v2544, %v2536
        %v2713 = vpack.c.b16 %v2545, %v2537
        %v2714 = vpack.c.b16 %v2546, %v2538
        %v2715 = vpack.c.b16 %v2547, %v2539
        %v2716 = vpack.c.b16 %v2548, %v2540
        %v2717 = vpack.c.b16 %v2549, %v2541
        %v2718 = vpack.c.b16 %v2550, %v2542
        %v2719 = vpack.c.b16 %v2559, %v2551
        %v2720 = vpack.c.b16 %v2560, %v2552
        %v2721 = vpack.c.b16 %v2561, %v2553
        %v2722 = vpack.c.b16 %v2562, %v2554
        %v2723 = vpack.c.b16 %v2563, %v2555
        %v2724 = vpack.c.b16 %v2564, %v2556
        %v2725 = vpack.c.b16 %v2565, %v2557
        %v2726 = vpack.c.b16 %v2566, %v2558
        %v2727 = vpack.c.b16 %v2575, %v2567
        %v2728 = vpack.c.b16 %v2576, %v2568
        %v2729 = vpack.c.b16 %v2577, %v2569
        %v2730 = vpack.c.b16 %v2578, %v2570
        %v2731 = vpack.c.b16 %v2579, %v2571
        %v2732 = vpack.c.b16 %v2580, %v2572
        %v2733 = vpack.c.b16 %v2581, %v2573
        %v2734 = vpack.c.b16 %v2582, %v2574
        %v2735 = vpack.c.b16 %v2591, %v2583
        %v2736 = vpack.c.b16 %v2592, %v2584
        %v2737 = vpack.c.b16 %v2593, %v2585
        %v2738 = vpack.c.b16 %v2594, %v2586
        %v2739 = vpack.c.b16 %v2595, %v2587
        %v2740 = vpack.c.b16 %v2596, %v2588
        %v2741 = vpack.c.b16 %v2597, %v2589
        %v2742 = vpack.c.b16 %v2598, %v2590
        %v2743 = vpack.c.b16 %v2607, %v2599
        %v2744 = vpack.c.b16 %v2608, %v2600
        %v2745 = vpack.c.b16 %v2609, %v2601
        %v2746 = vpack.c.b16 %v2610, %v2602
        %v2747 = vpack.c.b16 %v2611, %v2603
        %v2748 = vpack.c.b16 %v2612, %v2604
        %v2749 = vpack.c.b16 %v2613, %v2605
        %v2750 = vpack.c.b16 %v2614, %v2606
        %v2751 = vpack.c.b16 %v2623, %v2615
        %v2752 = vpack.c.b16 %v2624, %v2616
        %v2753 = vpack.c.b16 %v2625, %v2617
        %v2754 = vpack.c.b16 %v2626, %v2618
        %v2755 = vpack.c.b16 %v2627, %v2619
        %v2756 = vpack.c.b16 %v2628, %v2620
        %v2757 = vpack.c.b16 %v2629, %v2621
        %v2758 = vpack.c.b16 %v2630, %v2622
        %2887 = vmatprep.subr.bf16.mxu0 %v2632
        %2888 = vmatpush1.bf16.msra.mxu0 %v2631
        %2889 = vmatprep.subr.bf16.mxu0 %v2640
        %2890 = vmatpush1.bf16.msra.mxu0 %v2639
        %2891 = vmatprep.subr.bf16.mxu0 %v2648
        %2892 = vmatpush1.bf16.msra.mxu0 %v2647
        %2893 = vmatprep.subr.bf16.mxu0 %v2656
        %2894 = vmatpush1.bf16.msra.mxu0 %v2655
        %2895 = vmatprep.subr.bf16.mxu0 %v2664
        %2896 = vmatpush1.bf16.msra.mxu0 %v2663
        %2897 = vmatprep.subr.bf16.mxu0 %v2672
        %2898 = vmatpush1.bf16.msra.mxu0 %v2671
        %2899 = vmatprep.subr.bf16.mxu0 %v2680
        %2900 = vmatpush1.bf16.msra.mxu0 %v2679
        %2901 = vmatprep.subr.bf16.mxu0 %v2688
        %2902 = vmatpush1.bf16.msra.mxu0 %v2687
        %2903 = vmatprep.subr.bf16.mxu0 %v2696
        %2904 = vmatpush1.bf16.msra.mxu0 %v2695
        %2905 = vmatprep.subr.bf16.mxu0 %v2704
        %2906 = vmatpush1.bf16.msra.mxu0 %v2703
        %2907 = vmatprep.subr.bf16.mxu0 %v2712
        %2908 = vmatpush1.bf16.msra.mxu0 %v2711
        %2909 = vmatprep.subr.bf16.mxu0 %v2720
        %2910 = vmatpush1.bf16.msra.mxu0 %v2719
        %2911 = vmatprep.subr.bf16.mxu0 %v2728
        %2912 = vmatpush1.bf16.msra.mxu0 %v2727
        %2913 = vmatprep.subr.bf16.mxu0 %v2736
        %2914 = vmatpush1.bf16.msra.mxu0 %v2735
        %2915 = vmatprep.subr.bf16.mxu0 %v2744
        %2916 = vmatpush1.bf16.msra.mxu0 %v2743
        %2917 = vmatprep.subr.bf16.mxu0 %v2752
        %2918 = vmatpush1.bf16.msra.mxu0 %v2751
        %2919 = vmatprep.mubr.bf16.mxu0 %v2118
        %2920 = vmatmul.mubr.bf16.gmra.mrb[0].mxu0 %v2117
        %v2921 = vpop.f32.mrb[0].mxu0
        %v2922 = vadd.f32 0.0, %v2921
        %v2923 = vpop.f32.mrb[0].mxu0
        %v2924 = vadd.f32 0.0, %v2923
        %v2925 = vpop.f32.mrb[0].mxu0
        %v2926 = vadd.f32 0.0, %v2925
        %v2927 = vpop.f32.mrb[0].mxu0
        %v2928 = vadd.f32 0.0, %v2927
        %2929 = vdwg.mxu0
        %2930 = vmatprep.subr.bf16.mxu0 %v2634
        %2931 = vmatpush1.bf16.msra.mxu0 %v2633
        %2932 = vmatprep.subr.bf16.mxu0 %v2642
        %2933 = vmatpush1.bf16.msra.mxu0 %v2641
        %2934 = vmatprep.subr.bf16.mxu0 %v2650
        %2935 = vmatpush1.bf16.msra.mxu0 %v2649
        %2936 = vmatprep.subr.bf16.mxu0 %v2658
        %2937 = vmatpush1.bf16.msra.mxu0 %v2657
        %2938 = vmatprep.subr.bf16.mxu0 %v2666
        %2939 = vmatpush1.bf16.msra.mxu0 %v2665
        %2940 = vmatprep.subr.bf16.mxu0 %v2674
        %2941 = vmatpush1.bf16.msra.mxu0 %v2673
        %2942 = vmatprep.subr.bf16.mxu0 %v2682
        %2943 = vmatpush1.bf16.msra.mxu0 %v2681
        %2944 = vmatprep.subr.bf16.mxu0 %v2690
        %2945 = vmatpush1.bf16.msra.mxu0 %v2689
        %2946 = vmatprep.subr.bf16.mxu0 %v2698
        %2947 = vmatpush1.bf16.msra.mxu0 %v2697
        %2948 = vmatprep.subr.bf16.mxu0 %v2706
        %2949 = vmatpush1.bf16.msra.mxu0 %v2705
        %2950 = vmatprep.subr.bf16.mxu0 %v2714
        %2951 = vmatpush1.bf16.msra.mxu0 %v2713
        %2952 = vmatprep.subr.bf16.mxu0 %v2722
        %2953 = vmatpush1.bf16.msra.mxu0 %v2721
        %2954 = vmatprep.subr.bf16.mxu0 %v2730
        %2955 = vmatpush1.bf16.msra.mxu0 %v2729
        %2956 = vmatprep.subr.bf16.mxu0 %v2738
        %2957 = vmatpush1.bf16.msra.mxu0 %v2737
        %2958 = vmatprep.subr.bf16.mxu0 %v2746
        %2959 = vmatpush1.bf16.msra.mxu0 %v2745
        %2960 = vmatprep.subr.bf16.mxu0 %v2754
        %2961 = vmatpush1.bf16.msra.mxu0 %v2753
        %2962 = vmatprep.mubr.bf16.mxu0 %v2118
        %2963 = vmatmul.mubr.bf16.gmra.mrb[0].mxu0 %v2117
        %v2964 = vpop.f32.mrb[0].mxu0
        %v2965 = vadd.f32 0.0, %v2964
        %v2966 = vpop.f32.mrb[0].mxu0
        %v2967 = vadd.f32 0.0, %v2966
        %v2968 = vpop.f32.mrb[0].mxu0
        %v2969 = vadd.f32 0.0, %v2968
        %v2970 = vpop.f32.mrb[0].mxu0
        %v2971 = vadd.f32 0.0, %v2970
        %2972 = vdwg.mxu0
        %2973 = vmatprep.subr.bf16.mxu0 %v2636
        %2974 = vmatpush1.bf16.msra.mxu0 %v2635
        %2975 = vmatprep.subr.bf16.mxu0 %v2644
        %2976 = vmatpush1.bf16.msra.mxu0 %v2643
        %2977 = vmatprep.subr.bf16.mxu0 %v2652
        %2978 = vmatpush1.bf16.msra.mxu0 %v2651
        %2979 = vmatprep.subr.bf16.mxu0 %v2660
        %2980 = vmatpush1.bf16.msra.mxu0 %v2659
        %2981 = vmatprep.subr.bf16.mxu0 %v2668
        %2982 = vmatpush1.bf16.msra.mxu0 %v2667
        %2983 = vmatprep.subr.bf16.mxu0 %v2676
        %2984 = vmatpush1.bf16.msra.mxu0 %v2675
        %2985 = vmatprep.subr.bf16.mxu0 %v2684
        %2986 = vmatpush1.bf16.msra.mxu0 %v2683
        %2987 = vmatprep.subr.bf16.mxu0 %v2692
        %2988 = vmatpush1.bf16.msra.mxu0 %v2691
        %2989 = vmatprep.subr.bf16.mxu0 %v2700
        %2990 = vmatpush1.bf16.msra.mxu0 %v2699
        %2991 = vmatprep.subr.bf16.mxu0 %v2708
        %2992 = vmatpush1.bf16.msra.mxu0 %v2707
        %2993 = vmatprep.subr.bf16.mxu0 %v2716
        %2994 = vmatpush1.bf16.msra.mxu0 %v2715
        %2995 = vmatprep.subr.bf16.mxu0 %v2724
        %2996 = vmatpush1.bf16.msra.mxu0 %v2723
        %2997 = vmatprep.subr.bf16.mxu0 %v2732
        %2998 = vmatpush1.bf16.msra.mxu0 %v2731
        %2999 = vmatprep.subr.bf16.mxu0 %v2740
        %3000 = vmatpush1.bf16.msra.mxu0 %v2739
        %3001 = vmatprep.subr.bf16.mxu0 %v2748
        %3002 = vmatpush1.bf16.msra.mxu0 %v2747
        %3003 = vmatprep.subr.bf16.mxu0 %v2756
        %3004 = vmatpush1.bf16.msra.mxu0 %v2755
        %3005 = vmatprep.mubr.bf16.mxu0 %v2118
        %3006 = vmatmul.mubr.bf16.gmra.mrb[0].mxu0 %v2117
        %v3007 = vpop.f32.mrb[0].mxu0
        %v3008 = vadd.f32 0.0, %v3007
        %v3009 = vpop.f32.mrb[0].mxu0
        %v3010 = vadd.f32 0.0, %v3009
        %v3011 = vpop.f32.mrb[0].mxu0
        %v3012 = vadd.f32 0.0, %v3011
        %v3013 = vpop.f32.mrb[0].mxu0
        %v3014 = vadd.f32 0.0, %v3013
        %3015 = vdwg.mxu0
        %3016 = vmatprep.subr.bf16.mxu0 %v2638
        %3017 = vmatpush1.bf16.msra.mxu0 %v2637
        %3018 = vmatprep.subr.bf16.mxu0 %v2646
        %3019 = vmatpush1.bf16.msra.mxu0 %v2645
        %3020 = vmatprep.subr.bf16.mxu0 %v2654
        %3021 = vmatpush1.bf16.msra.mxu0 %v2653
        %3022 = vmatprep.subr.bf16.mxu0 %v2662
        %3023 = vmatpush1.bf16.msra.mxu0 %v2661
        %3024 = vmatprep.subr.bf16.mxu0 %v2670
        %3025 = vmatpush1.bf16.msra.mxu0 %v2669
        %3026 = vmatprep.subr.bf16.mxu0 %v2678
        %3027 = vmatpush1.bf16.msra.mxu0 %v2677
        %3028 = vmatprep.subr.bf16.mxu0 %v2686
        %3029 = vmatpush1.bf16.msra.mxu0 %v2685
        %3030 = vmatprep.subr.bf16.mxu0 %v2694
        %3031 = vmatpush1.bf16.msra.mxu0 %v2693
        %3032 = vmatprep.subr.bf16.mxu0 %v2702
        %3033 = vmatpush1.bf16.msra.mxu0 %v2701
        %3034 = vmatprep.subr.bf16.mxu0 %v2710
        %3035 = vmatpush1.bf16.msra.mxu0 %v2709
        %3036 = vmatprep.subr.bf16.mxu0 %v2718
        %3037 = vmatpush1.bf16.msra.mxu0 %v2717
        %3038 = vmatprep.subr.bf16.mxu0 %v2726
        %3039 = vmatpush1.bf16.msra.mxu0 %v2725
        %3040 = vmatprep.subr.bf16.mxu0 %v2734
        %3041 = vmatpush1.bf16.msra.mxu0 %v2733
        %3042 = vmatprep.subr.bf16.mxu0 %v2742
        %3043 = vmatpush1.bf16.msra.mxu0 %v2741
        %3044 = vmatprep.subr.bf16.mxu0 %v2750
        %3045 = vmatpush1.bf16.msra.mxu0 %v2749
        %3046 = vmatprep.subr.bf16.mxu0 %v2758
        %3047 = vmatpush1.bf16.msra.mxu0 %v2757
        %3048 = vmatprep.mubr.bf16.mxu0 %v2118
        %3049 = vmatmul.mubr.bf16.gmra.mrb[0].mxu0 %v2117
        %v3050 = vpop.f32.mrb[0].mxu0
        %v3051 = vadd.f32 0.0, %v3050
        %v3052 = vpop.f32.mrb[0].mxu0
        %v3053 = vadd.f32 0.0, %v3052
        %v3054 = vpop.f32.mrb[0].mxu0
        %v3055 = vadd.f32 0.0, %v3054
        %v3056 = vpop.f32.mrb[0].mxu0
        %v3057 = vadd.f32 0.0, %v3056
        %3058 = vdwg.mxu0
        %v3059 = vxor.u32 %v2922, 2147483648
        %v3060 = vxor.u32 %v2924, 2147483648
        %v3061 = vxor.u32 %v2965, 2147483648
        %v3062 = vxor.u32 %v2967, 2147483648
        %v3063 = vxor.u32 %v2926, 2147483648
        %v3064 = vxor.u32 %v2928, 2147483648
        %v3065 = vxor.u32 %v2969, 2147483648
        %v3066 = vxor.u32 %v2971, 2147483648
        %v3067 = vmul.f32 %v3059, 1.442695
        %v3068 = vpow.pop %v3067
        %v3069 = vmul.f32 %v3060, 1.442695
        %v3070 = vpow.pop %v3069
        %v3071 = vmul.f32 %v3061, 1.442695
        %v3072 = vpow.pop %v3071
        %v3073 = vmul.f32 %v3062, 1.442695
        %v3074 = vpow.pop %v3073
        %v3075 = vmul.f32 %v3063, 1.442695
        %v3076 = vpow.pop %v3075
        %v3077 = vmul.f32 %v3064, 1.442695
        %v3078 = vpow.pop %v3077
        %v3079 = vmul.f32 %v3065, 1.442695
        %v3080 = vpow.pop %v3079
        %v3081 = vmul.f32 %v3066, 1.442695
        %v3082 = vpow.pop %v3081
        %v3083 = vadd.f32 %v3068, 1.0
        %v3084 = vadd.f32 %v3070, 1.0
        %v3085 = vadd.f32 %v3072, 1.0
        %v3086 = vadd.f32 %v3074, 1.0
        %v3087 = vadd.f32 %v3076, 1.0
        %v3088 = vadd.f32 %v3078, 1.0
        %v3089 = vadd.f32 %v3080, 1.0
        %v3090 = vadd.f32 %v3082, 1.0
        %v3091 = vrcp.pop %v3083
        %v3092 = vmul.f32 1.0, %v3091
        %v3093 = vrcp.pop %v3084
        %v3094 = vmul.f32 1.0, %v3093
        %v3095 = vrcp.pop %v3085
        %v3096 = vmul.f32 1.0, %v3095
        %v3097 = vrcp.pop %v3086
        %v3098 = vmul.f32 1.0, %v3097
        %v3099 = vrcp.pop %v3087
        %v3100 = vmul.f32 1.0, %v3099
        %v3101 = vrcp.pop %v3088
        %v3102 = vmul.f32 1.0, %v3101
        %v3103 = vrcp.pop %v3089
        %v3104 = vmul.f32 1.0, %v3103
        %v3105 = vrcp.pop %v3090
        %v3106 = vmul.f32 1.0, %v3105
        %v3107 = vmul.f32 %v2922, %v3092
        %v3108 = vmul.f32 %v2924, %v3094
        %v3109 = vmul.f32 %v2965, %v3096
        %v3110 = vmul.f32 %v2967, %v3098
        %v3111 = vmul.f32 %v2926, %v3100
        %v3112 = vmul.f32 %v2928, %v3102
        %v3113 = vmul.f32 %v2969, %v3104
        %v3114 = vmul.f32 %v2971, %v3106
        %v3115 = vmul.f32 %v3107, %v3008
        %v3116 = vmul.f32 %v3108, %v3010
        %v3117 = vmul.f32 %v3109, %v3051
        %v3118 = vmul.f32 %v3110, %v3053
        %v3119 = vmul.f32 %v3111, %v3012
        %v3120 = vmul.f32 %v3112, %v3014
        %v3121 = vmul.f32 %v3113, %v3055
        %v3122 = vmul.f32 %v3114, %v3057
        %v3123 = vpack.c.bf16 %v3119, %v3115
        %v3124 = vpack.c.bf16 %v3120, %v3116
        %v3125 = vpack.c.bf16 %v3121, %v3117
        %v3126 = vpack.c.bf16 %v3122, %v3118
        %v3127 = vld [vmem:[%s535] sm:$0xff]
        %v3128 = vld [vmem:[%s535 + $0x8] sm:$0xff]
        %v3129 = vld [vmem:[%s535 + $0x10] sm:$0xff]
        %v3130 = vld [vmem:[%s535 + $0x18] sm:$0xff]
        %v3131 = vld [vmem:[%s535 + $0x20] sm:$0xff]
        %v3132 = vld [vmem:[%s535 + $0x28] sm:$0xff]
        %v3133 = vld [vmem:[%s535 + $0x30] sm:$0xff]
        %v3134 = vld [vmem:[%s535 + $0x38] sm:$0xff]
        %v3135 = vld [vmem:[%s535 + $0x40] sm:$0xff]
        %v3136 = vld [vmem:[%s535 + $0x48] sm:$0xff]
        %v3137 = vld [vmem:[%s535 + $0x50] sm:$0xff]
        %v3138 = vld [vmem:[%s535 + $0x58] sm:$0xff]
        %v3139 = vld [vmem:[%s535 + $0x60] sm:$0xff]
        %v3140 = vld [vmem:[%s535 + $0x68] sm:$0xff]
        %v3141 = vld [vmem:[%s535 + $0x70] sm:$0xff]
        %v3142 = vld [vmem:[%s535 + $0x78] sm:$0xff]
        %v3143 = vld [vmem:[%s535 + $0x80] sm:$0xff]
        %v3144 = vld [vmem:[%s535 + $0x88] sm:$0xff]
        %v3145 = vld [vmem:[%s535 + $0x90] sm:$0xff]
        %v3146 = vld [vmem:[%s535 + $0x98] sm:$0xff]
        %v3147 = vld [vmem:[%s535 + $0xa0] sm:$0xff]
        %v3148 = vld [vmem:[%s535 + $0xa8] sm:$0xff]
        %v3149 = vld [vmem:[%s535 + $0xb0] sm:$0xff]
        %v3150 = vld [vmem:[%s535 + $0xb8] sm:$0xff]
        %v3151 = vld [vmem:[%s535 + $0xc0] sm:$0xff]
        %v3152 = vld [vmem:[%s535 + $0xc8] sm:$0xff]
        %v3153 = vld [vmem:[%s535 + $0xd0] sm:$0xff]
        %v3154 = vld [vmem:[%s535 + $0xd8] sm:$0xff]
        %v3155 = vld [vmem:[%s535 + $0xe0] sm:$0xff]
        %v3156 = vld [vmem:[%s535 + $0xe8] sm:$0xff]
        %v3157 = vld [vmem:[%s535 + $0xf0] sm:$0xff]
        %v3158 = vld [vmem:[%s535 + $0xf8] sm:$0xff]
        %v3159 = vld [vmem:[%s535 + $0x100] sm:$0xff]
        %v3160 = vld [vmem:[%s535 + $0x108] sm:$0xff]
        %v3161 = vld [vmem:[%s535 + $0x110] sm:$0xff]
        %v3162 = vld [vmem:[%s535 + $0x118] sm:$0xff]
        %v3163 = vld [vmem:[%s535 + $0x120] sm:$0xff]
        %v3164 = vld [vmem:[%s535 + $0x128] sm:$0xff]
        %v3165 = vld [vmem:[%s535 + $0x130] sm:$0xff]
        %v3166 = vld [vmem:[%s535 + $0x138] sm:$0xff]
        %v3167 = vld [vmem:[%s535 + $0x140] sm:$0xff]
        %v3168 = vld [vmem:[%s535 + $0x148] sm:$0xff]
        %v3169 = vld [vmem:[%s535 + $0x150] sm:$0xff]
        %v3170 = vld [vmem:[%s535 + $0x158] sm:$0xff]
        %v3171 = vld [vmem:[%s535 + $0x160] sm:$0xff]
        %v3172 = vld [vmem:[%s535 + $0x168] sm:$0xff]
        %v3173 = vld [vmem:[%s535 + $0x170] sm:$0xff]
        %v3174 = vld [vmem:[%s535 + $0x178] sm:$0xff]
        %v3175 = vld [vmem:[%s535 + $0x180] sm:$0xff]
        %v3176 = vld [vmem:[%s535 + $0x188] sm:$0xff]
        %v3177 = vld [vmem:[%s535 + $0x190] sm:$0xff]
        %v3178 = vld [vmem:[%s535 + $0x198] sm:$0xff]
        %v3179 = vld [vmem:[%s535 + $0x1a0] sm:$0xff]
        %v3180 = vld [vmem:[%s535 + $0x1a8] sm:$0xff]
        %v3181 = vld [vmem:[%s535 + $0x1b0] sm:$0xff]
        %v3182 = vld [vmem:[%s535 + $0x1b8] sm:$0xff]
        %v3183 = vld [vmem:[%s535 + $0x1c0] sm:$0xff]
        %v3184 = vld [vmem:[%s535 + $0x1c8] sm:$0xff]
        %v3185 = vld [vmem:[%s535 + $0x1d0] sm:$0xff]
        %v3186 = vld [vmem:[%s535 + $0x1d8] sm:$0xff]
        %v3187 = vld [vmem:[%s535 + $0x1e0] sm:$0xff]
        %v3188 = vld [vmem:[%s535 + $0x1e8] sm:$0xff]
        %v3189 = vld [vmem:[%s535 + $0x1f0] sm:$0xff]
        %v3190 = vld [vmem:[%s535 + $0x1f8] sm:$0xff]
        %v3255 = vunpack.c.l.b16 %v3127
        %v3256 = vunpack.c.h.b16 %v3127
        %v3257 = vunpack.c.l.b16 %v3128
        %v3258 = vunpack.c.h.b16 %v3128
        %v3259 = vunpack.c.l.b16 %v3129
        %v3260 = vunpack.c.h.b16 %v3129
        %v3261 = vunpack.c.l.b16 %v3130
        %v3262 = vunpack.c.h.b16 %v3130
        %v3263 = vunpack.c.l.b16 %v3131
        %v3264 = vunpack.c.h.b16 %v3131
        %v3265 = vunpack.c.l.b16 %v3132
        %v3266 = vunpack.c.h.b16 %v3132
        %v3267 = vunpack.c.l.b16 %v3133
        %v3268 = vunpack.c.h.b16 %v3133
        %v3269 = vunpack.c.l.b16 %v3134
        %v3270 = vunpack.c.h.b16 %v3134
        %v3271 = vunpack.c.l.b16 %v3135
        %v3272 = vunpack.c.h.b16 %v3135
        %v3273 = vunpack.c.l.b16 %v3136
        %v3274 = vunpack.c.h.b16 %v3136
        %v3275 = vunpack.c.l.b16 %v3137
        %v3276 = vunpack.c.h.b16 %v3137
        %v3277 = vunpack.c.l.b16 %v3138
        %v3278 = vunpack.c.h.b16 %v3138
        %v3279 = vunpack.c.l.b16 %v3139
        %v3280 = vunpack.c.h.b16 %v3139
        %v3281 = vunpack.c.l.b16 %v3140
        %v3282 = vunpack.c.h.b16 %v3140
        %v3283 = vunpack.c.l.b16 %v3141
        %v3284 = vunpack.c.h.b16 %v3141
        %v3285 = vunpack.c.l.b16 %v3142
        %v3286 = vunpack.c.h.b16 %v3142
        %v3287 = vunpack.c.l.b16 %v3143
        %v3288 = vunpack.c.h.b16 %v3143
        %v3289 = vunpack.c.l.b16 %v3144
        %v3290 = vunpack.c.h.b16 %v3144
        %v3291 = vunpack.c.l.b16 %v3145
        %v3292 = vunpack.c.h.b16 %v3145
        %v3293 = vunpack.c.l.b16 %v3146
        %v3294 = vunpack.c.h.b16 %v3146
        %v3295 = vunpack.c.l.b16 %v3147
        %v3296 = vunpack.c.h.b16 %v3147
        %v3297 = vunpack.c.l.b16 %v3148
        %v3298 = vunpack.c.h.b16 %v3148
        %v3299 = vunpack.c.l.b16 %v3149
        %v3300 = vunpack.c.h.b16 %v3149
        %v3301 = vunpack.c.l.b16 %v3150
        %v3302 = vunpack.c.h.b16 %v3150
        %v3303 = vunpack.c.l.b16 %v3151
        %v3304 = vunpack.c.h.b16 %v3151
        %v3305 = vunpack.c.l.b16 %v3152
        %v3306 = vunpack.c.h.b16 %v3152
        %v3307 = vunpack.c.l.b16 %v3153
        %v3308 = vunpack.c.h.b16 %v3153
        %v3309 = vunpack.c.l.b16 %v3154
        %v3310 = vunpack.c.h.b16 %v3154
        %v3311 = vunpack.c.l.b16 %v3155
        %v3312 = vunpack.c.h.b16 %v3155
        %v3313 = vunpack.c.l.b16 %v3156
        %v3314 = vunpack.c.h.b16 %v3156
        %v3315 = vunpack.c.l.b16 %v3157
        %v3316 = vunpack.c.h.b16 %v3157
        %v3317 = vunpack.c.l.b16 %v3158
        %v3318 = vunpack.c.h.b16 %v3158
        %v3319 = vunpack.c.l.b16 %v3159
        %v3320 = vunpack.c.h.b16 %v3159
        %v3321 = vunpack.c.l.b16 %v3160
        %v3322 = vunpack.c.h.b16 %v3160
        %v3323 = vunpack.c.l.b16 %v3161
        %v3324 = vunpack.c.h.b16 %v3161
        %v3325 = vunpack.c.l.b16 %v3162
        %v3326 = vunpack.c.h.b16 %v3162
        %v3327 = vunpack.c.l.b16 %v3163
        %v3328 = vunpack.c.h.b16 %v3163
        %v3329 = vunpack.c.l.b16 %v3164
        %v3330 = vunpack.c.h.b16 %v3164
        %v3331 = vunpack.c.l.b16 %v3165
        %v3332 = vunpack.c.h.b16 %v3165
        %v3333 = vunpack.c.l.b16 %v3166
        %v3334 = vunpack.c.h.b16 %v3166
        %v3335 = vunpack.c.l.b16 %v3167
        %v3336 = vunpack.c.h.b16 %v3167
        %v3337 = vunpack.c.l.b16 %v3168
        %v3338 = vunpack.c.h.b16 %v3168
        %v3339 = vunpack.c.l.b16 %v3169
        %v3340 = vunpack.c.h.b16 %v3169
        %v3341 = vunpack.c.l.b16 %v3170
        %v3342 = vunpack.c.h.b16 %v3170
        %v3343 = vunpack.c.l.b16 %v3171
        %v3344 = vunpack.c.h.b16 %v3171
        %v3345 = vunpack.c.l.b16 %v3172
        %v3346 = vunpack.c.h.b16 %v3172
        %v3347 = vunpack.c.l.b16 %v3173
        %v3348 = vunpack.c.h.b16 %v3173
        %v3349 = vunpack.c.l.b16 %v3174
        %v3350 = vunpack.c.h.b16 %v3174
        %v3351 = vunpack.c.l.b16 %v3175
        %v3352 = vunpack.c.h.b16 %v3175
        %v3353 = vunpack.c.l.b16 %v3176
        %v3354 = vunpack.c.h.b16 %v3176
        %v3355 = vunpack.c.l.b16 %v3177
        %v3356 = vunpack.c.h.b16 %v3177
        %v3357 = vunpack.c.l.b16 %v3178
        %v3358 = vunpack.c.h.b16 %v3178
        %v3359 = vunpack.c.l.b16 %v3179
        %v3360 = vunpack.c.h.b16 %v3179
        %v3361 = vunpack.c.l.b16 %v3180
        %v3362 = vunpack.c.h.b16 %v3180
        %v3363 = vunpack.c.l.b16 %v3181
        %v3364 = vunpack.c.h.b16 %v3181
        %v3365 = vunpack.c.l.b16 %v3182
        %v3366 = vunpack.c.h.b16 %v3182
        %v3367 = vunpack.c.l.b16 %v3183
        %v3368 = vunpack.c.h.b16 %v3183
        %v3369 = vunpack.c.l.b16 %v3184
        %v3370 = vunpack.c.h.b16 %v3184
        %v3371 = vunpack.c.l.b16 %v3185
        %v3372 = vunpack.c.h.b16 %v3185
        %v3373 = vunpack.c.l.b16 %v3186
        %v3374 = vunpack.c.h.b16 %v3186
        %v3375 = vunpack.c.l.b16 %v3187
        %v3376 = vunpack.c.h.b16 %v3187
        %v3377 = vunpack.c.l.b16 %v3188
        %v3378 = vunpack.c.h.b16 %v3188
        %v3379 = vunpack.c.l.b16 %v3189
        %v3380 = vunpack.c.h.b16 %v3189
        %v3381 = vunpack.c.l.b16 %v3190
        %v3382 = vunpack.c.h.b16 %v3190
        %v3383 = vpack.c.b16 %v3257, %v3255
        %v3384 = vpack.c.b16 %v3258, %v3256
        %v3385 = vpack.c.b16 %v3261, %v3259
        %v3386 = vpack.c.b16 %v3262, %v3260
        %v3387 = vpack.c.b16 %v3265, %v3263
        %v3388 = vpack.c.b16 %v3266, %v3264
        %v3389 = vpack.c.b16 %v3269, %v3267
        %v3390 = vpack.c.b16 %v3270, %v3268
        %v3391 = vpack.c.b16 %v3273, %v3271
        %v3392 = vpack.c.b16 %v3274, %v3272
        %v3393 = vpack.c.b16 %v3277, %v3275
        %v3394 = vpack.c.b16 %v3278, %v3276
        %v3395 = vpack.c.b16 %v3281, %v3279
        %v3396 = vpack.c.b16 %v3282, %v3280
        %v3397 = vpack.c.b16 %v3285, %v3283
        %v3398 = vpack.c.b16 %v3286, %v3284
        %v3399 = vpack.c.b16 %v3289, %v3287
        %v3400 = vpack.c.b16 %v3290, %v3288
        %v3401 = vpack.c.b16 %v3293, %v3291
        %v3402 = vpack.c.b16 %v3294, %v3292
        %v3403 = vpack.c.b16 %v3297, %v3295
        %v3404 = vpack.c.b16 %v3298, %v3296
        %v3405 = vpack.c.b16 %v3301, %v3299
        %v3406 = vpack.c.b16 %v3302, %v3300
        %v3407 = vpack.c.b16 %v3305, %v3303
        %v3408 = vpack.c.b16 %v3306, %v3304
        %v3409 = vpack.c.b16 %v3309, %v3307
        %v3410 = vpack.c.b16 %v3310, %v3308
        %v3411 = vpack.c.b16 %v3313, %v3311
        %v3412 = vpack.c.b16 %v3314, %v3312
        %v3413 = vpack.c.b16 %v3317, %v3315
        %v3414 = vpack.c.b16 %v3318, %v3316
        %v3415 = vpack.c.b16 %v3321, %v3319
        %v3416 = vpack.c.b16 %v3322, %v3320
        %v3417 = vpack.c.b16 %v3325, %v3323
        %v3418 = vpack.c.b16 %v3326, %v3324
        %v3419 = vpack.c.b16 %v3329, %v3327
        %v3420 = vpack.c.b16 %v3330, %v3328
        %v3421 = vpack.c.b16 %v3333, %v3331
        %v3422 = vpack.c.b16 %v3334, %v3332
        %v3423 = vpack.c.b16 %v3337, %v3335
        %v3424 = vpack.c.b16 %v3338, %v3336
        %v3425 = vpack.c.b16 %v3341, %v3339
        %v3426 = vpack.c.b16 %v3342, %v3340
        %v3427 = vpack.c.b16 %v3345, %v3343
        %v3428 = vpack.c.b16 %v3346, %v3344
        %v3429 = vpack.c.b16 %v3349, %v3347
        %v3430 = vpack.c.b16 %v3350, %v3348
        %v3431 = vpack.c.b16 %v3353, %v3351
        %v3432 = vpack.c.b16 %v3354, %v3352
        %v3433 = vpack.c.b16 %v3357, %v3355
        %v3434 = vpack.c.b16 %v3358, %v3356
        %v3435 = vpack.c.b16 %v3361, %v3359
        %v3436 = vpack.c.b16 %v3362, %v3360
        %v3437 = vpack.c.b16 %v3365, %v3363
        %v3438 = vpack.c.b16 %v3366, %v3364
        %v3439 = vpack.c.b16 %v3369, %v3367
        %v3440 = vpack.c.b16 %v3370, %v3368
        %v3441 = vpack.c.b16 %v3373, %v3371
        %v3442 = vpack.c.b16 %v3374, %v3372
        %v3443 = vpack.c.b16 %v3377, %v3375
        %v3444 = vpack.c.b16 %v3378, %v3376
        %v3445 = vpack.c.b16 %v3381, %v3379
        %v3446 = vpack.c.b16 %v3382, %v3380
        %3511 = vmatprep.subr.bf16.mxu0 %v3384
        %3512 = vmatpush1.bf16.msra.mxu0 %v3383
        %3513 = vmatprep.subr.bf16.mxu0 %v3386
        %3514 = vmatpush1.bf16.msra.mxu0 %v3385
        %3515 = vmatprep.subr.bf16.mxu0 %v3388
        %3516 = vmatpush1.bf16.msra.mxu0 %v3387
        %3517 = vmatprep.subr.bf16.mxu0 %v3390
        %3518 = vmatpush1.bf16.msra.mxu0 %v3389
        %3519 = vmatprep.subr.bf16.mxu0 %v3392
        %3520 = vmatpush1.bf16.msra.mxu0 %v3391
        %3521 = vmatprep.subr.bf16.mxu0 %v3394
        %3522 = vmatpush1.bf16.msra.mxu0 %v3393
        %3523 = vmatprep.subr.bf16.mxu0 %v3396
        %3524 = vmatpush1.bf16.msra.mxu0 %v3395
        %3525 = vmatprep.subr.bf16.mxu0 %v3398
        %3526 = vmatpush1.bf16.msra.mxu0 %v3397
        %3527 = vmatprep.subr.bf16.mxu0 %v3400
        %3528 = vmatpush1.bf16.msra.mxu0 %v3399
        %3529 = vmatprep.subr.bf16.mxu0 %v3402
        %3530 = vmatpush1.bf16.msra.mxu0 %v3401
        %3531 = vmatprep.subr.bf16.mxu0 %v3404
        %3532 = vmatpush1.bf16.msra.mxu0 %v3403
        %3533 = vmatprep.subr.bf16.mxu0 %v3406
        %3534 = vmatpush1.bf16.msra.mxu0 %v3405
        %3535 = vmatprep.subr.bf16.mxu0 %v3408
        %3536 = vmatpush1.bf16.msra.mxu0 %v3407
        %3537 = vmatprep.subr.bf16.mxu0 %v3410
        %3538 = vmatpush1.bf16.msra.mxu0 %v3409
        %3539 = vmatprep.subr.bf16.mxu0 %v3412
        %3540 = vmatpush1.bf16.msra.mxu0 %v3411
        %3541 = vmatprep.subr.bf16.mxu0 %v3414
        %3542 = vmatpush1.bf16.msra.mxu0 %v3413
        %3543 = vmatprep.mubr.bf16.mxu0 %v3124
        %3544 = vmatmul.mubr.bf16.gmra.mrb[0].mxu0 %v3123
        %v3545 = vpop.f32.mrb[0].mxu0
        %v3546 = vadd.f32 0.0, %v3545
        %v3547 = vpop.f32.mrb[0].mxu0
        %v3548 = vadd.f32 0.0, %v3547
        %v3549 = vpop.f32.mrb[0].mxu0
        %v3550 = vadd.f32 0.0, %v3549
        %v3551 = vpop.f32.mrb[0].mxu0
        %v3552 = vadd.f32 0.0, %v3551
        %3553 = vdwg.mxu0
        %3554 = vmatprep.subr.bf16.mxu0 %v3416
        %3555 = vmatpush1.bf16.msra.mxu0 %v3415
        %3556 = vmatprep.subr.bf16.mxu0 %v3418
        %3557 = vmatpush1.bf16.msra.mxu0 %v3417
        %3558 = vmatprep.subr.bf16.mxu0 %v3420
        %3559 = vmatpush1.bf16.msra.mxu0 %v3419
        %3560 = vmatprep.subr.bf16.mxu0 %v3422
        %3561 = vmatpush1.bf16.msra.mxu0 %v3421
        %3562 = vmatprep.subr.bf16.mxu0 %v3424
        %3563 = vmatpush1.bf16.msra.mxu0 %v3423
        %3564 = vmatprep.subr.bf16.mxu0 %v3426
        %3565 = vmatpush1.bf16.msra.mxu0 %v3425
        %3566 = vmatprep.subr.bf16.mxu0 %v3428
        %3567 = vmatpush1.bf16.msra.mxu0 %v3427
        %3568 = vmatprep.subr.bf16.mxu0 %v3430
        %3569 = vmatpush1.bf16.msra.mxu0 %v3429
        %3570 = vmatprep.subr.bf16.mxu0 %v3432
        %3571 = vmatpush1.bf16.msra.mxu0 %v3431
        %3572 = vmatprep.subr.bf16.mxu0 %v3434
        %3573 = vmatpush1.bf16.msra.mxu0 %v3433
        %3574 = vmatprep.subr.bf16.mxu0 %v3436
        %3575 = vmatpush1.bf16.msra.mxu0 %v3435
        %3576 = vmatprep.subr.bf16.mxu0 %v3438
        %3577 = vmatpush1.bf16.msra.mxu0 %v3437
        %3578 = vmatprep.subr.bf16.mxu0 %v3440
        %3579 = vmatpush1.bf16.msra.mxu0 %v3439
        %3580 = vmatprep.subr.bf16.mxu0 %v3442
        %3581 = vmatpush1.bf16.msra.mxu0 %v3441
        %3582 = vmatprep.subr.bf16.mxu0 %v3444
        %3583 = vmatpush1.bf16.msra.mxu0 %v3443
        %3584 = vmatprep.subr.bf16.mxu0 %v3446
        %3585 = vmatpush1.bf16.msra.mxu0 %v3445
        %3586 = vmatprep.mubr.bf16.mxu0 %v3126
        %3587 = vmatmul.mubr.bf16.gmra.mrb[0].mxu0 %v3125
        %v3588 = vpop.f32.mrb[0].mxu0
        %v3589 = vadd.f32 %v3546, %v3588
        %v3590 = vpop.f32.mrb[0].mxu0
        %v3591 = vadd.f32 %v3548, %v3590
        %v3592 = vpop.f32.mrb[0].mxu0
        %v3593 = vadd.f32 %v3550, %v3592
        %v3594 = vpop.f32.mrb[0].mxu0
        %v3595 = vadd.f32 %v3552, %v3594
        %3596 = vdwg.mxu0
        %v3597 = vadd.f32 %v2077, %v3589
        %v3598 = vadd.f32 %v2078, %v3591
        %v3599 = vadd.f32 %v2079, %v3593
        %v3600 = vadd.f32 %v2080, %v3595
        %3601 = vst [vmem:[#allocation2] sm:$0xff] %v3597
        %3602 = vst [vmem:[#allocation2 + $0x8] sm:$0xff] %v3598
        %3603 = vst [vmem:[#allocation2 + $0x10] sm:$0xff] %v3599
        %3604 = vst [vmem:[#allocation2 + $0x18] sm:$0xff] %v3600
        %p3605 = scmp.eq.s32.totalorder %s26, 1
        // Predicated region
        $region101: #{part4_forward.1} parent=67 // pred_check
          %p3606 = pneg %p3605
        $region102: #{part4_forward.1} parent=67 // pred_check_branch
          %3608 = sbr.rel (%p3606) target = $region104
        $region103: #{part4_forward.1} parent=67 // pred_region
          %v3609 = vld [vmem:[#allocation2] sm:$0xff]
          %v3610 = vld [vmem:[#allocation2 + $0x8] sm:$0xff]
          %v3611 = vld [vmem:[#allocation2 + $0x10] sm:$0xff]
          %v3612 = vld [vmem:[#allocation2 + $0x18] sm:$0xff]
          %v3613 = vld [vmem:[%s10] sm:$0x3]
          %v3614 = vmul.f32 %v3609, %v3609
          %v3615 = vmul.f32 %v3610, %v3610
          %v3616 = vmul.f32 %v3611, %v3611
          %v3617 = vmul.f32 %v3612, %v3612
          %v3618 = vadd.f32 %v3614, %v3615
          %3619 = vadd.xlane.f32.xlu0 %v3618
          %v3620 = vpop.xlane.xlu0 %3619
          %v3621 = vadd.f32 %v3616, %v3617
          %3622 = vadd.xlane.f32.xlu0 %v3621
          %v3623 = vpop.xlane.xlu0 %3622
          %v3624 = vmul.f32 %v3620, %v634
          %v3625 = vmul.f32 %v3623, %v634
          %v3626 = vadd.f32 %v3624, 1e-06
          %v3627 = vadd.f32 %v3625, 1e-06
          %v3628 = vrsqrt.pop %v3626
          %v3629 = vrsqrt.pop %v3627
          %v3630 = vmul.f32 %v3609, %v3628
          %v3631 = vmul.f32 %v3610, %v3628
          %v3632 = vmul.f32 %v3611, %v3629
          %v3633 = vmul.f32 %v3612, %v3629
          %v3635 = vlaneseq
          %v3636 = vshrl.u32 %v3635, 7
          %v3637 = vsub.s32 0, %v3636
          %v3638 = vrot.slane %v3613, %v3637
          %v3639 = vlaneseq
          %v3640 = vshrl.u32 %v3639, 7
          %v3641 = vsub.s32 1, %v3640
          %v3642 = vrot.slane %v3613, %v3641
          %v3645 = vmul.f32 %v3630, %v3638
          %v3646 = vmul.f32 %v3631, %v3642
          %v3647 = vmul.f32 %v3632, %v3638
          %v3648 = vmul.f32 %v3633, %v3642
          %v3649 = vpack.c.bf16 %v3647, %v3645
          %v3650 = vpack.c.bf16 %v3648, %v3646
          %v3651 = vld [vmem:[#allocation13] sm:$0xff]
          %v3652 = vld [vmem:[#allocation13 + $0x8] sm:$0xff]
          %v3653 = vld [vmem:[#allocation13 + $0x10] sm:$0xff]
          %v3654 = vld [vmem:[#allocation13 + $0x18] sm:$0xff]
          %v3655 = vld [vmem:[#allocation13 + $0x20] sm:$0xff]
          %v3656 = vld [vmem:[#allocation13 + $0x28] sm:$0xff]
          %v3657 = vld [vmem:[#allocation13 + $0x30] sm:$0xff]
          %v3658 = vld [vmem:[#allocation13 + $0x38] sm:$0xff]
          %v3659 = vld [vmem:[#allocation13 + $0x40] sm:$0xff]
          %v3660 = vld [vmem:[#allocation13 + $0x48] sm:$0xff]
          %v3661 = vld [vmem:[#allocation13 + $0x50] sm:$0xff]
          %v3662 = vld [vmem:[#allocation13 + $0x58] sm:$0xff]
          %v3663 = vld [vmem:[#allocation13 + $0x60] sm:$0xff]
          %v3664 = vld [vmem:[#allocation13 + $0x68] sm:$0xff]
          %v3665 = vld [vmem:[#allocation13 + $0x70] sm:$0xff]
          %v3666 = vld [vmem:[#allocation13 + $0x78] sm:$0xff]
          %v3667 = vld [vmem:[#allocation13 + $0x80] sm:$0xff]
          %v3668 = vld [vmem:[#allocation13 + $0x88] sm:$0xff]
          %v3669 = vld [vmem:[#allocation13 + $0x90] sm:$0xff]
          %v3670 = vld [vmem:[#allocation13 + $0x98] sm:$0xff]
          %v3671 = vld [vmem:[#allocation13 + $0xa0] sm:$0xff]
          %v3672 = vld [vmem:[#allocation13 + $0xa8] sm:$0xff]
          %v3673 = vld [vmem:[#allocation13 + $0xb0] sm:$0xff]
          %v3674 = vld [vmem:[#allocation13 + $0xb8] sm:$0xff]
          %v3675 = vld [vmem:[#allocation13 + $0xc0] sm:$0xff]
          %v3676 = vld [vmem:[#allocation13 + $0xc8] sm:$0xff]
          %v3677 = vld [vmem:[#allocation13 + $0xd0] sm:$0xff]
          %v3678 = vld [vmem:[#allocation13 + $0xd8] sm:$0xff]
          %v3679 = vld [vmem:[#allocation13 + $0xe0] sm:$0xff]
          %v3680 = vld [vmem:[#allocation13 + $0xe8] sm:$0xff]
          %v3681 = vld [vmem:[#allocation13 + $0xf0] sm:$0xff]
          %v3682 = vld [vmem:[#allocation13 + $0xf8] sm:$0xff]
          %v3683 = vld [vmem:[#allocation13 + $0x100] sm:$0xff]
          %v3684 = vld [vmem:[#allocation13 + $0x108] sm:$0xff]
          %v3685 = vld [vmem:[#allocation13 + $0x110] sm:$0xff]
          %v3686 = vld [vmem:[#allocation13 + $0x118] sm:$0xff]
          %v3687 = vld [vmem:[#allocation13 + $0x120] sm:$0xff]
          %v3688 = vld [vmem:[#allocation13 + $0x128] sm:$0xff]
          %v3689 = vld [vmem:[#allocation13 + $0x130] sm:$0xff]
          %v3690 = vld [vmem:[#allocation13 + $0x138] sm:$0xff]
          %v3691 = vld [vmem:[#allocation13 + $0x140] sm:$0xff]
          %v3692 = vld [vmem:[#allocation13 + $0x148] sm:$0xff]
          %v3693 = vld [vmem:[#allocation13 + $0x150] sm:$0xff]
          %v3694 = vld [vmem:[#allocation13 + $0x158] sm:$0xff]
          %v3695 = vld [vmem:[#allocation13 + $0x160] sm:$0xff]
          %v3696 = vld [vmem:[#allocation13 + $0x168] sm:$0xff]
          %v3697 = vld [vmem:[#allocation13 + $0x170] sm:$0xff]
          %v3698 = vld [vmem:[#allocation13 + $0x178] sm:$0xff]
          %v3699 = vld [vmem:[#allocation13 + $0x180] sm:$0xff]
          %v3700 = vld [vmem:[#allocation13 + $0x188] sm:$0xff]
          %v3701 = vld [vmem:[#allocation13 + $0x190] sm:$0xff]
          %v3702 = vld [vmem:[#allocation13 + $0x198] sm:$0xff]
          %v3703 = vld [vmem:[#allocation13 + $0x1a0] sm:$0xff]
          %v3704 = vld [vmem:[#allocation13 + $0x1a8] sm:$0xff]
          %v3705 = vld [vmem:[#allocation13 + $0x1b0] sm:$0xff]
          %v3706 = vld [vmem:[#allocation13 + $0x1b8] sm:$0xff]
          %v3707 = vld [vmem:[#allocation13 + $0x1c0] sm:$0xff]
          %v3708 = vld [vmem:[#allocation13 + $0x1c8] sm:$0xff]
          %v3709 = vld [vmem:[#allocation13 + $0x1d0] sm:$0xff]
          %v3710 = vld [vmem:[#allocation13 + $0x1d8] sm:$0xff]
          %v3711 = vld [vmem:[#allocation13 + $0x1e0] sm:$0xff]
          %v3712 = vld [vmem:[#allocation13 + $0x1e8] sm:$0xff]
          %v3713 = vld [vmem:[#allocation13 + $0x1f0] sm:$0xff]
          %v3714 = vld [vmem:[#allocation13 + $0x1f8] sm:$0xff]
          %v3779 = vunpack.c.l.b16 %v3651
          %v3780 = vunpack.c.h.b16 %v3651
          %v3781 = vunpack.c.l.b16 %v3652
          %v3782 = vunpack.c.h.b16 %v3652
          %v3783 = vunpack.c.l.b16 %v3653
          %v3784 = vunpack.c.h.b16 %v3653
          %v3785 = vunpack.c.l.b16 %v3654
          %v3786 = vunpack.c.h.b16 %v3654
          %v3787 = vunpack.c.l.b16 %v3655
          %v3788 = vunpack.c.h.b16 %v3655
          %v3789 = vunpack.c.l.b16 %v3656
          %v3790 = vunpack.c.h.b16 %v3656
          %v3791 = vunpack.c.l.b16 %v3657
          %v3792 = vunpack.c.h.b16 %v3657
          %v3793 = vunpack.c.l.b16 %v3658
          %v3794 = vunpack.c.h.b16 %v3658
          %v3795 = vunpack.c.l.b16 %v3659
          %v3796 = vunpack.c.h.b16 %v3659
          %v3797 = vunpack.c.l.b16 %v3660
          %v3798 = vunpack.c.h.b16 %v3660
          %v3799 = vunpack.c.l.b16 %v3661
          %v3800 = vunpack.c.h.b16 %v3661
          %v3801 = vunpack.c.l.b16 %v3662
          %v3802 = vunpack.c.h.b16 %v3662
          %v3803 = vunpack.c.l.b16 %v3663
          %v3804 = vunpack.c.h.b16 %v3663
          %v3805 = vunpack.c.l.b16 %v3664
          %v3806 = vunpack.c.h.b16 %v3664
          %v3807 = vunpack.c.l.b16 %v3665
          %v3808 = vunpack.c.h.b16 %v3665
          %v3809 = vunpack.c.l.b16 %v3666
          %v3810 = vunpack.c.h.b16 %v3666
          %v3811 = vunpack.c.l.b16 %v3667
          %v3812 = vunpack.c.h.b16 %v3667
          %v3813 = vunpack.c.l.b16 %v3668
          %v3814 = vunpack.c.h.b16 %v3668
          %v3815 = vunpack.c.l.b16 %v3669
          %v3816 = vunpack.c.h.b16 %v3669
          %v3817 = vunpack.c.l.b16 %v3670
          %v3818 = vunpack.c.h.b16 %v3670
          %v3819 = vunpack.c.l.b16 %v3671
          %v3820 = vunpack.c.h.b16 %v3671
          %v3821 = vunpack.c.l.b16 %v3672
          %v3822 = vunpack.c.h.b16 %v3672
          %v3823 = vunpack.c.l.b16 %v3673
          %v3824 = vunpack.c.h.b16 %v3673
          %v3825 = vunpack.c.l.b16 %v3674
          %v3826 = vunpack.c.h.b16 %v3674
          %v3827 = vunpack.c.l.b16 %v3675
          %v3828 = vunpack.c.h.b16 %v3675
          %v3829 = vunpack.c.l.b16 %v3676
          %v3830 = vunpack.c.h.b16 %v3676
          %v3831 = vunpack.c.l.b16 %v3677
          %v3832 = vunpack.c.h.b16 %v3677
          %v3833 = vunpack.c.l.b16 %v3678
          %v3834 = vunpack.c.h.b16 %v3678
          %v3835 = vunpack.c.l.b16 %v3679
          %v3836 = vunpack.c.h.b16 %v3679
          %v3837 = vunpack.c.l.b16 %v3680
          %v3838 = vunpack.c.h.b16 %v3680
          %v3839 = vunpack.c.l.b16 %v3681
          %v3840 = vunpack.c.h.b16 %v3681
          %v3841 = vunpack.c.l.b16 %v3682
          %v3842 = vunpack.c.h.b16 %v3682
          %v3843 = vunpack.c.l.b16 %v3683
          %v3844 = vunpack.c.h.b16 %v3683
          %v3845 = vunpack.c.l.b16 %v3684
          %v3846 = vunpack.c.h.b16 %v3684
          %v3847 = vunpack.c.l.b16 %v3685
          %v3848 = vunpack.c.h.b16 %v3685
          %v3849 = vunpack.c.l.b16 %v3686
          %v3850 = vunpack.c.h.b16 %v3686
          %v3851 = vunpack.c.l.b16 %v3687
          %v3852 = vunpack.c.h.b16 %v3687
          %v3853 = vunpack.c.l.b16 %v3688
          %v3854 = vunpack.c.h.b16 %v3688
          %v3855 = vunpack.c.l.b16 %v3689
          %v3856 = vunpack.c.h.b16 %v3689
          %v3857 = vunpack.c.l.b16 %v3690
          %v3858 = vunpack.c.h.b16 %v3690
          %v3859 = vunpack.c.l.b16 %v3691
          %v3860 = vunpack.c.h.b16 %v3691
          %v3861 = vunpack.c.l.b16 %v3692
          %v3862 = vunpack.c.h.b16 %v3692
          %v3863 = vunpack.c.l.b16 %v3693
          %v3864 = vunpack.c.h.b16 %v3693
          %v3865 = vunpack.c.l.b16 %v3694
          %v3866 = vunpack.c.h.b16 %v3694
          %v3867 = vunpack.c.l.b16 %v3695
          %v3868 = vunpack.c.h.b16 %v3695
          %v3869 = vunpack.c.l.b16 %v3696
          %v3870 = vunpack.c.h.b16 %v3696
          %v3871 = vunpack.c.l.b16 %v3697
          %v3872 = vunpack.c.h.b16 %v3697
          %v3873 = vunpack.c.l.b16 %v3698
          %v3874 = vunpack.c.h.b16 %v3698
          %v3875 = vunpack.c.l.b16 %v3699
          %v3876 = vunpack.c.h.b16 %v3699
          %v3877 = vunpack.c.l.b16 %v3700
          %v3878 = vunpack.c.h.b16 %v3700
          %v3879 = vunpack.c.l.b16 %v3701
          %v3880 = vunpack.c.h.b16 %v3701
          %v3881 = vunpack.c.l.b16 %v3702
          %v3882 = vunpack.c.h.b16 %v3702
          %v3883 = vunpack.c.l.b16 %v3703
          %v3884 = vunpack.c.h.b16 %v3703
          %v3885 = vunpack.c.l.b16 %v3704
          %v3886 = vunpack.c.h.b16 %v3704
          %v3887 = vunpack.c.l.b16 %v3705
          %v3888 = vunpack.c.h.b16 %v3705
          %v3889 = vunpack.c.l.b16 %v3706
          %v3890 = vunpack.c.h.b16 %v3706
          %v3891 = vunpack.c.l.b16 %v3707
          %v3892 = vunpack.c.h.b16 %v3707
          %v3893 = vunpack.c.l.b16 %v3708
          %v3894 = vunpack.c.h.b16 %v3708
          %v3895 = vunpack.c.l.b16 %v3709
          %v3896 = vunpack.c.h.b16 %v3709
          %v3897 = vunpack.c.l.b16 %v3710
          %v3898 = vunpack.c.h.b16 %v3710
          %v3899 = vunpack.c.l.b16 %v3711
          %v3900 = vunpack.c.h.b16 %v3711
          %v3901 = vunpack.c.l.b16 %v3712
          %v3902 = vunpack.c.h.b16 %v3712
          %v3903 = vunpack.c.l.b16 %v3713
          %v3904 = vunpack.c.h.b16 %v3713
          %v3905 = vunpack.c.l.b16 %v3714
          %v3906 = vunpack.c.h.b16 %v3714
          %v3907 = vpack.c.b16 %v3783, %v3779
          %v3908 = vpack.c.b16 %v3784, %v3780
          %v3909 = vpack.c.b16 %v3785, %v3781
          %v3910 = vpack.c.b16 %v3786, %v3782
          %v3911 = vpack.c.b16 %v3791, %v3787
          %v3912 = vpack.c.b16 %v3792, %v3788
          %v3913 = vpack.c.b16 %v3793, %v3789
          %v3914 = vpack.c.b16 %v3794, %v3790
          %v3915 = vpack.c.b16 %v3799, %v3795
          %v3916 = vpack.c.b16 %v3800, %v3796
          %v3917 = vpack.c.b16 %v3801, %v3797
          %v3918 = vpack.c.b16 %v3802, %v3798
          %v3919 = vpack.c.b16 %v3807, %v3803
          %v3920 = vpack.c.b16 %v3808, %v3804
          %v3921 = vpack.c.b16 %v3809, %v3805
          %v3922 = vpack.c.b16 %v3810, %v3806
          %v3923 = vpack.c.b16 %v3815, %v3811
          %v3924 = vpack.c.b16 %v3816, %v3812
          %v3925 = vpack.c.b16 %v3817, %v3813
          %v3926 = vpack.c.b16 %v3818, %v3814
          %v3927 = vpack.c.b16 %v3823, %v3819
          %v3928 = vpack.c.b16 %v3824, %v3820
          %v3929 = vpack.c.b16 %v3825, %v3821
          %v3930 = vpack.c.b16 %v3826, %v3822
          %v3931 = vpack.c.b16 %v3831, %v3827
          %v3932 = vpack.c.b16 %v3832, %v3828
          %v3933 = vpack.c.b16 %v3833, %v3829
          %v3934 = vpack.c.b16 %v3834, %v3830
          %v3935 = vpack.c.b16 %v3839, %v3835
          %v3936 = vpack.c.b16 %v3840, %v3836
          %v3937 = vpack.c.b16 %v3841, %v3837
          %v3938 = vpack.c.b16 %v3842, %v3838
          %v3939 = vpack.c.b16 %v3847, %v3843
          %v3940 = vpack.c.b16 %v3848, %v3844
          %v3941 = vpack.c.b16 %v3849, %v3845
          %v3942 = vpack.c.b16 %v3850, %v3846
          %v3943 = vpack.c.b16 %v3855, %v3851
          %v3944 = vpack.c.b16 %v3856, %v3852
          %v3945 = vpack.c.b16 %v3857, %v3853
          %v3946 = vpack.c.b16 %v3858, %v3854
          %v3947 = vpack.c.b16 %v3863, %v3859
          %v3948 = vpack.c.b16 %v3864, %v3860
          %v3949 = vpack.c.b16 %v3865, %v3861
          %v3950 = vpack.c.b16 %v3866, %v3862
          %v3951 = vpack.c.b16 %v3871, %v3867
          %v3952 = vpack.c.b16 %v3872, %v3868
          %v3953 = vpack.c.b16 %v3873, %v3869
          %v3954 = vpack.c.b16 %v3874, %v3870
          %v3955 = vpack.c.b16 %v3879, %v3875
          %v3956 = vpack.c.b16 %v3880, %v3876
          %v3957 = vpack.c.b16 %v3881, %v3877
          %v3958 = vpack.c.b16 %v3882, %v3878
          %v3959 = vpack.c.b16 %v3887, %v3883
          %v3960 = vpack.c.b16 %v3888, %v3884
          %v3961 = vpack.c.b16 %v3889, %v3885
          %v3962 = vpack.c.b16 %v3890, %v3886
          %v3963 = vpack.c.b16 %v3895, %v3891
          %v3964 = vpack.c.b16 %v3896, %v3892
          %v3965 = vpack.c.b16 %v3897, %v3893
          %v3966 = vpack.c.b16 %v3898, %v3894
          %v3967 = vpack.c.b16 %v3903, %v3899
          %v3968 = vpack.c.b16 %v3904, %v3900
          %v3969 = vpack.c.b16 %v3905, %v3901
          %v3970 = vpack.c.b16 %v3906, %v3902
          %4035 = vmatprep.subr.bf16.mxu0 %v3908
          %4036 = vmatpush1.bf16.msra.mxu0 %v3907
          %4037 = vmatprep.subr.bf16.mxu0 %v3912
          %4038 = vmatpush1.bf16.msra.mxu0 %v3911
          %4039 = vmatprep.subr.bf16.mxu0 %v3916
          %4040 = vmatpush1.bf16.msra.mxu0 %v3915
          %4041 = vmatprep.subr.bf16.mxu0 %v3920
          %4042 = vmatpush1.bf16.msra.mxu0 %v3919
          %4043 = vmatprep.subr.bf16.mxu0 %v3924
          %4044 = vmatpush1.bf16.msra.mxu0 %v3923
          %4045 = vmatprep.subr.bf16.mxu0 %v3928
          %4046 = vmatpush1.bf16.msra.mxu0 %v3927
          %4047 = vmatprep.subr.bf16.mxu0 %v3932
          %4048 = vmatpush1.bf16.msra.mxu0 %v3931
          %4049 = vmatprep.subr.bf16.mxu0 %v3936
          %4050 = vmatpush1.bf16.msra.mxu0 %v3935
          %4051 = vmatprep.subr.bf16.mxu0 %v3940
          %4052 = vmatpush1.bf16.msra.mxu0 %v3939
          %4053 = vmatprep.subr.bf16.mxu0 %v3944
          %4054 = vmatpush1.bf16.msra.mxu0 %v3943
          %4055 = vmatprep.subr.bf16.mxu0 %v3948
          %4056 = vmatpush1.bf16.msra.mxu0 %v3947
          %4057 = vmatprep.subr.bf16.mxu0 %v3952
          %4058 = vmatpush1.bf16.msra.mxu0 %v3951
          %4059 = vmatprep.subr.bf16.mxu0 %v3956
          %4060 = vmatpush1.bf16.msra.mxu0 %v3955
          %4061 = vmatprep.subr.bf16.mxu0 %v3960
          %4062 = vmatpush1.bf16.msra.mxu0 %v3959
          %4063 = vmatprep.subr.bf16.mxu0 %v3964
          %4064 = vmatpush1.bf16.msra.mxu0 %v3963
          %4065 = vmatprep.subr.bf16.mxu0 %v3968
          %4066 = vmatpush1.bf16.msra.mxu0 %v3967
          %4067 = vmatprep.mubr.bf16.mxu0 %v3650
          %4068 = vmatmul.mubr.bf16.gmra.mrb[0].mxu0 %v3649
          %v4069 = vpop.f32.mrb[0].mxu0
          %v4070 = vadd.f32 0.0, %v4069
          %v4071 = vpop.f32.mrb[0].mxu0
          %v4072 = vadd.f32 0.0, %v4071
          %v4073 = vpop.f32.mrb[0].mxu0
          %v4074 = vadd.f32 0.0, %v4073
          %v4075 = vpop.f32.mrb[0].mxu0
          %v4076 = vadd.f32 0.0, %v4075
          %4077 = vdwg.mxu0
          %4078 = vmatprep.subr.bf16.mxu0 %v3910
          %4079 = vmatpush1.bf16.msra.mxu0 %v3909
          %4080 = vmatprep.subr.bf16.mxu0 %v3914
          %4081 = vmatpush1.bf16.msra.mxu0 %v3913
          %4082 = vmatprep.subr.bf16.mxu0 %v3918
          %4083 = vmatpush1.bf16.msra.mxu0 %v3917
          %4084 = vmatprep.subr.bf16.mxu0 %v3922
          %4085 = vmatpush1.bf16.msra.mxu0 %v3921
          %4086 = vmatprep.subr.bf16.mxu0 %v3926
          %4087 = vmatpush1.bf16.msra.mxu0 %v3925
          %4088 = vmatprep.subr.bf16.mxu0 %v3930
          %4089 = vmatpush1.bf16.msra.mxu0 %v3929
          %4090 = vmatprep.subr.bf16.mxu0 %v3934
          %4091 = vmatpush1.bf16.msra.mxu0 %v3933
          %4092 = vmatprep.subr.bf16.mxu0 %v3938
          %4093 = vmatpush1.bf16.msra.mxu0 %v3937
          %4094 = vmatprep.subr.bf16.mxu0 %v3942
          %4095 = vmatpush1.bf16.msra.mxu0 %v3941
          %4096 = vmatprep.subr.bf16.mxu0 %v3946
          %4097 = vmatpush1.bf16.msra.mxu0 %v3945
          %4098 = vmatprep.subr.bf16.mxu0 %v3950
          %4099 = vmatpush1.bf16.msra.mxu0 %v3949
          %4100 = vmatprep.subr.bf16.mxu0 %v3954
          %4101 = vmatpush1.bf16.msra.mxu0 %v3953
          %4102 = vmatprep.subr.bf16.mxu0 %v3958
          %4103 = vmatpush1.bf16.msra.mxu0 %v3957
          %4104 = vmatprep.subr.bf16.mxu0 %v3962
          %4105 = vmatpush1.bf16.msra.mxu0 %v3961
          %4106 = vmatprep.subr.bf16.mxu0 %v3966
          %4107 = vmatpush1.bf16.msra.mxu0 %v3965
          %4108 = vmatprep.subr.bf16.mxu0 %v3970
          %4109 = vmatpush1.bf16.msra.mxu0 %v3969
          %4110 = vmatprep.mubr.bf16.mxu0 %v3650
          %4111 = vmatmul.mubr.bf16.gmra.mrb[0].mxu0 %v3649
          %v4112 = vpop.f32.mrb[0].mxu0
          %v4113 = vadd.f32 0.0, %v4112
          %v4114 = vpop.f32.mrb[0].mxu0
          %v4115 = vadd.f32 0.0, %v4114
          %v4116 = vpop.f32.mrb[0].mxu0
          %v4117 = vadd.f32 0.0, %v4116
          %v4118 = vpop.f32.mrb[0].mxu0
          %v4119 = vadd.f32 0.0, %v4118
          %4120 = vdwg.mxu0
          %4121 = vst [vmem:[#allocation14] sm:$0xff] %v4070
          %4122 = vst [vmem:[#allocation14 + $0x8] sm:$0xff] %v4072
          %4123 = vst [vmem:[#allocation14 + $0x10] sm:$0xff] %v4113
          %4124 = vst [vmem:[#allocation14 + $0x18] sm:$0xff] %v4115
          %4125 = vst [vmem:[#allocation14 + $0x20] sm:$0xff] %v4074
          %4126 = vst [vmem:[#allocation14 + $0x28] sm:$0xff] %v4076
          %4127 = vst [vmem:[#allocation14 + $0x30] sm:$0xff] %v4117
          %4128 = vst [vmem:[#allocation14 + $0x38] sm:$0xff] %v4119
        $region104: #{part4_forward.1} parent=67 // pred_fallthru
          _
        // Predicated region
        $region105: #{part4_forward.1} parent=67 // pred_check
          %p4129 = pneg %p321
        $region106: #{part4_forward.1} parent=67 // pred_check_branch
          %4131 = sbr.rel (%p4129) target = $region108
        $region107: #{part4_forward.1} parent=67 // pred_region
          %s4133 = ssub.s32 1024, 1024
          %4134 = vsyncadd [#allocation6], %s4133
          %s4135 = sshll.u32 [#allocation14], 4
          %s4136 = int_to_ptr.vmem [resolvable:$true] %s4135
          %4141 = dma.vmem_to_hbm [thread:$0]  %s4136, 1024, %s12, [#allocation6], 512, 512, 32
        $region108: #{part4_forward.1} parent=67 // pred_fallthru
          _
        // Predicated region
        $region109: #{part4_forward.1} parent=67 // pred_check
          %p4142 = pneg %p321
        $region110: #{part4_forward.1} parent=67 // pred_check_branch
          %4144 = sbr.rel (%p4142) target = $region112
        $region111: #{part4_forward.1} parent=67 // pred_region
          %4145 = dma.done [#allocation6], 1024
        $region112: #{part4_forward.1} parent=67 // pred_fallthru
          _
      $region68: #{part4_forward.1} parent=5 // pred_fallthru
        _
      %p4146 = scmp.le.s32.totalorder 2, %s21
      // Predicated region
      $region113: #{part4_forward.1} parent=5 // pred_check
        %p4147 = pneg %p4146
      $region114: #{part4_forward.1} parent=5 // pred_check_branch
        %4149 = sbr.rel (%p4147) target = $region116
      $region115: #{part4_forward.1} parent=5 // pred_region
        %s4150 = ssub.s32 %s21, 2
      $region116: #{part4_forward.1} parent=5 // pred_fallthru
        _
    $region6: #{part4_forward.1} parent=1 // loop_footer
      %s25 = sadd.s32 1, %s21
    $region7: #{part4_forward.1} parent=1 // loop_footer_branch
      %20 = sbr.rel target = $region3
    $region8: #{part4_forward.1} parent=1 // loop_exit
      _
    %4151 = vsyncpa [#allocation5], 1
    %s4152 = scalar_lea.sflag [#allocation5], 1
    %4153 = vsyncpa %s4152, 1
    %4154 = vsyncpa [#allocation8], 1
    %4155 = vsyncpa [#allocation6], 1
    %s4156 = scalar_lea.sflag [#allocation6], 1
    %4157 = vsyncpa %s4156, 1

</llo_original>
